<compile_context>
chip_gen: v6e
topology: v6e:2x2x1
jax: 0.10.0
libtpu: 0.0.40
codegen_flags: <defaults>
</compile_context>

<pallas_src>
import jax
import jax.numpy as jnp
from jax import lax
from jax.experimental import pallas as pl
from jax.experimental.pallas import tpu as pltpu

# ----- model hyper-parameters (the args.* namespace), small & deterministic -----
B = 2               # batch size
SEG = 4             # args.seg_num
T = 3               # args.input_time
N = SEG * T         # rows seen by the transformer
F_IN = 8            # args.input_feature
C_FEAT = 8          # args.con_feature
E = 32              # args.emb_feature (d_model, nhead=2)
P_STEP = 2          # args.prediction_step
NHEAD = 2
HDIM = E // NHEAD
DFF = 2048          # nn.TransformerEncoderLayer default dim_feedforward
H1 = int(E * T / 3)
EPS = 1e-5
NEG = -1e30         # additive attention-mask value (same post-softmax result as -inf)

ROWS = B * N        # 24: encoder row slab
ROWS2 = B * SEG     # 8:  head row slab
SCALE = 1.0 / float(HDIM) ** 0.5


# ---------------------------------------------------------------------------
# Fused kernel: whole forward pass, grid=() (everything VMEM-resident).
# ---------------------------------------------------------------------------
def net_kernel(x_ref, rep_ref, ncx_ref, cwf_ref, cb_ref,
               p1_ref, bn1g_ref, bn1b_ref,
               wq_ref, bq_ref, wk_ref, bk_ref, wv_ref, bv_ref,
               wo_ref, bo_ref, mask_ref, ln1g_ref, ln1b_ref,
               w1_ref, b1_ref, w2_ref, b2_ref, ln2g_ref, ln2b_ref,
               sel_ref, fcw_ref, fcb_ref,
               p2_ref, bn2g_ref, bn2b_ref, fc2w_ref, fc2b_ref,
               o_ref):
    f32 = jnp.float32

    # ---- stage 1: context-weighted input projection (batch stacked along rows) ----
    xs = x_ref[...]                                                       # (ROWS, F_IN)
    x_rep = jnp.dot(xs, rep_ref[...], preferred_element_type=f32)        # (ROWS, C*F_IN)
    xaug = ncx_ref[...] * x_rep                                           # nc[n,c]*x[b,n,f]
    emb = jnp.dot(xaug, cwf_ref[...], preferred_element_type=f32) + cb_ref[...]   # (ROWS, E)

    # ---- stage 2: BatchNorm1d(N) training-mode (per-node stats over batch & E) + ReLU ----
    s1 = jnp.dot(p1_ref[...], emb, preferred_element_type=f32)            # cross-batch sums
    s2 = jnp.dot(p1_ref[...], emb * emb, preferred_element_type=f32)
    mean1 = jnp.sum(s1, axis=-1, keepdims=True) * (1.0 / (B * E))
    ex2 = jnp.sum(s2, axis=-1, keepdims=True) * (1.0 / (B * E))
    inv1 = lax.rsqrt(ex2 - mean1 * mean1 + EPS)
    h = jnp.maximum(bn1g_ref[...] * (emb - mean1) * inv1 + bn1b_ref[...], 0.0)

    # ---- stage 3: TransformerEncoderLayer (post-norm, 2 heads, pre-split head weights) ----
    mask = mask_ref[...]                                                  # (ROWS, ROWS)
    attn = None
    for hd in range(NHEAD):
        qh = jnp.dot(h, wq_ref[hd], preferred_element_type=f32) + bq_ref[hd]   # (ROWS, HDIM)
        kh = jnp.dot(h, wk_ref[hd], preferred_element_type=f32) + bk_ref[hd]
        vh = jnp.dot(h, wv_ref[hd], preferred_element_type=f32) + bv_ref[hd]
        s = lax.dot_general(qh, kh, (((1,), (1,)), ((), ())),
                            preferred_element_type=f32) * SCALE + mask
        s = s - jnp.max(s, axis=-1, keepdims=True)
        p = jnp.exp(s)
        p = p * pl.reciprocal(jnp.sum(p, axis=-1, keepdims=True), approx=True)
        oh = jnp.dot(p, vh, preferred_element_type=f32)                   # (ROWS, HDIM)
        head_out = jnp.dot(oh, wo_ref[hd], preferred_element_type=f32)    # (ROWS, E)
        attn = head_out if attn is None else attn + head_out
    src = h + attn + bo_ref[...]

    mu = jnp.mean(src, axis=-1, keepdims=True)
    d1 = src - mu
    src = (ln1g_ref[...] * d1 *
           lax.rsqrt(jnp.mean(d1 * d1, axis=-1, keepdims=True) + EPS) + ln1b_ref[...])

    # feed-forward in bf16 (f32 accumulation), weights stream through VMEM once
    ff = jnp.dot(src.astype(jnp.bfloat16), w1_ref[...],
                 preferred_element_type=f32) + b1_ref[...]
    ff = jnp.maximum(ff, 0.0)
    ff = jnp.dot(ff.astype(jnp.bfloat16), w2_ref[...],
                 preferred_element_type=f32) + b2_ref[...]
    src2 = src + ff
    mu2 = jnp.mean(src2, axis=-1, keepdims=True)
    d2 = src2 - mu2
    enc = (ln2g_ref[...] * d2 *
           lax.rsqrt(jnp.mean(d2 * d2, axis=-1, keepdims=True) + EPS) + ln2b_ref[...])

    # ---- stage 4: (B,T,SEG,E)->(B*SEG, T*E) regroup fused into FC via weight split ----
    # y[b,s, t*E:(t+1)*E] = enc[b, t*SEG+s, :]  =>  FC(y) = sum_t (sel[t]@enc) @ fcw[t] + b
    hfc = None
    for t in range(T):
        gt = jnp.dot(sel_ref[t], enc, preferred_element_type=f32)         # (ROWS2, E)
        term = jnp.dot(gt, fcw_ref[t], preferred_element_type=f32)        # (ROWS2, H1)
        hfc = term if hfc is None else hfc + term
    hfc = hfc + fcb_ref[...]

    # ---- stage 5: BatchNorm1d(SEG) + ReLU + FC2 ----
    t1 = jnp.dot(p2_ref[...], hfc, preferred_element_type=f32)
    t2 = jnp.dot(p2_ref[...], hfc * hfc, preferred_element_type=f32)
    mean2 = jnp.sum(t1, axis=-1, keepdims=True) * (1.0 / (B * H1))
    ex2b = jnp.sum(t2, axis=-1, keepdims=True) * (1.0 / (B * H1))
    inv2 = lax.rsqrt(ex2b - mean2 * mean2 + EPS)
    hr = jnp.maximum(bn2g_ref[...] * (hfc - mean2) * inv2 + bn2b_ref[...], 0.0)
    o_ref[...] = jnp.dot(hr, fc2w_ref[...], preferred_element_type=f32) + fc2b_ref[...]


# ---------------------------------------------------------------------------
# Host-side wrapper (single pallas_call, whole arrays in VMEM, grid = ()).
# ---------------------------------------------------------------------------
_PARAM_ORDER = ("rep", "ncx", "cwf", "cb", "p1", "bn1_g", "bn1_b",
                "wq", "bq", "wk", "bk", "wv", "bv", "wo", "bo", "mask",
                "ln1_g", "ln1_b", "w1", "b1", "w2", "b2", "ln2_g", "ln2_b",
                "sel", "fcw", "fcb", "p2", "bn2_g", "bn2_b", "fc2_w", "fc2_b")


def _vmem():
    return pl.BlockSpec(memory_space=pltpu.MemorySpace.VMEM)


def net_pallas(x_slab, params):
    args = (x_slab,) + tuple(params[k] for k in _PARAM_ORDER)
    return pl.pallas_call(
        net_kernel,
        out_shape=jax.ShapeDtypeStruct((ROWS2, P_STEP), jnp.float32),
        in_specs=[_vmem() for _ in args],
        out_specs=_vmem(),
    )(*args)


@jax.jit
def net_forward(x, params):
    out2d = net_pallas(x.reshape(ROWS, F_IN), params)                     # (B*SEG, P_STEP)
    # final glue identical to the PyTorch transpose+reshape (16 floats, fused under jit)
    return out2d.reshape(B, SEG, P_STEP).transpose(0, 2, 1).reshape(B, SEG * P_STEP, 1)


# ---------------------------------------------------------------------------
# Deterministic parameter construction (synthetic, mirrors __init__ shapes) plus
# host-side re-layout into the kernel-friendly forms described above.
# ---------------------------------------------------------------------------
def init_params(key):
    ks = jax.random.split(key, 16)

    def kaiming(k, shape, fan_in):
        return jax.random.normal(k, shape, jnp.float32) * jnp.sqrt(2.0 / fan_in)

    def lin_w(k, out_f, in_f):
        return jax.random.normal(k, (out_f, in_f), jnp.float32) / jnp.sqrt(float(in_f))

    node_cons = kaiming(ks[0], (N, C_FEAT), C_FEAT)
    context_weight = kaiming(ks[1], (C_FEAT, F_IN, E), F_IN)
    context_bias = kaiming(ks[2], (C_FEAT, E), C_FEAT)

    in_proj = lin_w(ks[3], 3 * E, E)
    in_proj_b = jax.random.normal(ks[4], (3 * E,), jnp.float32) * 0.02
    out_proj = lin_w(ks[5], E, E)
    out_proj_b = jax.random.normal(ks[6], (E,), jnp.float32) * 0.02
    lin1 = lin_w(ks[7], DFF, E)
    lin1_b = jax.random.normal(ks[8], (DFF,), jnp.float32) * 0.02
    lin2 = lin_w(ks[9], E, DFF)
    lin2_b = jax.random.normal(ks[10], (E,), jnp.float32) * 0.02
    fc_w = lin_w(ks[11], H1, T * E)
    fc_b = jax.random.normal(ks[12], (H1,), jnp.float32) * 0.02
    fc2_w = lin_w(ks[13], P_STEP, H1)
    fc2_b = jax.random.normal(ks[14], (P_STEP,), jnp.float32) * 0.02

    # -- stage-1 helpers: X_aug = ncx * (x @ rep), then one matmul with flattened cw --
    rep = jnp.tile(jnp.eye(F_IN, dtype=jnp.float32), (1, C_FEAT))          # (F_IN, C*F_IN)
    ncx = jnp.tile(jnp.repeat(node_cons, F_IN, axis=1), (B, 1))            # (ROWS, C*F_IN)
    cwf = context_weight.reshape(C_FEAT * F_IN, E)                         # (C*F_IN, E)
    cb = jnp.tile(node_cons @ context_bias, (B, 1))                        # (ROWS, E)

    # -- BatchNorm cross-batch summation matrices (per-channel sum, replicated per row) --
    r1 = jnp.arange(ROWS)
    p1 = (r1[:, None] % N == r1[None, :] % N).astype(jnp.float32)          # (ROWS, ROWS)
    r2 = jnp.arange(ROWS2)
    p2 = (r2[:, None] % SEG == r2[None, :] % SEG).astype(jnp.float32)      # (ROWS2, ROWS2)

    # -- per-head attention weights (avoids in-kernel lane slicing at offset 16) --
    wq_full = in_proj[0:E, :].T
    wk_full = in_proj[E:2 * E, :].T
    wv_full = in_proj[2 * E:3 * E, :].T

    def split_heads(w):                                                    # (E,E)->(NHEAD,E,HDIM)
        return jnp.stack([w[:, hh * HDIM:(hh + 1) * HDIM] for hh in range(NHEAD)], axis=0)

    wq, wk, wv = split_heads(wq_full), split_heads(wk_full), split_heads(wv_full)
    bq = in_proj_b[0:E].reshape(NHEAD, 1, HDIM)
    bk = in_proj_b[E:2 * E].reshape(NHEAD, 1, HDIM)
    bv = in_proj_b[2 * E:3 * E].reshape(NHEAD, 1, HDIM)
    wo = out_proj.T.reshape(NHEAD, HDIM, E)
    bo = out_proj_b[None, :]

    # -- additive attention mask: causal-over-time blocks + batch block-diagonal --
    t_row = jnp.arange(N) // SEG
    base_blocked = jnp.arange(N)[None, :] >= (t_row[:, None] + 1) * SEG    # (N, N) bool
    same_batch = (r1[:, None] // N) == (r1[None, :] // N)
    blocked = jnp.logical_or(~same_batch, jnp.tile(base_blocked, (B, B)))
    mask = jnp.where(blocked, NEG, 0.0).astype(jnp.float32)                # (ROWS, ROWS)

    # -- regroup selection matrices: row (b*SEG+s) of sel[t] picks enc row b*N+t*SEG+s --
    b_idx, s_idx = r2 // SEG, r2 % SEG
    cols = b_idx[None, :] * N + jnp.arange(T)[:, None] * SEG + s_idx[None, :]   # (T, ROWS2)
    sel = jax.nn.one_hot(cols, ROWS, dtype=jnp.float32)                         # (T, ROWS2, ROWS)

    return dict(
        rep=rep, ncx=ncx, cwf=cwf, cb=cb, p1=p1,
        bn1_g=jnp.ones((ROWS, 1), jnp.float32), bn1_b=jnp.zeros((ROWS, 1), jnp.float32),
        wq=wq, bq=bq, wk=wk, bk=bk, wv=wv, bv=bv, wo=wo, bo=bo, mask=mask,
        ln1_g=jnp.ones((1, E), jnp.float32), ln1_b=jnp.zeros((1, E), jnp.float32),
        w1=lin1.T.astype(jnp.bfloat16), b1=lin1_b[None, :],
        w2=lin2.T.astype(jnp.bfloat16), b2=lin2_b[None, :],
        ln2_g=jnp.ones((1, E), jnp.float32), ln2_b=jnp.zeros((1, E), jnp.float32),
        sel=sel, fcw=fc_w.T.reshape(T, E, H1), fcb=fc_b[None, :],
        p2=p2,
        bn2_g=jnp.ones((ROWS2, 1), jnp.float32), bn2_b=jnp.zeros((ROWS2, 1), jnp.float32),
        fc2_w=fc2_w.T, fc2_b=fc2_b[None, :],
    )


if __name__ == "__main__":
    key = jax.random.PRNGKey(0)
    pkey, xkey = jax.random.split(key)
    params = init_params(pkey)
    x = jax.random.normal(xkey, (B, N, F_IN), jnp.float32)   # (batch, seg_num*input_time, input_feature)

    out = net_forward(x, params)
    out = jax.block_until_ready(out)
    assert out.shape == (B, SEG * P_STEP, 1), out.shape
    assert bool(jnp.all(jnp.isfinite(out)))
    print("KERNEL_OK")
</pallas_src>

<mosaic_0001>
module attributes {stable_mosaic.version = 11 : i64} {
  func.func @net_kernel(%arg0: memref<24x8xf32, #tpu.memory_space<vmem>>, %arg1: memref<8x64xf32, #tpu.memory_space<vmem>>, %arg2: memref<24x64xf32, #tpu.memory_space<vmem>>, %arg3: memref<64x32xf32, #tpu.memory_space<vmem>>, %arg4: memref<24x32xf32, #tpu.memory_space<vmem>>, %arg5: memref<24x24xf32, #tpu.memory_space<vmem>>, %arg6: memref<24x1xf32, #tpu.memory_space<vmem>>, %arg7: memref<24x1xf32, #tpu.memory_space<vmem>>, %arg8: memref<2x32x16xf32, #tpu.memory_space<vmem>>, %arg9: memref<2x1x16xf32, #tpu.memory_space<vmem>>, %arg10: memref<2x32x16xf32, #tpu.memory_space<vmem>>, %arg11: memref<2x1x16xf32, #tpu.memory_space<vmem>>, %arg12: memref<2x32x16xf32, #tpu.memory_space<vmem>>, %arg13: memref<2x1x16xf32, #tpu.memory_space<vmem>>, %arg14: memref<2x16x32xf32, #tpu.memory_space<vmem>>, %arg15: memref<1x32xf32, #tpu.memory_space<vmem>>, %arg16: memref<24x24xf32, #tpu.memory_space<vmem>>, %arg17: memref<1x32xf32, #tpu.memory_space<vmem>>, %arg18: memref<1x32xf32, #tpu.memory_space<vmem>>, %arg19: memref<32x2048xbf16, #tpu.memory_space<vmem>>, %arg20: memref<1x2048xf32, #tpu.memory_space<vmem>>, %arg21: memref<2048x32xbf16, #tpu.memory_space<vmem>>, %arg22: memref<1x32xf32, #tpu.memory_space<vmem>>, %arg23: memref<1x32xf32, #tpu.memory_space<vmem>>, %arg24: memref<1x32xf32, #tpu.memory_space<vmem>>, %arg25: memref<3x8x24xf32, #tpu.memory_space<vmem>>, %arg26: memref<3x32x32xf32, #tpu.memory_space<vmem>>, %arg27: memref<1x32xf32, #tpu.memory_space<vmem>>, %arg28: memref<8x8xf32, #tpu.memory_space<vmem>>, %arg29: memref<8x1xf32, #tpu.memory_space<vmem>>, %arg30: memref<8x1xf32, #tpu.memory_space<vmem>>, %arg31: memref<32x2xf32, #tpu.memory_space<vmem>>, %arg32: memref<1x2xf32, #tpu.memory_space<vmem>>, %arg33: memref<8x2xf32, #tpu.memory_space<vmem>>) attributes {dimension_semantics = [], scalar_prefetch = 0 : i64, scratch_operands = 0 : i64, tpu.core_type = #tpu.core_type<tc>} {
    %c0 = arith.constant 0 : index
    %c0_0 = arith.constant 0 : index
    %0 = vector.load %arg0[%c0, %c0_0] : memref<24x8xf32, #tpu.memory_space<vmem>>, vector<24x8xf32>
    %c0_1 = arith.constant 0 : index
    %c0_2 = arith.constant 0 : index
    %1 = vector.load %arg1[%c0_1, %c0_2] : memref<8x64xf32, #tpu.memory_space<vmem>>, vector<8x64xf32>
    %cst = arith.constant dense<0.000000e+00> : vector<24x64xf32>
    %2 = tpu.matmul %0, %1, %cst {dimension_numbers = #tpu.dot_dimension_numbers<[1], [0], [0], [1], [0, 0, 1, 1], [], []>} : vector<24x8xf32>, vector<8x64xf32>, vector<24x64xf32> -> vector<24x64xf32>
    %c0_3 = arith.constant 0 : index
    %c0_4 = arith.constant 0 : index
    %3 = vector.load %arg2[%c0_3, %c0_4] : memref<24x64xf32, #tpu.memory_space<vmem>>, vector<24x64xf32>
    %4 = arith.mulf %3, %2 : vector<24x64xf32>
    %c0_5 = arith.constant 0 : index
    %c0_6 = arith.constant 0 : index
    %5 = vector.load %arg3[%c0_5, %c0_6] : memref<64x32xf32, #tpu.memory_space<vmem>>, vector<64x32xf32>
    %cst_7 = arith.constant dense<0.000000e+00> : vector<24x32xf32>
    %6 = tpu.matmul %4, %5, %cst_7 {dimension_numbers = #tpu.dot_dimension_numbers<[1], [0], [0], [1], [0, 0, 1, 1], [], []>} : vector<24x64xf32>, vector<64x32xf32>, vector<24x32xf32> -> vector<24x32xf32>
    %c0_8 = arith.constant 0 : index
    %c0_9 = arith.constant 0 : index
    %7 = vector.load %arg4[%c0_8, %c0_9] : memref<24x32xf32, #tpu.memory_space<vmem>>, vector<24x32xf32>
    %8 = arith.addf %6, %7 : vector<24x32xf32>
    %c0_10 = arith.constant 0 : index
    %c0_11 = arith.constant 0 : index
    %9 = vector.load %arg5[%c0_10, %c0_11] : memref<24x24xf32, #tpu.memory_space<vmem>>, vector<24x24xf32>
    %cst_12 = arith.constant dense<0.000000e+00> : vector<24x32xf32>
    %10 = tpu.matmul %9, %8, %cst_12 {dimension_numbers = #tpu.dot_dimension_numbers<[1], [0], [0], [1], [0, 0, 1, 1], [], []>} : vector<24x24xf32>, vector<24x32xf32>, vector<24x32xf32> -> vector<24x32xf32>
    %c0_13 = arith.constant 0 : index
    %c0_14 = arith.constant 0 : index
    %11 = vector.load %arg5[%c0_13, %c0_14] : memref<24x24xf32, #tpu.memory_space<vmem>>, vector<24x24xf32>
    %12 = arith.mulf %8, %8 : vector<24x32xf32>
    %cst_15 = arith.constant dense<0.000000e+00> : vector<24x32xf32>
    %13 = tpu.matmul %11, %12, %cst_15 {dimension_numbers = #tpu.dot_dimension_numbers<[1], [0], [0], [1], [0, 0, 1, 1], [], []>} : vector<24x24xf32>, vector<24x32xf32>, vector<24x32xf32> -> vector<24x32xf32>
    %cst_16 = arith.constant dense<0.000000e+00> : vector<24xf32>
    %14 = vector.multi_reduction <add>, %10, %cst_16 [1] : vector<24x32xf32> to vector<24xf32>
    %15 = vector.shape_cast %14 : vector<24xf32> to vector<24x1xf32>
    %cst_17 = arith.constant 1.562500e-02 : f32
    %16 = vector.broadcast %cst_17 : f32 to vector<24x1xf32>
    %17 = arith.mulf %15, %16 : vector<24x1xf32>
    %cst_18 = arith.constant dense<0.000000e+00> : vector<24xf32>
    %18 = vector.multi_reduction <add>, %13, %cst_18 [1] : vector<24x32xf32> to vector<24xf32>
    %19 = vector.shape_cast %18 : vector<24xf32> to vector<24x1xf32>
    %cst_19 = arith.constant 1.562500e-02 : f32
    %20 = vector.broadcast %cst_19 : f32 to vector<24x1xf32>
    %21 = arith.mulf %19, %20 : vector<24x1xf32>
    %22 = arith.mulf %17, %17 : vector<24x1xf32>
    %23 = arith.subf %21, %22 : vector<24x1xf32>
    %cst_20 = arith.constant 9.99999974E-6 : f32
    %24 = vector.broadcast %cst_20 : f32 to vector<24x1xf32>
    %25 = arith.addf %23, %24 : vector<24x1xf32>
    %26 = math.rsqrt %25 : vector<24x1xf32>
    %c0_21 = arith.constant 0 : index
    %c0_22 = arith.constant 0 : index
    %27 = vector.load %arg6[%c0_21, %c0_22] : memref<24x1xf32, #tpu.memory_space<vmem>>, vector<24x1xf32>
    %28 = vector.broadcast %17 : vector<24x1xf32> to vector<24x32xf32>
    %29 = arith.subf %8, %28 : vector<24x32xf32>
    %30 = vector.broadcast %27 : vector<24x1xf32> to vector<24x32xf32>
    %31 = arith.mulf %30, %29 : vector<24x32xf32>
    %32 = vector.broadcast %26 : vector<24x1xf32> to vector<24x32xf32>
    %33 = arith.mulf %31, %32 : vector<24x32xf32>
    %c0_23 = arith.constant 0 : index
    %c0_24 = arith.constant 0 : index
    %34 = vector.load %arg7[%c0_23, %c0_24] : memref<24x1xf32, #tpu.memory_space<vmem>>, vector<24x1xf32>
    %35 = vector.broadcast %34 : vector<24x1xf32> to vector<24x32xf32>
    %36 = arith.addf %33, %35 : vector<24x32xf32>
    %cst_25 = arith.constant 0.000000e+00 : f32
    %37 = vector.broadcast %cst_25 : f32 to vector<24x32xf32>
    %38 = arith.maximumf %36, %37 : vector<24x32xf32>
    %c0_26 = arith.constant 0 : index
    %c0_27 = arith.constant 0 : index
    %39 = vector.load %arg16[%c0_26, %c0_27] : memref<24x24xf32, #tpu.memory_space<vmem>>, vector<24x24xf32>
    %c0_28 = arith.constant 0 : index
    %c0_29 = arith.constant 0 : index
    %c0_30 = arith.constant 0 : index
    %40 = vector.load %arg8[%c0_28, %c0_29, %c0_30] : memref<2x32x16xf32, #tpu.memory_space<vmem>>, vector<1x32x16xf32>
    %41 = vector.shape_cast %40 : vector<1x32x16xf32> to vector<32x16xf32>
    %cst_31 = arith.constant dense<0.000000e+00> : vector<24x16xf32>
    %42 = tpu.matmul %38, %41, %cst_31 {dimension_numbers = #tpu.dot_dimension_numbers<[1], [0], [0], [1], [0, 0, 1, 1], [], []>} : vector<24x32xf32>, vector<32x16xf32>, vector<24x16xf32> -> vector<24x16xf32>
    %c0_32 = arith.constant 0 : index
    %c0_33 = arith.constant 0 : index
    %c0_34 = arith.constant 0 : index
    %43 = vector.load %arg9[%c0_32, %c0_33, %c0_34] : memref<2x1x16xf32, #tpu.memory_space<vmem>>, vector<1x1x16xf32>
    %44 = vector.shape_cast %43 : vector<1x1x16xf32> to vector<1x16xf32>
    %45 = vector.broadcast %44 : vector<1x16xf32> to vector<24x16xf32>
    %46 = arith.addf %42, %45 : vector<24x16xf32>
    %c0_35 = arith.constant 0 : index
    %c0_36 = arith.constant 0 : index
    %c0_37 = arith.constant 0 : index
    %47 = vector.load %arg10[%c0_35, %c0_36, %c0_37] : memref<2x32x16xf32, #tpu.memory_space<vmem>>, vector<1x32x16xf32>
    %48 = vector.shape_cast %47 : vector<1x32x16xf32> to vector<32x16xf32>
    %cst_38 = arith.constant dense<0.000000e+00> : vector<24x16xf32>
    %49 = tpu.matmul %38, %48, %cst_38 {dimension_numbers = #tpu.dot_dimension_numbers<[1], [0], [0], [1], [0, 0, 1, 1], [], []>} : vector<24x32xf32>, vector<32x16xf32>, vector<24x16xf32> -> vector<24x16xf32>
    %c0_39 = arith.constant 0 : index
    %c0_40 = arith.constant 0 : index
    %c0_41 = arith.constant 0 : index
    %50 = vector.load %arg11[%c0_39, %c0_40, %c0_41] : memref<2x1x16xf32, #tpu.memory_space<vmem>>, vector<1x1x16xf32>
    %51 = vector.shape_cast %50 : vector<1x1x16xf32> to vector<1x16xf32>
    %52 = vector.broadcast %51 : vector<1x16xf32> to vector<24x16xf32>
    %53 = arith.addf %49, %52 : vector<24x16xf32>
    %c0_42 = arith.constant 0 : index
    %c0_43 = arith.constant 0 : index
    %c0_44 = arith.constant 0 : index
    %54 = vector.load %arg12[%c0_42, %c0_43, %c0_44] : memref<2x32x16xf32, #tpu.memory_space<vmem>>, vector<1x32x16xf32>
    %55 = vector.shape_cast %54 : vector<1x32x16xf32> to vector<32x16xf32>
    %cst_45 = arith.constant dense<0.000000e+00> : vector<24x16xf32>
    %56 = tpu.matmul %38, %55, %cst_45 {dimension_numbers = #tpu.dot_dimension_numbers<[1], [0], [0], [1], [0, 0, 1, 1], [], []>} : vector<24x32xf32>, vector<32x16xf32>, vector<24x16xf32> -> vector<24x16xf32>
    %c0_46 = arith.constant 0 : index
    %c0_47 = arith.constant 0 : index
    %c0_48 = arith.constant 0 : index
    %57 = vector.load %arg13[%c0_46, %c0_47, %c0_48] : memref<2x1x16xf32, #tpu.memory_space<vmem>>, vector<1x1x16xf32>
    %58 = vector.shape_cast %57 : vector<1x1x16xf32> to vector<1x16xf32>
    %59 = vector.broadcast %58 : vector<1x16xf32> to vector<24x16xf32>
    %60 = arith.addf %56, %59 : vector<24x16xf32>
    %cst_49 = arith.constant dense<0.000000e+00> : vector<24x24xf32>
    %61 = tpu.matmul %46, %53, %cst_49 {dimension_numbers = #tpu.dot_dimension_numbers<[1], [1], [0], [0], [0, 0, 1, 0], [], []>} : vector<24x16xf32>, vector<24x16xf32>, vector<24x24xf32> -> vector<24x24xf32>
    %cst_50 = arith.constant 2.500000e-01 : f32
    %62 = vector.broadcast %cst_50 : f32 to vector<24x24xf32>
    %63 = arith.mulf %61, %62 : vector<24x24xf32>
    %64 = arith.addf %63, %39 : vector<24x24xf32>
    %cst_51 = arith.constant dense<0xFF800000> : vector<24xf32>
    %65 = vector.multi_reduction <maximumf>, %64, %cst_51 [1] : vector<24x24xf32> to vector<24xf32>
    %66 = vector.shape_cast %65 : vector<24xf32> to vector<24x1xf32>
    %67 = vector.broadcast %66 : vector<24x1xf32> to vector<24x24xf32>
    %68 = arith.subf %64, %67 : vector<24x24xf32>
    %69 = math.exp %68 : vector<24x24xf32>
    %cst_52 = arith.constant dense<0.000000e+00> : vector<24xf32>
    %70 = vector.multi_reduction <add>, %69, %cst_52 [1] : vector<24x24xf32> to vector<24xf32>
    %71 = vector.shape_cast %70 : vector<24xf32> to vector<24x1xf32>
    %72 = tpu.reciprocal %71 {approx = true} : vector<24x1xf32> -> vector<24x1xf32>
    %73 = vector.broadcast %72 : vector<24x1xf32> to vector<24x24xf32>
    %74 = arith.mulf %69, %73 : vector<24x24xf32>
    %cst_53 = arith.constant dense<0.000000e+00> : vector<24x16xf32>
    %75 = tpu.matmul %74, %60, %cst_53 {dimension_numbers = #tpu.dot_dimension_numbers<[1], [0], [0], [1], [0, 0, 1, 1], [], []>} : vector<24x24xf32>, vector<24x16xf32>, vector<24x16xf32> -> vector<24x16xf32>
    %c0_54 = arith.constant 0 : index
    %c0_55 = arith.constant 0 : index
    %c0_56 = arith.constant 0 : index
    %76 = vector.load %arg14[%c0_54, %c0_55, %c0_56] : memref<2x16x32xf32, #tpu.memory_space<vmem>>, vector<1x16x32xf32>
    %77 = vector.shape_cast %76 : vector<1x16x32xf32> to vector<16x32xf32>
    %cst_57 = arith.constant dense<0.000000e+00> : vector<24x32xf32>
    %78 = tpu.matmul %75, %77, %cst_57 {dimension_numbers = #tpu.dot_dimension_numbers<[1], [0], [0], [1], [0, 0, 1, 1], [], []>} : vector<24x16xf32>, vector<16x32xf32>, vector<24x32xf32> -> vector<24x32xf32>
    %c1 = arith.constant 1 : index
    %c0_58 = arith.constant 0 : index
    %c0_59 = arith.constant 0 : index
    %79 = vector.load %arg8[%c1, %c0_58, %c0_59] : memref<2x32x16xf32, #tpu.memory_space<vmem>>, vector<1x32x16xf32>
    %80 = vector.shape_cast %79 : vector<1x32x16xf32> to vector<32x16xf32>
    %cst_60 = arith.constant dense<0.000000e+00> : vector<24x16xf32>
    %81 = tpu.matmul %38, %80, %cst_60 {dimension_numbers = #tpu.dot_dimension_numbers<[1], [0], [0], [1], [0, 0, 1, 1], [], []>} : vector<24x32xf32>, vector<32x16xf32>, vector<24x16xf32> -> vector<24x16xf32>
    %c1_61 = arith.constant 1 : index
    %c0_62 = arith.constant 0 : index
    %c0_63 = arith.constant 0 : index
    %82 = vector.load %arg9[%c1_61, %c0_62, %c0_63] : memref<2x1x16xf32, #tpu.memory_space<vmem>>, vector<1x1x16xf32>
    %83 = vector.shape_cast %82 : vector<1x1x16xf32> to vector<1x16xf32>
    %84 = vector.broadcast %83 : vector<1x16xf32> to vector<24x16xf32>
    %85 = arith.addf %81, %84 : vector<24x16xf32>
    %c1_64 = arith.constant 1 : index
    %c0_65 = arith.constant 0 : index
    %c0_66 = arith.constant 0 : index
    %86 = vector.load %arg10[%c1_64, %c0_65, %c0_66] : memref<2x32x16xf32, #tpu.memory_space<vmem>>, vector<1x32x16xf32>
    %87 = vector.shape_cast %86 : vector<1x32x16xf32> to vector<32x16xf32>
    %cst_67 = arith.constant dense<0.000000e+00> : vector<24x16xf32>
    %88 = tpu.matmul %38, %87, %cst_67 {dimension_numbers = #tpu.dot_dimension_numbers<[1], [0], [0], [1], [0, 0, 1, 1], [], []>} : vector<24x32xf32>, vector<32x16xf32>, vector<24x16xf32> -> vector<24x16xf32>
    %c1_68 = arith.constant 1 : index
    %c0_69 = arith.constant 0 : index
    %c0_70 = arith.constant 0 : index
    %89 = vector.load %arg11[%c1_68, %c0_69, %c0_70] : memref<2x1x16xf32, #tpu.memory_space<vmem>>, vector<1x1x16xf32>
    %90 = vector.shape_cast %89 : vector<1x1x16xf32> to vector<1x16xf32>
    %91 = vector.broadcast %90 : vector<1x16xf32> to vector<24x16xf32>
    %92 = arith.addf %88, %91 : vector<24x16xf32>
    %c1_71 = arith.constant 1 : index
    %c0_72 = arith.constant 0 : index
    %c0_73 = arith.constant 0 : index
    %93 = vector.load %arg12[%c1_71, %c0_72, %c0_73] : memref<2x32x16xf32, #tpu.memory_space<vmem>>, vector<1x32x16xf32>
    %94 = vector.shape_cast %93 : vector<1x32x16xf32> to vector<32x16xf32>
    %cst_74 = arith.constant dense<0.000000e+00> : vector<24x16xf32>
    %95 = tpu.matmul %38, %94, %cst_74 {dimension_numbers = #tpu.dot_dimension_numbers<[1], [0], [0], [1], [0, 0, 1, 1], [], []>} : vector<24x32xf32>, vector<32x16xf32>, vector<24x16xf32> -> vector<24x16xf32>
    %c1_75 = arith.constant 1 : index
    %c0_76 = arith.constant 0 : index
    %c0_77 = arith.constant 0 : index
    %96 = vector.load %arg13[%c1_75, %c0_76, %c0_77] : memref<2x1x16xf32, #tpu.memory_space<vmem>>, vector<1x1x16xf32>
    %97 = vector.shape_cast %96 : vector<1x1x16xf32> to vector<1x16xf32>
    %98 = vector.broadcast %97 : vector<1x16xf32> to vector<24x16xf32>
    %99 = arith.addf %95, %98 : vector<24x16xf32>
    %cst_78 = arith.constant dense<0.000000e+00> : vector<24x24xf32>
    %100 = tpu.matmul %85, %92, %cst_78 {dimension_numbers = #tpu.dot_dimension_numbers<[1], [1], [0], [0], [0, 0, 1, 0], [], []>} : vector<24x16xf32>, vector<24x16xf32>, vector<24x24xf32> -> vector<24x24xf32>
    %cst_79 = arith.constant 2.500000e-01 : f32
    %101 = vector.broadcast %cst_79 : f32 to vector<24x24xf32>
    %102 = arith.mulf %100, %101 : vector<24x24xf32>
    %103 = arith.addf %102, %39 : vector<24x24xf32>
    %cst_80 = arith.constant dense<0xFF800000> : vector<24xf32>
    %104 = vector.multi_reduction <maximumf>, %103, %cst_80 [1] : vector<24x24xf32> to vector<24xf32>
    %105 = vector.shape_cast %104 : vector<24xf32> to vector<24x1xf32>
    %106 = vector.broadcast %105 : vector<24x1xf32> to vector<24x24xf32>
    %107 = arith.subf %103, %106 : vector<24x24xf32>
    %108 = math.exp %107 : vector<24x24xf32>
    %cst_81 = arith.constant dense<0.000000e+00> : vector<24xf32>
    %109 = vector.multi_reduction <add>, %108, %cst_81 [1] : vector<24x24xf32> to vector<24xf32>
    %110 = vector.shape_cast %109 : vector<24xf32> to vector<24x1xf32>
    %111 = tpu.reciprocal %110 {approx = true} : vector<24x1xf32> -> vector<24x1xf32>
    %112 = vector.broadcast %111 : vector<24x1xf32> to vector<24x24xf32>
    %113 = arith.mulf %108, %112 : vector<24x24xf32>
    %cst_82 = arith.constant dense<0.000000e+00> : vector<24x16xf32>
    %114 = tpu.matmul %113, %99, %cst_82 {dimension_numbers = #tpu.dot_dimension_numbers<[1], [0], [0], [1], [0, 0, 1, 1], [], []>} : vector<24x24xf32>, vector<24x16xf32>, vector<24x16xf32> -> vector<24x16xf32>
    %c1_83 = arith.constant 1 : index
    %c0_84 = arith.constant 0 : index
    %c0_85 = arith.constant 0 : index
    %115 = vector.load %arg14[%c1_83, %c0_84, %c0_85] : memref<2x16x32xf32, #tpu.memory_space<vmem>>, vector<1x16x32xf32>
    %116 = vector.shape_cast %115 : vector<1x16x32xf32> to vector<16x32xf32>
    %cst_86 = arith.constant dense<0.000000e+00> : vector<24x32xf32>
    %117 = tpu.matmul %114, %116, %cst_86 {dimension_numbers = #tpu.dot_dimension_numbers<[1], [0], [0], [1], [0, 0, 1, 1], [], []>} : vector<24x16xf32>, vector<16x32xf32>, vector<24x32xf32> -> vector<24x32xf32>
    %118 = arith.addf %78, %117 : vector<24x32xf32>
    %119 = arith.addf %38, %118 : vector<24x32xf32>
    %c0_87 = arith.constant 0 : index
    %c0_88 = arith.constant 0 : index
    %120 = vector.load %arg15[%c0_87, %c0_88] : memref<1x32xf32, #tpu.memory_space<vmem>>, vector<1x32xf32>
    %121 = vector.broadcast %120 : vector<1x32xf32> to vector<24x32xf32>
    %122 = arith.addf %119, %121 : vector<24x32xf32>
    %cst_89 = arith.constant dense<0.000000e+00> : vector<24xf32>
    %123 = vector.multi_reduction <add>, %122, %cst_89 [1] : vector<24x32xf32> to vector<24xf32>
    %124 = vector.shape_cast %123 : vector<24xf32> to vector<24x1xf32>
    %cst_90 = arith.constant 3.200000e+01 : f32
    %125 = vector.broadcast %cst_90 : f32 to vector<24x1xf32>
    %126 = arith.divf %124, %125 : vector<24x1xf32>
    %127 = vector.broadcast %126 : vector<24x1xf32> to vector<24x32xf32>
    %128 = arith.subf %122, %127 : vector<24x32xf32>
    %c0_91 = arith.constant 0 : index
    %c0_92 = arith.constant 0 : index
    %129 = vector.load %arg17[%c0_91, %c0_92] : memref<1x32xf32, #tpu.memory_space<vmem>>, vector<1x32xf32>
    %130 = vector.broadcast %129 : vector<1x32xf32> to vector<24x32xf32>
    %131 = arith.mulf %130, %128 : vector<24x32xf32>
    %132 = arith.mulf %128, %128 : vector<24x32xf32>
    %cst_93 = arith.constant dense<0.000000e+00> : vector<24xf32>
    %133 = vector.multi_reduction <add>, %132, %cst_93 [1] : vector<24x32xf32> to vector<24xf32>
    %134 = vector.shape_cast %133 : vector<24xf32> to vector<24x1xf32>
    %cst_94 = arith.constant 3.200000e+01 : f32
    %135 = vector.broadcast %cst_94 : f32 to vector<24x1xf32>
    %136 = arith.divf %134, %135 : vector<24x1xf32>
    %cst_95 = arith.constant 9.99999974E-6 : f32
    %137 = vector.broadcast %cst_95 : f32 to vector<24x1xf32>
    %138 = arith.addf %136, %137 : vector<24x1xf32>
    %139 = math.rsqrt %138 : vector<24x1xf32>
    %140 = vector.broadcast %139 : vector<24x1xf32> to vector<24x32xf32>
    %141 = arith.mulf %131, %140 : vector<24x32xf32>
    %c0_96 = arith.constant 0 : index
    %c0_97 = arith.constant 0 : index
    %142 = vector.load %arg18[%c0_96, %c0_97] : memref<1x32xf32, #tpu.memory_space<vmem>>, vector<1x32xf32>
    %143 = vector.broadcast %142 : vector<1x32xf32> to vector<24x32xf32>
    %144 = arith.addf %141, %143 : vector<24x32xf32>
    %145 = arith.truncf %144 : vector<24x32xf32> to vector<24x32xbf16>
    %c0_98 = arith.constant 0 : index
    %c0_99 = arith.constant 0 : index
    %146 = vector.load %arg19[%c0_98, %c0_99] : memref<32x2048xbf16, #tpu.memory_space<vmem>>, vector<32x2048xbf16>
    %cst_100 = arith.constant dense<0.000000e+00> : vector<24x2048xf32>
    %147 = tpu.matmul %145, %146, %cst_100 {dimension_numbers = #tpu.dot_dimension_numbers<[1], [0], [0], [1], [0, 0, 1, 1], [], []>} : vector<24x32xbf16>, vector<32x2048xbf16>, vector<24x2048xf32> -> vector<24x2048xf32>
    %c0_101 = arith.constant 0 : index
    %c0_102 = arith.constant 0 : index
    %148 = vector.load %arg20[%c0_101, %c0_102] : memref<1x2048xf32, #tpu.memory_space<vmem>>, vector<1x2048xf32>
    %149 = vector.broadcast %148 : vector<1x2048xf32> to vector<24x2048xf32>
    %150 = arith.addf %147, %149 : vector<24x2048xf32>
    %cst_103 = arith.constant 0.000000e+00 : f32
    %151 = vector.broadcast %cst_103 : f32 to vector<24x2048xf32>
    %152 = arith.maximumf %150, %151 : vector<24x2048xf32>
    %153 = arith.truncf %152 : vector<24x2048xf32> to vector<24x2048xbf16>
    %c0_104 = arith.constant 0 : index
    %c0_105 = arith.constant 0 : index
    %154 = vector.load %arg21[%c0_104, %c0_105] : memref<2048x32xbf16, #tpu.memory_space<vmem>>, vector<2048x32xbf16>
    %cst_106 = arith.constant dense<0.000000e+00> : vector<24x32xf32>
    %155 = tpu.matmul %153, %154, %cst_106 {dimension_numbers = #tpu.dot_dimension_numbers<[1], [0], [0], [1], [0, 0, 1, 1], [], []>} : vector<24x2048xbf16>, vector<2048x32xbf16>, vector<24x32xf32> -> vector<24x32xf32>
    %c0_107 = arith.constant 0 : index
    %c0_108 = arith.constant 0 : index
    %156 = vector.load %arg22[%c0_107, %c0_108] : memref<1x32xf32, #tpu.memory_space<vmem>>, vector<1x32xf32>
    %157 = vector.broadcast %156 : vector<1x32xf32> to vector<24x32xf32>
    %158 = arith.addf %155, %157 : vector<24x32xf32>
    %159 = arith.addf %144, %158 : vector<24x32xf32>
    %cst_109 = arith.constant dense<0.000000e+00> : vector<24xf32>
    %160 = vector.multi_reduction <add>, %159, %cst_109 [1] : vector<24x32xf32> to vector<24xf32>
    %161 = vector.shape_cast %160 : vector<24xf32> to vector<24x1xf32>
    %cst_110 = arith.constant 3.200000e+01 : f32
    %162 = vector.broadcast %cst_110 : f32 to vector<24x1xf32>
    %163 = arith.divf %161, %162 : vector<24x1xf32>
    %164 = vector.broadcast %163 : vector<24x1xf32> to vector<24x32xf32>
    %165 = arith.subf %159, %164 : vector<24x32xf32>
    %c0_111 = arith.constant 0 : index
    %c0_112 = arith.constant 0 : index
    %166 = vector.load %arg23[%c0_111, %c0_112] : memref<1x32xf32, #tpu.memory_space<vmem>>, vector<1x32xf32>
    %167 = vector.broadcast %166 : vector<1x32xf32> to vector<24x32xf32>
    %168 = arith.mulf %167, %165 : vector<24x32xf32>
    %169 = arith.mulf %165, %165 : vector<24x32xf32>
    %cst_113 = arith.constant dense<0.000000e+00> : vector<24xf32>
    %170 = vector.multi_reduction <add>, %169, %cst_113 [1] : vector<24x32xf32> to vector<24xf32>
    %171 = vector.shape_cast %170 : vector<24xf32> to vector<24x1xf32>
    %cst_114 = arith.constant 3.200000e+01 : f32
    %172 = vector.broadcast %cst_114 : f32 to vector<24x1xf32>
    %173 = arith.divf %171, %172 : vector<24x1xf32>
    %cst_115 = arith.constant 9.99999974E-6 : f32
    %174 = vector.broadcast %cst_115 : f32 to vector<24x1xf32>
    %175 = arith.addf %173, %174 : vector<24x1xf32>
    %176 = math.rsqrt %175 : vector<24x1xf32>
    %177 = vector.broadcast %176 : vector<24x1xf32> to vector<24x32xf32>
    %178 = arith.mulf %168, %177 : vector<24x32xf32>
    %c0_116 = arith.constant 0 : index
    %c0_117 = arith.constant 0 : index
    %179 = vector.load %arg24[%c0_116, %c0_117] : memref<1x32xf32, #tpu.memory_space<vmem>>, vector<1x32xf32>
    %180 = vector.broadcast %179 : vector<1x32xf32> to vector<24x32xf32>
    %181 = arith.addf %178, %180 : vector<24x32xf32>
    %c0_118 = arith.constant 0 : index
    %c0_119 = arith.constant 0 : index
    %c0_120 = arith.constant 0 : index
    %182 = vector.load %arg25[%c0_118, %c0_119, %c0_120] : memref<3x8x24xf32, #tpu.memory_space<vmem>>, vector<1x8x24xf32>
    %183 = vector.shape_cast %182 : vector<1x8x24xf32> to vector<8x24xf32>
    %cst_121 = arith.constant dense<0.000000e+00> : vector<8x32xf32>
    %184 = tpu.matmul %183, %181, %cst_121 {dimension_numbers = #tpu.dot_dimension_numbers<[1], [0], [0], [1], [0, 0, 1, 1], [], []>} : vector<8x24xf32>, vector<24x32xf32>, vector<8x32xf32> -> vector<8x32xf32>
    %c0_122 = arith.constant 0 : index
    %c0_123 = arith.constant 0 : index
    %c0_124 = arith.constant 0 : index
    %185 = vector.load %arg26[%c0_122, %c0_123, %c0_124] : memref<3x32x32xf32, #tpu.memory_space<vmem>>, vector<1x32x32xf32>
    %186 = vector.shape_cast %185 : vector<1x32x32xf32> to vector<32x32xf32>
    %cst_125 = arith.constant dense<0.000000e+00> : vector<8x32xf32>
    %187 = tpu.matmul %184, %186, %cst_125 {dimension_numbers = #tpu.dot_dimension_numbers<[1], [0], [0], [1], [0, 0, 1, 1], [], []>} : vector<8x32xf32>, vector<32x32xf32>, vector<8x32xf32> -> vector<8x32xf32>
    %c1_126 = arith.constant 1 : index
    %c0_127 = arith.constant 0 : index
    %c0_128 = arith.constant 0 : index
    %188 = vector.load %arg25[%c1_126, %c0_127, %c0_128] : memref<3x8x24xf32, #tpu.memory_space<vmem>>, vector<1x8x24xf32>
    %189 = vector.shape_cast %188 : vector<1x8x24xf32> to vector<8x24xf32>
    %cst_129 = arith.constant dense<0.000000e+00> : vector<8x32xf32>
    %190 = tpu.matmul %189, %181, %cst_129 {dimension_numbers = #tpu.dot_dimension_numbers<[1], [0], [0], [1], [0, 0, 1, 1], [], []>} : vector<8x24xf32>, vector<24x32xf32>, vector<8x32xf32> -> vector<8x32xf32>
    %c1_130 = arith.constant 1 : index
    %c0_131 = arith.constant 0 : index
    %c0_132 = arith.constant 0 : index
    %191 = vector.load %arg26[%c1_130, %c0_131, %c0_132] : memref<3x32x32xf32, #tpu.memory_space<vmem>>, vector<1x32x32xf32>
    %192 = vector.shape_cast %191 : vector<1x32x32xf32> to vector<32x32xf32>
    %cst_133 = arith.constant dense<0.000000e+00> : vector<8x32xf32>
    %193 = tpu.matmul %190, %192, %cst_133 {dimension_numbers = #tpu.dot_dimension_numbers<[1], [0], [0], [1], [0, 0, 1, 1], [], []>} : vector<8x32xf32>, vector<32x32xf32>, vector<8x32xf32> -> vector<8x32xf32>
    %194 = arith.addf %187, %193 : vector<8x32xf32>
    %c2 = arith.constant 2 : index
    %c0_134 = arith.constant 0 : index
    %c0_135 = arith.constant 0 : index
    %195 = vector.load %arg25[%c2, %c0_134, %c0_135] : memref<3x8x24xf32, #tpu.memory_space<vmem>>, vector<1x8x24xf32>
    %196 = vector.shape_cast %195 : vector<1x8x24xf32> to vector<8x24xf32>
    %cst_136 = arith.constant dense<0.000000e+00> : vector<8x32xf32>
    %197 = tpu.matmul %196, %181, %cst_136 {dimension_numbers = #tpu.dot_dimension_numbers<[1], [0], [0], [1], [0, 0, 1, 1], [], []>} : vector<8x24xf32>, vector<24x32xf32>, vector<8x32xf32> -> vector<8x32xf32>
    %c2_137 = arith.constant 2 : index
    %c0_138 = arith.constant 0 : index
    %c0_139 = arith.constant 0 : index
    %198 = vector.load %arg26[%c2_137, %c0_138, %c0_139] : memref<3x32x32xf32, #tpu.memory_space<vmem>>, vector<1x32x32xf32>
    %199 = vector.shape_cast %198 : vector<1x32x32xf32> to vector<32x32xf32>
    %cst_140 = arith.constant dense<0.000000e+00> : vector<8x32xf32>
    %200 = tpu.matmul %197, %199, %cst_140 {dimension_numbers = #tpu.dot_dimension_numbers<[1], [0], [0], [1], [0, 0, 1, 1], [], []>} : vector<8x32xf32>, vector<32x32xf32>, vector<8x32xf32> -> vector<8x32xf32>
    %201 = arith.addf %194, %200 : vector<8x32xf32>
    %c0_141 = arith.constant 0 : index
    %c0_142 = arith.constant 0 : index
    %202 = vector.load %arg27[%c0_141, %c0_142] : memref<1x32xf32, #tpu.memory_space<vmem>>, vector<1x32xf32>
    %203 = vector.broadcast %202 : vector<1x32xf32> to vector<8x32xf32>
    %204 = arith.addf %201, %203 : vector<8x32xf32>
    %c0_143 = arith.constant 0 : index
    %c0_144 = arith.constant 0 : index
    %205 = vector.load %arg28[%c0_143, %c0_144] : memref<8x8xf32, #tpu.memory_space<vmem>>, vector<8x8xf32>
    %cst_145 = arith.constant dense<0.000000e+00> : vector<8x32xf32>
    %206 = tpu.matmul %205, %204, %cst_145 {dimension_numbers = #tpu.dot_dimension_numbers<[1], [0], [0], [1], [0, 0, 1, 1], [], []>} : vector<8x8xf32>, vector<8x32xf32>, vector<8x32xf32> -> vector<8x32xf32>
    %c0_146 = arith.constant 0 : index
    %c0_147 = arith.constant 0 : index
    %207 = vector.load %arg28[%c0_146, %c0_147] : memref<8x8xf32, #tpu.memory_space<vmem>>, vector<8x8xf32>
    %208 = arith.mulf %204, %204 : vector<8x32xf32>
    %cst_148 = arith.constant dense<0.000000e+00> : vector<8x32xf32>
    %209 = tpu.matmul %207, %208, %cst_148 {dimension_numbers = #tpu.dot_dimension_numbers<[1], [0], [0], [1], [0, 0, 1, 1], [], []>} : vector<8x8xf32>, vector<8x32xf32>, vector<8x32xf32> -> vector<8x32xf32>
    %cst_149 = arith.constant dense<0.000000e+00> : vector<8xf32>
    %210 = vector.multi_reduction <add>, %206, %cst_149 [1] : vector<8x32xf32> to vector<8xf32>
    %211 = vector.shape_cast %210 : vector<8xf32> to vector<8x1xf32>
    %cst_150 = arith.constant 1.562500e-02 : f32
    %212 = vector.broadcast %cst_150 : f32 to vector<8x1xf32>
    %213 = arith.mulf %211, %212 : vector<8x1xf32>
    %cst_151 = arith.constant dense<0.000000e+00> : vector<8xf32>
    %214 = vector.multi_reduction <add>, %209, %cst_151 [1] : vector<8x32xf32> to vector<8xf32>
    %215 = vector.shape_cast %214 : vector<8xf32> to vector<8x1xf32>
    %cst_152 = arith.constant 1.562500e-02 : f32
    %216 = vector.broadcast %cst_152 : f32 to vector<8x1xf32>
    %217 = arith.mulf %215, %216 : vector<8x1xf32>
    %218 = arith.mulf %213, %213 : vector<8x1xf32>
    %219 = arith.subf %217, %218 : vector<8x1xf32>
    %cst_153 = arith.constant 9.99999974E-6 : f32
    %220 = vector.broadcast %cst_153 : f32 to vector<8x1xf32>
    %221 = arith.addf %219, %220 : vector<8x1xf32>
    %222 = math.rsqrt %221 : vector<8x1xf32>
    %c0_154 = arith.constant 0 : index
    %c0_155 = arith.constant 0 : index
    %223 = vector.load %arg29[%c0_154, %c0_155] : memref<8x1xf32, #tpu.memory_space<vmem>>, vector<8x1xf32>
    %224 = vector.broadcast %213 : vector<8x1xf32> to vector<8x32xf32>
    %225 = arith.subf %204, %224 : vector<8x32xf32>
    %226 = vector.broadcast %223 : vector<8x1xf32> to vector<8x32xf32>
    %227 = arith.mulf %226, %225 : vector<8x32xf32>
    %228 = vector.broadcast %222 : vector<8x1xf32> to vector<8x32xf32>
    %229 = arith.mulf %227, %228 : vector<8x32xf32>
    %c0_156 = arith.constant 0 : index
    %c0_157 = arith.constant 0 : index
    %230 = vector.load %arg30[%c0_156, %c0_157] : memref<8x1xf32, #tpu.memory_space<vmem>>, vector<8x1xf32>
    %231 = vector.broadcast %230 : vector<8x1xf32> to vector<8x32xf32>
    %232 = arith.addf %229, %231 : vector<8x32xf32>
    %cst_158 = arith.constant 0.000000e+00 : f32
    %233 = vector.broadcast %cst_158 : f32 to vector<8x32xf32>
    %234 = arith.maximumf %232, %233 : vector<8x32xf32>
    %c0_159 = arith.constant 0 : index
    %c0_160 = arith.constant 0 : index
    %235 = vector.load %arg31[%c0_159, %c0_160] : memref<32x2xf32, #tpu.memory_space<vmem>>, vector<32x2xf32>
    %cst_161 = arith.constant dense<0.000000e+00> : vector<8x2xf32>
    %236 = tpu.matmul %234, %235, %cst_161 {dimension_numbers = #tpu.dot_dimension_numbers<[1], [0], [0], [1], [0, 0, 1, 1], [], []>} : vector<8x32xf32>, vector<32x2xf32>, vector<8x2xf32> -> vector<8x2xf32>
    %c0_162 = arith.constant 0 : index
    %c0_163 = arith.constant 0 : index
    %237 = vector.load %arg32[%c0_162, %c0_163] : memref<1x2xf32, #tpu.memory_space<vmem>>, vector<1x2xf32>
    %238 = vector.broadcast %237 : vector<1x2xf32> to vector<8x2xf32>
    %239 = arith.addf %236, %238 : vector<8x2xf32>
    %c0_164 = arith.constant 0 : index
    %c0_165 = arith.constant 0 : index
    %240 = vector.load %arg33[%c0_164, %c0_165] : memref<8x2xf32, #tpu.memory_space<vmem>>, vector<8x2xf32>
    tpu.vector_store %arg33[%c0_164, %c0_165], %239 {strides = array<i32>} : memref<8x2xf32, #tpu.memory_space<vmem>>, vector<8x2xf32>,
    return
  }
}

</mosaic_0001>

<llo_original>
// kernel: net_forward.1
$region0: #{net_forward.1}
  #allocation0 [shape = 'u32[]', space=smem, size = 0x4, offset = 0x4, fixed_abs, tag = 'smem constant byte address 0x4 - core index']
  #allocation1 [shape = 'u32[144,128]{1,0:T(1,128)}', space=vmem, size = 0x12000, scoped, tag = 'internal scratch']
  %s0 = inlined_call_operand.smem [shape: u32[34], index: -1, kind: input, shape index: {}]
  %s1 = sld [smem:[%s0]]
  %s2 = scalar_lea.smem %s0, 1
  %s3 = sld [smem:[%s2]]
  %s4 = scalar_lea.smem %s0, 2
  %s5 = sld [smem:[%s4]]
  %s6 = scalar_lea.smem %s0, 3
  %s7 = sld [smem:[%s6]]
  %s8 = scalar_lea.smem %s0, 4
  %s9 = sld [smem:[%s8]]
  %s10 = scalar_lea.smem %s0, 5
  %s11 = sld [smem:[%s10]]
  %s12 = scalar_lea.smem %s0, 6
  %s13 = sld [smem:[%s12]]
  %s14 = scalar_lea.smem %s0, 7
  %s15 = sld [smem:[%s14]]
  %s16 = scalar_lea.smem %s0, 8
  %s17 = sld [smem:[%s16]]
  %s18 = scalar_lea.smem %s0, 9
  %s19 = sld [smem:[%s18]]
  %s20 = scalar_lea.smem %s0, 10
  %s21 = sld [smem:[%s20]]
  %s22 = scalar_lea.smem %s0, 11
  %s23 = sld [smem:[%s22]]
  %s24 = scalar_lea.smem %s0, 12
  %s25 = sld [smem:[%s24]]
  %s26 = scalar_lea.smem %s0, 13
  %s27 = sld [smem:[%s26]]
  %s28 = scalar_lea.smem %s0, 14
  %s29 = sld [smem:[%s28]]
  %s30 = scalar_lea.smem %s0, 15
  %s31 = sld [smem:[%s30]]
  %s32 = scalar_lea.smem %s0, 16
  %s33 = sld [smem:[%s32]]
  %s34 = scalar_lea.smem %s0, 17
  %s35 = sld [smem:[%s34]]
  %s36 = scalar_lea.smem %s0, 18
  %s37 = sld [smem:[%s36]]
  %s38 = scalar_lea.smem %s0, 19
  %s39 = sld [smem:[%s38]]
  %s40 = scalar_lea.smem %s0, 20
  %s41 = sld [smem:[%s40]]
  %s42 = scalar_lea.smem %s0, 21
  %s43 = sld [smem:[%s42]]
  %s44 = scalar_lea.smem %s0, 22
  %s45 = sld [smem:[%s44]]
  %s46 = scalar_lea.smem %s0, 23
  %s47 = sld [smem:[%s46]]
  %s48 = scalar_lea.smem %s0, 24
  %s49 = sld [smem:[%s48]]
  %s50 = scalar_lea.smem %s0, 25
  %s51 = sld [smem:[%s50]]
  %s52 = scalar_lea.smem %s0, 26
  %s53 = sld [smem:[%s52]]
  %s54 = scalar_lea.smem %s0, 27
  %s55 = sld [smem:[%s54]]
  %s56 = scalar_lea.smem %s0, 28
  %s57 = sld [smem:[%s56]]
  %s58 = scalar_lea.smem %s0, 29
  %s59 = sld [smem:[%s58]]
  %s60 = scalar_lea.smem %s0, 30
  %s61 = sld [smem:[%s60]]
  %s62 = scalar_lea.smem %s0, 31
  %s63 = sld [smem:[%s62]]
  %s64 = scalar_lea.smem %s0, 32
  %s65 = sld [smem:[%s64]]
  %s66 = scalar_lea.smem %s0, 33
  %s67 = sld [smem:[%s66]]
  %s68 = sld [smem:[#allocation0]]
  $region142: #{net_forward.1} parent=0
    _
  %s70 = ssub.s32 1, %s68
  %s71 = scalar_select 0, %s70, %s68
  // Predicated region
  $region2: #{net_forward.1} parent=0 // pred_check
    _
  $region3: #{net_forward.1} parent=0 // pred_check_branch
    %73 = sbr.rel (0) target = $region5
  $region4: #{net_forward.1} parent=0 // pred_region
    _
  $region5: #{net_forward.1} parent=0 // pred_fallthru
    _
  // Predicated region
  $region6: #{net_forward.1} parent=0 // pred_check
    _
  $region7: #{net_forward.1} parent=0 // pred_check_branch
    %75 = sbr.rel (0) target = $region9
  $region8: #{net_forward.1} parent=0 // pred_region
    _
  $region9: #{net_forward.1} parent=0 // pred_fallthru
    _
  // Predicated region
  $region10: #{net_forward.1} parent=0 // pred_check
    _
  $region11: #{net_forward.1} parent=0 // pred_check_branch
    %77 = sbr.rel (0) target = $region13
  $region12: #{net_forward.1} parent=0 // pred_region
    _
  $region13: #{net_forward.1} parent=0 // pred_fallthru
    _
  // Predicated region
  $region14: #{net_forward.1} parent=0 // pred_check
    _
  $region15: #{net_forward.1} parent=0 // pred_check_branch
    %79 = sbr.rel (0) target = $region17
  $region16: #{net_forward.1} parent=0 // pred_region
    _
  $region17: #{net_forward.1} parent=0 // pred_fallthru
    _
  // Predicated region
  $region18: #{net_forward.1} parent=0 // pred_check
    _
  $region19: #{net_forward.1} parent=0 // pred_check_branch
    %81 = sbr.rel (0) target = $region21
  $region20: #{net_forward.1} parent=0 // pred_region
    _
  $region21: #{net_forward.1} parent=0 // pred_fallthru
    _
  // Predicated region
  $region22: #{net_forward.1} parent=0 // pred_check
    _
  $region23: #{net_forward.1} parent=0 // pred_check_branch
    %83 = sbr.rel (0) target = $region25
  $region24: #{net_forward.1} parent=0 // pred_region
    _
  $region25: #{net_forward.1} parent=0 // pred_fallthru
    _
  // Predicated region
  $region26: #{net_forward.1} parent=0 // pred_check
    _
  $region27: #{net_forward.1} parent=0 // pred_check_branch
    %85 = sbr.rel (0) target = $region29
  $region28: #{net_forward.1} parent=0 // pred_region
    _
  $region29: #{net_forward.1} parent=0 // pred_fallthru
    _
  // Predicated region
  $region30: #{net_forward.1} parent=0 // pred_check
    _
  $region31: #{net_forward.1} parent=0 // pred_check_branch
    %87 = sbr.rel (0) target = $region33
  $region32: #{net_forward.1} parent=0 // pred_region
    _
  $region33: #{net_forward.1} parent=0 // pred_fallthru
    _
  // Predicated region
  $region34: #{net_forward.1} parent=0 // pred_check
    _
  $region35: #{net_forward.1} parent=0 // pred_check_branch
    %89 = sbr.rel (0) target = $region37
  $region36: #{net_forward.1} parent=0 // pred_region
    _
  $region37: #{net_forward.1} parent=0 // pred_fallthru
    _
  // Predicated region
  $region38: #{net_forward.1} parent=0 // pred_check
    _
  $region39: #{net_forward.1} parent=0 // pred_check_branch
    %91 = sbr.rel (0) target = $region41
  $region40: #{net_forward.1} parent=0 // pred_region
    _
  $region41: #{net_forward.1} parent=0 // pred_fallthru
    _
  // Predicated region
  $region42: #{net_forward.1} parent=0 // pred_check
    _
  $region43: #{net_forward.1} parent=0 // pred_check_branch
    %93 = sbr.rel (0) target = $region45
  $region44: #{net_forward.1} parent=0 // pred_region
    _
  $region45: #{net_forward.1} parent=0 // pred_fallthru
    _
  // Predicated region
  $region46: #{net_forward.1} parent=0 // pred_check
    _
  $region47: #{net_forward.1} parent=0 // pred_check_branch
    %95 = sbr.rel (0) target = $region49
  $region48: #{net_forward.1} parent=0 // pred_region
    _
  $region49: #{net_forward.1} parent=0 // pred_fallthru
    _
  // Predicated region
  $region50: #{net_forward.1} parent=0 // pred_check
    _
  $region51: #{net_forward.1} parent=0 // pred_check_branch
    %97 = sbr.rel (0) target = $region53
  $region52: #{net_forward.1} parent=0 // pred_region
    _
  $region53: #{net_forward.1} parent=0 // pred_fallthru
    _
  // Predicated region
  $region54: #{net_forward.1} parent=0 // pred_check
    _
  $region55: #{net_forward.1} parent=0 // pred_check_branch
    %99 = sbr.rel (0) target = $region57
  $region56: #{net_forward.1} parent=0 // pred_region
    _
  $region57: #{net_forward.1} parent=0 // pred_fallthru
    _
  // Predicated region
  $region58: #{net_forward.1} parent=0 // pred_check
    _
  $region59: #{net_forward.1} parent=0 // pred_check_branch
    %101 = sbr.rel (0) target = $region61
  $region60: #{net_forward.1} parent=0 // pred_region
    _
  $region61: #{net_forward.1} parent=0 // pred_fallthru
    _
  // Predicated region
  $region62: #{net_forward.1} parent=0 // pred_check
    _
  $region63: #{net_forward.1} parent=0 // pred_check_branch
    %103 = sbr.rel (0) target = $region65
  $region64: #{net_forward.1} parent=0 // pred_region
    _
  $region65: #{net_forward.1} parent=0 // pred_fallthru
    _
  // Predicated region
  $region66: #{net_forward.1} parent=0 // pred_check
    _
  $region67: #{net_forward.1} parent=0 // pred_check_branch
    %105 = sbr.rel (0) target = $region69
  $region68: #{net_forward.1} parent=0 // pred_region
    _
  $region69: #{net_forward.1} parent=0 // pred_fallthru
    _
  // Predicated region
  $region70: #{net_forward.1} parent=0 // pred_check
    _
  $region71: #{net_forward.1} parent=0 // pred_check_branch
    %107 = sbr.rel (0) target = $region73
  $region72: #{net_forward.1} parent=0 // pred_region
    _
  $region73: #{net_forward.1} parent=0 // pred_fallthru
    _
  // Predicated region
  $region74: #{net_forward.1} parent=0 // pred_check
    _
  $region75: #{net_forward.1} parent=0 // pred_check_branch
    %109 = sbr.rel (0) target = $region77
  $region76: #{net_forward.1} parent=0 // pred_region
    _
  $region77: #{net_forward.1} parent=0 // pred_fallthru
    _
  // Predicated region
  $region78: #{net_forward.1} parent=0 // pred_check
    _
  $region79: #{net_forward.1} parent=0 // pred_check_branch
    %111 = sbr.rel (0) target = $region81
  $region80: #{net_forward.1} parent=0 // pred_region
    _
  $region81: #{net_forward.1} parent=0 // pred_fallthru
    _
  // Predicated region
  $region82: #{net_forward.1} parent=0 // pred_check
    _
  $region83: #{net_forward.1} parent=0 // pred_check_branch
    %113 = sbr.rel (0) target = $region85
  $region84: #{net_forward.1} parent=0 // pred_region
    _
  $region85: #{net_forward.1} parent=0 // pred_fallthru
    _
  // Predicated region
  $region86: #{net_forward.1} parent=0 // pred_check
    _
  $region87: #{net_forward.1} parent=0 // pred_check_branch
    %115 = sbr.rel (0) target = $region89
  $region88: #{net_forward.1} parent=0 // pred_region
    _
  $region89: #{net_forward.1} parent=0 // pred_fallthru
    _
  // Predicated region
  $region90: #{net_forward.1} parent=0 // pred_check
    _
  $region91: #{net_forward.1} parent=0 // pred_check_branch
    %117 = sbr.rel (0) target = $region93
  $region92: #{net_forward.1} parent=0 // pred_region
    _
  $region93: #{net_forward.1} parent=0 // pred_fallthru
    _
  // Predicated region
  $region94: #{net_forward.1} parent=0 // pred_check
    _
  $region95: #{net_forward.1} parent=0 // pred_check_branch
    %119 = sbr.rel (0) target = $region97
  $region96: #{net_forward.1} parent=0 // pred_region
    _
  $region97: #{net_forward.1} parent=0 // pred_fallthru
    _
  // Predicated region
  $region98: #{net_forward.1} parent=0 // pred_check
    _
  $region99: #{net_forward.1} parent=0 // pred_check_branch
    %121 = sbr.rel (0) target = $region101
  $region100: #{net_forward.1} parent=0 // pred_region
    _
  $region101: #{net_forward.1} parent=0 // pred_fallthru
    _
  // Predicated region
  $region102: #{net_forward.1} parent=0 // pred_check
    _
  $region103: #{net_forward.1} parent=0 // pred_check_branch
    %123 = sbr.rel (0) target = $region105
  $region104: #{net_forward.1} parent=0 // pred_region
    _
  $region105: #{net_forward.1} parent=0 // pred_fallthru
    _
  // Predicated region
  $region106: #{net_forward.1} parent=0 // pred_check
    _
  $region107: #{net_forward.1} parent=0 // pred_check_branch
    %125 = sbr.rel (0) target = $region109
  $region108: #{net_forward.1} parent=0 // pred_region
    _
  $region109: #{net_forward.1} parent=0 // pred_fallthru
    _
  // Predicated region
  $region110: #{net_forward.1} parent=0 // pred_check
    _
  $region111: #{net_forward.1} parent=0 // pred_check_branch
    %127 = sbr.rel (0) target = $region113
  $region112: #{net_forward.1} parent=0 // pred_region
    _
  $region113: #{net_forward.1} parent=0 // pred_fallthru
    _
  // Predicated region
  $region114: #{net_forward.1} parent=0 // pred_check
    _
  $region115: #{net_forward.1} parent=0 // pred_check_branch
    %129 = sbr.rel (0) target = $region117
  $region116: #{net_forward.1} parent=0 // pred_region
    _
  $region117: #{net_forward.1} parent=0 // pred_fallthru
    _
  // Predicated region
  $region118: #{net_forward.1} parent=0 // pred_check
    _
  $region119: #{net_forward.1} parent=0 // pred_check_branch
    %131 = sbr.rel (0) target = $region121
  $region120: #{net_forward.1} parent=0 // pred_region
    _
  $region121: #{net_forward.1} parent=0 // pred_fallthru
    _
  // Predicated region
  $region122: #{net_forward.1} parent=0 // pred_check
    _
  $region123: #{net_forward.1} parent=0 // pred_check_branch
    %133 = sbr.rel (0) target = $region125
  $region124: #{net_forward.1} parent=0 // pred_region
    _
  $region125: #{net_forward.1} parent=0 // pred_fallthru
    _
  // Predicated region
  $region126: #{net_forward.1} parent=0 // pred_check
    _
  $region127: #{net_forward.1} parent=0 // pred_check_branch
    %135 = sbr.rel (0) target = $region129
  $region128: #{net_forward.1} parent=0 // pred_region
    _
  $region129: #{net_forward.1} parent=0 // pred_fallthru
    _
  // Predicated region
  $region130: #{net_forward.1} parent=0 // pred_check
    _
  $region131: #{net_forward.1} parent=0 // pred_check_branch
    %137 = sbr.rel (0) target = $region133
  $region132: #{net_forward.1} parent=0 // pred_region
    _
  $region133: #{net_forward.1} parent=0 // pred_fallthru
    _
  %v139 = vld [vmem:[%s1] sm:$0xff]
  %v140 = vld [vmem:[%s1 + $0x8] sm:$0xff]
  %v141 = vld [vmem:[%s1 + $0x10] sm:$0xff]
  %v142 = vld [vmem:[%s3] sm:$0xff]
  %vm143 = vcmask 64512
  %v145 = vsel %vm143, %v139, 0
  %v148 = vsel %vm143, %v140, 0
  %v151 = vsel %vm143, %v141, 0
  %153 = vmatprep.subr.mxu0 0.0
  %154 = vmatpush1.msra.mxu0 0.0
  %155 = vmatprep.subr.mxu0 0.0
  %156 = vmatpush1.msra.mxu0 0.0
  %157 = vmatprep.subr.mxu0 0.0
  %158 = vmatpush1.msra.mxu0 0.0
  %159 = vmatprep.subr.mxu0 0.0
  %160 = vmatpush1.msra.mxu0 0.0
  %161 = vmatprep.subr.mxu0 0.0
  %162 = vmatpush1.msra.mxu0 0.0
  %163 = vmatprep.subr.mxu0 0.0
  %164 = vmatpush1.msra.mxu0 0.0
  %165 = vmatprep.subr.mxu0 0.0
  %166 = vmatpush1.msra.mxu0 0.0
  %167 = vmatprep.subr.mxu0 0.0
  %168 = vmatpush1.msra.mxu0 0.0
  %169 = vmatprep.subr.mxu0 0.0
  %170 = vmatpush1.msra.mxu0 0.0
  %171 = vmatprep.subr.mxu0 0.0
  %172 = vmatpush1.msra.mxu0 0.0
  %173 = vmatprep.subr.mxu0 0.0
  %174 = vmatpush1.msra.mxu0 0.0
  %175 = vmatprep.subr.mxu0 0.0
  %176 = vmatpush1.msra.mxu0 0.0
  %177 = vmatprep.subr.mxu0 0.0
  %178 = vmatpush1.msra.mxu0 0.0
  %179 = vmatprep.subr.mxu0 0.0
  %180 = vmatpush1.msra.mxu0 0.0
  %181 = vmatprep.subr.mxu0 0.0
  %182 = vmatpush1.msra.mxu0 0.0
  %183 = vmatprep.subr.mxu0 0.0
  %184 = vmatpush1.msra.mxu0 %v142
  %185 = vmatprep.subr.mxu0 0.0
  %186 = vmatpush2.msra.mxu0 0.0
  %187 = vmatprep.subr.mxu0 0.0
  %188 = vmatpush2.msra.mxu0 0.0
  %189 = vmatprep.subr.mxu0 0.0
  %190 = vmatpush2.msra.mxu0 0.0
  %191 = vmatprep.subr.mxu0 0.0
  %192 = vmatpush2.msra.mxu0 0.0
  %193 = vmatprep.subr.mxu0 0.0
  %194 = vmatpush2.msra.mxu0 0.0
  %195 = vmatprep.subr.mxu0 0.0
  %196 = vmatpush2.msra.mxu0 0.0
  %197 = vmatprep.subr.mxu0 0.0
  %198 = vmatpush2.msra.mxu0 0.0
  %199 = vmatprep.subr.mxu0 0.0
  %200 = vmatpush2.msra.mxu0 0.0
  %201 = vmatprep.subr.mxu0 0.0
  %202 = vmatpush2.msra.mxu0 0.0
  %203 = vmatprep.subr.mxu0 0.0
  %204 = vmatpush2.msra.mxu0 0.0
  %205 = vmatprep.subr.mxu0 0.0
  %206 = vmatpush2.msra.mxu0 0.0
  %207 = vmatprep.subr.mxu0 0.0
  %208 = vmatpush2.msra.mxu0 0.0
  %209 = vmatprep.subr.mxu0 0.0
  %210 = vmatpush2.msra.mxu0 0.0
  %211 = vmatprep.subr.mxu0 0.0
  %212 = vmatpush2.msra.mxu0 0.0
  %213 = vmatprep.subr.mxu0 0.0
  %214 = vmatpush2.msra.mxu0 0.0
  %215 = vmatprep.subr.mxu0 0.0
  %216 = vmatpush2.msra.mxu0 0.0
  %217 = vmatprep.mubr.f32.mxu0 0.0
  %218 = vmatmul.mubr.f32.gmra.mxu0 %v145
  %v219 = vpop.f32.mrf.mxu0
  %v220 = vadd.f32 0.0, %v219
  %v221 = vpop.f32.mrf.mxu0
  %222 = vmatprep.mubr.f32.mxu0 0.0
  %223 = vmatmul.mubr.f32.gmra.mxu0 %v148
  %v224 = vpop.f32.mrf.mxu0
  %v225 = vadd.f32 0.0, %v224
  %v226 = vpop.f32.mrf.mxu0
  %227 = vmatprep.mubr.f32.mxu0 0.0
  %228 = vmatmul.mubr.f32.gmra.mxu0 %v151
  %v229 = vpop.f32.mrf.mxu0
  %v230 = vadd.f32 0.0, %v229
  %v231 = vpop.f32.mrf.mxu0
  %232 = vdwg.mxu0
  %v233 = vld [vmem:[%s5] sm:$0xff]
  %v234 = vld [vmem:[%s5 + $0x8] sm:$0xff]
  %v235 = vld [vmem:[%s5 + $0x10] sm:$0xff]
  %v236 = vmul.f32 %v233, %v220
  %v237 = vmul.f32 %v234, %v225
  %v238 = vmul.f32 %v235, %v230
  %v239 = vld [vmem:[%s7] sm:$0xff]
  %v240 = vld [vmem:[%s7 + $0x8] sm:$0xff]
  %v241 = vld [vmem:[%s7 + $0x10] sm:$0xff]
  %v242 = vld [vmem:[%s7 + $0x18] sm:$0xff]
  %v243 = vld [vmem:[%s7 + $0x20] sm:$0xff]
  %v244 = vld [vmem:[%s7 + $0x28] sm:$0xff]
  %v245 = vld [vmem:[%s7 + $0x30] sm:$0xff]
  %v246 = vld [vmem:[%s7 + $0x38] sm:$0xff]
  %v247 = vld [vmem:[%s9] sm:$0xff]
  %v248 = vld [vmem:[%s9 + $0x8] sm:$0xff]
  %v249 = vld [vmem:[%s9 + $0x10] sm:$0xff]
  %vm250 = vcmask 523264
  %v252 = vsel %vm250, %v236, 0
  %v255 = vsel %vm250, %v237, 0
  %v258 = vsel %vm250, %v238, 0
  %260 = vmatprep.subr.mxu0 0.0
  %261 = vmatpush1.msra.mxu0 0.0
  %262 = vmatprep.subr.mxu0 0.0
  %263 = vmatpush1.msra.mxu0 0.0
  %264 = vmatprep.subr.mxu0 0.0
  %265 = vmatpush1.msra.mxu0 0.0
  %266 = vmatprep.subr.mxu0 0.0
  %267 = vmatpush1.msra.mxu0 0.0
  %268 = vmatprep.subr.mxu0 0.0
  %269 = vmatpush1.msra.mxu0 0.0
  %270 = vmatprep.subr.mxu0 0.0
  %271 = vmatpush1.msra.mxu0 0.0
  %272 = vmatprep.subr.mxu0 0.0
  %273 = vmatpush1.msra.mxu0 0.0
  %274 = vmatprep.subr.mxu0 0.0
  %275 = vmatpush1.msra.mxu0 0.0
  %276 = vmatprep.subr.mxu0 0.0
  %277 = vmatpush1.msra.mxu0 %v246
  %278 = vmatprep.subr.mxu0 0.0
  %279 = vmatpush1.msra.mxu0 %v245
  %280 = vmatprep.subr.mxu0 0.0
  %281 = vmatpush1.msra.mxu0 %v244
  %282 = vmatprep.subr.mxu0 0.0
  %283 = vmatpush1.msra.mxu0 %v243
  %284 = vmatprep.subr.mxu0 0.0
  %285 = vmatpush1.msra.mxu0 %v242
  %286 = vmatprep.subr.mxu0 0.0
  %287 = vmatpush1.msra.mxu0 %v241
  %288 = vmatprep.subr.mxu0 0.0
  %289 = vmatpush1.msra.mxu0 %v240
  %290 = vmatprep.subr.mxu0 0.0
  %291 = vmatpush1.msra.mxu0 %v239
  %292 = vmatprep.subr.mxu0 0.0
  %293 = vmatpush2.msra.mxu0 0.0
  %294 = vmatprep.subr.mxu0 0.0
  %295 = vmatpush2.msra.mxu0 0.0
  %296 = vmatprep.subr.mxu0 0.0
  %297 = vmatpush2.msra.mxu0 0.0
  %298 = vmatprep.subr.mxu0 0.0
  %299 = vmatpush2.msra.mxu0 0.0
  %300 = vmatprep.subr.mxu0 0.0
  %301 = vmatpush2.msra.mxu0 0.0
  %302 = vmatprep.subr.mxu0 0.0
  %303 = vmatpush2.msra.mxu0 0.0
  %304 = vmatprep.subr.mxu0 0.0
  %305 = vmatpush2.msra.mxu0 0.0
  %306 = vmatprep.subr.mxu0 0.0
  %307 = vmatpush2.msra.mxu0 0.0
  %308 = vmatprep.subr.mxu0 0.0
  %309 = vmatpush2.msra.mxu0 0.0
  %310 = vmatprep.subr.mxu0 0.0
  %311 = vmatpush2.msra.mxu0 0.0
  %312 = vmatprep.subr.mxu0 0.0
  %313 = vmatpush2.msra.mxu0 0.0
  %314 = vmatprep.subr.mxu0 0.0
  %315 = vmatpush2.msra.mxu0 0.0
  %316 = vmatprep.subr.mxu0 0.0
  %317 = vmatpush2.msra.mxu0 0.0
  %318 = vmatprep.subr.mxu0 0.0
  %319 = vmatpush2.msra.mxu0 0.0
  %320 = vmatprep.subr.mxu0 0.0
  %321 = vmatpush2.msra.mxu0 0.0
  %322 = vmatprep.subr.mxu0 0.0
  %323 = vmatpush2.msra.mxu0 0.0
  %324 = vmatprep.mubr.f32.mxu0 0.0
  %325 = vmatmul.mubr.f32.gmra.mxu0 %v252
  %v326 = vpop.f32.mrf.mxu0
  %v327 = vadd.f32 %v247, %v326
  %v328 = vpop.f32.mrf.mxu0
  %329 = vmatprep.mubr.f32.mxu0 0.0
  %330 = vmatmul.mubr.f32.gmra.mxu0 %v255
  %v331 = vpop.f32.mrf.mxu0
  %v332 = vadd.f32 %v248, %v331
  %v333 = vpop.f32.mrf.mxu0
  %334 = vmatprep.mubr.f32.mxu0 0.0
  %335 = vmatmul.mubr.f32.gmra.mxu0 %v258
  %v336 = vpop.f32.mrf.mxu0
  %v337 = vadd.f32 %v249, %v336
  %v338 = vpop.f32.mrf.mxu0
  %339 = vdwg.mxu0
  %v340 = vld [vmem:[%s11] sm:$0xff]
  %v341 = vld [vmem:[%s11 + $0x8] sm:$0xff]
  %v342 = vld [vmem:[%s11 + $0x10] sm:$0xff]
  %vm343 = vcmask 195584
  %v345 = vsel %vm343, %v340, 0
  %v348 = vsel %vm343, %v341, 0
  %v351 = vsel %vm343, %v342, 0
  %353 = vmatprep.subr.mxu0 0.0
  %354 = vmatpush1.msra.mxu0 0.0
  %355 = vmatprep.subr.mxu0 0.0
  %356 = vmatpush1.msra.mxu0 0.0
  %357 = vmatprep.subr.mxu0 0.0
  %358 = vmatpush1.msra.mxu0 0.0
  %359 = vmatprep.subr.mxu0 0.0
  %360 = vmatpush1.msra.mxu0 0.0
  %361 = vmatprep.subr.mxu0 0.0
  %362 = vmatpush1.msra.mxu0 0.0
  %363 = vmatprep.subr.mxu0 0.0
  %364 = vmatpush1.msra.mxu0 0.0
  %365 = vmatprep.subr.mxu0 0.0
  %366 = vmatpush1.msra.mxu0 0.0
  %367 = vmatprep.subr.mxu0 0.0
  %368 = vmatpush1.msra.mxu0 0.0
  %369 = vmatprep.subr.mxu0 0.0
  %370 = vmatpush1.msra.mxu0 0.0
  %371 = vmatprep.subr.mxu0 0.0
  %372 = vmatpush1.msra.mxu0 0.0
  %373 = vmatprep.subr.mxu0 0.0
  %374 = vmatpush1.msra.mxu0 0.0
  %375 = vmatprep.subr.mxu0 0.0
  %376 = vmatpush1.msra.mxu0 0.0
  %377 = vmatprep.subr.mxu0 0.0
  %378 = vmatpush1.msra.mxu0 0.0
  %379 = vmatprep.subr.mxu0 0.0
  %380 = vmatpush1.msra.mxu0 %v337
  %381 = vmatprep.subr.mxu0 0.0
  %382 = vmatpush1.msra.mxu0 %v332
  %383 = vmatprep.subr.mxu0 0.0
  %384 = vmatpush1.msra.mxu0 %v327
  %385 = vmatprep.subr.mxu0 0.0
  %386 = vmatpush2.msra.mxu0 0.0
  %387 = vmatprep.subr.mxu0 0.0
  %388 = vmatpush2.msra.mxu0 0.0
  %389 = vmatprep.subr.mxu0 0.0
  %390 = vmatpush2.msra.mxu0 0.0
  %391 = vmatprep.subr.mxu0 0.0
  %392 = vmatpush2.msra.mxu0 0.0
  %393 = vmatprep.subr.mxu0 0.0
  %394 = vmatpush2.msra.mxu0 0.0
  %395 = vmatprep.subr.mxu0 0.0
  %396 = vmatpush2.msra.mxu0 0.0
  %397 = vmatprep.subr.mxu0 0.0
  %398 = vmatpush2.msra.mxu0 0.0
  %399 = vmatprep.subr.mxu0 0.0
  %400 = vmatpush2.msra.mxu0 0.0
  %401 = vmatprep.subr.mxu0 0.0
  %402 = vmatpush2.msra.mxu0 0.0
  %403 = vmatprep.subr.mxu0 0.0
  %404 = vmatpush2.msra.mxu0 0.0
  %405 = vmatprep.subr.mxu0 0.0
  %406 = vmatpush2.msra.mxu0 0.0
  %407 = vmatprep.subr.mxu0 0.0
  %408 = vmatpush2.msra.mxu0 0.0
  %409 = vmatprep.subr.mxu0 0.0
  %410 = vmatpush2.msra.mxu0 0.0
  %411 = vmatprep.subr.mxu0 0.0
  %412 = vmatpush2.msra.mxu0 0.0
  %413 = vmatprep.subr.mxu0 0.0
  %414 = vmatpush2.msra.mxu0 0.0
  %415 = vmatprep.subr.mxu0 0.0
  %416 = vmatpush2.msra.mxu0 0.0
  %417 = vmatprep.mubr.f32.mxu0 0.0
  %418 = vmatmul.mubr.f32.gmra.mxu0 %v345
  %v419 = vpop.f32.mrf.mxu0
  %v420 = vadd.f32 0.0, %v419
  %v421 = vpop.f32.mrf.mxu0
  %422 = vmatprep.mubr.f32.mxu0 0.0
  %423 = vmatmul.mubr.f32.gmra.mxu0 %v348
  %v424 = vpop.f32.mrf.mxu0
  %v425 = vadd.f32 0.0, %v424
  %v426 = vpop.f32.mrf.mxu0
  %427 = vmatprep.mubr.f32.mxu0 0.0
  %428 = vmatmul.mubr.f32.gmra.mxu0 %v351
  %v429 = vpop.f32.mrf.mxu0
  %v430 = vadd.f32 0.0, %v429
  %v431 = vpop.f32.mrf.mxu0
  %432 = vdwg.mxu0
  %v433 = vmul.f32 %v327, %v327
  %v434 = vmul.f32 %v332, %v332
  %v435 = vmul.f32 %v337, %v337
  %436 = vmatprep.subr.mxu0 0.0
  %437 = vmatpush1.msra.mxu0 0.0
  %438 = vmatprep.subr.mxu0 0.0
  %439 = vmatpush1.msra.mxu0 0.0
  %440 = vmatprep.subr.mxu0 0.0
  %441 = vmatpush1.msra.mxu0 0.0
  %442 = vmatprep.subr.mxu0 0.0
  %443 = vmatpush1.msra.mxu0 0.0
  %444 = vmatprep.subr.mxu0 0.0
  %445 = vmatpush1.msra.mxu0 0.0
  %446 = vmatprep.subr.mxu0 0.0
  %447 = vmatpush1.msra.mxu0 0.0
  %448 = vmatprep.subr.mxu0 0.0
  %449 = vmatpush1.msra.mxu0 0.0
  %450 = vmatprep.subr.mxu0 0.0
  %451 = vmatpush1.msra.mxu0 0.0
  %452 = vmatprep.subr.mxu0 0.0
  %453 = vmatpush1.msra.mxu0 0.0
  %454 = vmatprep.subr.mxu0 0.0
  %455 = vmatpush1.msra.mxu0 0.0
  %456 = vmatprep.subr.mxu0 0.0
  %457 = vmatpush1.msra.mxu0 0.0
  %458 = vmatprep.subr.mxu0 0.0
  %459 = vmatpush1.msra.mxu0 0.0
  %460 = vmatprep.subr.mxu0 0.0
  %461 = vmatpush1.msra.mxu0 0.0
  %462 = vmatprep.subr.mxu0 0.0
  %463 = vmatpush1.msra.mxu0 %v435
  %464 = vmatprep.subr.mxu0 0.0
  %465 = vmatpush1.msra.mxu0 %v434
  %466 = vmatprep.subr.mxu0 0.0
  %467 = vmatpush1.msra.mxu0 %v433
  %468 = vmatprep.subr.mxu0 0.0
  %469 = vmatpush2.msra.mxu0 0.0
  %470 = vmatprep.subr.mxu0 0.0
  %471 = vmatpush2.msra.mxu0 0.0
  %472 = vmatprep.subr.mxu0 0.0
  %473 = vmatpush2.msra.mxu0 0.0
  %474 = vmatprep.subr.mxu0 0.0
  %475 = vmatpush2.msra.mxu0 0.0
  %476 = vmatprep.subr.mxu0 0.0
  %477 = vmatpush2.msra.mxu0 0.0
  %478 = vmatprep.subr.mxu0 0.0
  %479 = vmatpush2.msra.mxu0 0.0
  %480 = vmatprep.subr.mxu0 0.0
  %481 = vmatpush2.msra.mxu0 0.0
  %482 = vmatprep.subr.mxu0 0.0
  %483 = vmatpush2.msra.mxu0 0.0
  %484 = vmatprep.subr.mxu0 0.0
  %485 = vmatpush2.msra.mxu0 0.0
  %486 = vmatprep.subr.mxu0 0.0
  %487 = vmatpush2.msra.mxu0 0.0
  %488 = vmatprep.subr.mxu0 0.0
  %489 = vmatpush2.msra.mxu0 0.0
  %490 = vmatprep.subr.mxu0 0.0
  %491 = vmatpush2.msra.mxu0 0.0
  %492 = vmatprep.subr.mxu0 0.0
  %493 = vmatpush2.msra.mxu0 0.0
  %494 = vmatprep.subr.mxu0 0.0
  %495 = vmatpush2.msra.mxu0 0.0
  %496 = vmatprep.subr.mxu0 0.0
  %497 = vmatpush2.msra.mxu0 0.0
  %498 = vmatprep.subr.mxu0 0.0
  %499 = vmatpush2.msra.mxu0 0.0
  %500 = vmatprep.mubr.f32.mxu0 0.0
  %501 = vmatmul.mubr.f32.gmra.mxu0 %v345
  %v502 = vpop.f32.mrf.mxu0
  %v503 = vadd.f32 0.0, %v502
  %v504 = vpop.f32.mrf.mxu0
  %505 = vmatprep.mubr.f32.mxu0 0.0
  %506 = vmatmul.mubr.f32.gmra.mxu0 %v348
  %v507 = vpop.f32.mrf.mxu0
  %v508 = vadd.f32 0.0, %v507
  %v509 = vpop.f32.mrf.mxu0
  %510 = vmatprep.mubr.f32.mxu0 0.0
  %511 = vmatmul.mubr.f32.gmra.mxu0 %v351
  %v512 = vpop.f32.mrf.mxu0
  %v513 = vadd.f32 0.0, %v512
  %v514 = vpop.f32.mrf.mxu0
  %515 = vdwg.mxu0
  %vm516 = vcmask 261120
  %v517 = vsel %vm516, %v420, 0.0
  %518 = vadd.xlane.f32.xlu0 %v517
  %v519 = vpop.xlane.xlu0 %518
  %v520 = vsel %vm516, %v425, 0.0
  %521 = vadd.xlane.f32.xlu0 %v520
  %v522 = vpop.xlane.xlu0 %521
  %v523 = vsel %vm516, %v430, 0.0
  %524 = vadd.xlane.f32.xlu0 %v523
  %v525 = vpop.xlane.xlu0 %524
  %v526 = vmul.f32 %v519, 0.015625
  %v527 = vmul.f32 %v522, 0.015625
  %v528 = vmul.f32 %v525, 0.015625
  %v529 = vsel %vm516, %v503, 0.0
  %530 = vadd.xlane.f32.xlu0 %v529
  %v531 = vpop.xlane.xlu0 %530
  %v532 = vsel %vm516, %v508, 0.0
  %533 = vadd.xlane.f32.xlu0 %v532
  %v534 = vpop.xlane.xlu0 %533
  %v535 = vsel %vm516, %v513, 0.0
  %536 = vadd.xlane.f32.xlu0 %v535
  %v537 = vpop.xlane.xlu0 %536
  %v538 = vmul.f32 %v531, 0.015625
  %v539 = vmul.f32 %v534, 0.015625
  %v540 = vmul.f32 %v537, 0.015625
  %v541 = vmul.f32 %v526, %v526
  %v542 = vmul.f32 %v527, %v527
  %v543 = vmul.f32 %v528, %v528
  %v544 = vsub.f32 %v538, %v541
  %v545 = vsub.f32 %v539, %v542
  %v546 = vsub.f32 %v540, %v543
  %v547 = vadd.f32 %v544, 1e-05
  %v548 = vadd.f32 %v545, 1e-05
  %v549 = vadd.f32 %v546, 1e-05
  %v550 = vrsqrt.pop %v547
  %v551 = vrsqrt.pop %v548
  %v552 = vrsqrt.pop %v549
  %v553 = vld [vmem:[%s13] sm:$0xff]
  %v554 = vld [vmem:[%s13 + $0x8] sm:$0xff]
  %v555 = vld [vmem:[%s13 + $0x10] sm:$0xff]
  %v556 = vsub.f32 %v327, %v526
  %v557 = vsub.f32 %v332, %v527
  %v558 = vsub.f32 %v337, %v528
  %560 = vset.pattern.permute.xlu0 0
  %561 = vperm.xlu0 %560, %v553
  %v562 = vpop.permute.xlu0 %561
  %565 = vset.pattern.permute.xlu0 0
  %566 = vperm.xlu0 %565, %v554
  %v567 = vpop.permute.xlu0 %566
  %570 = vset.pattern.permute.xlu0 0
  %571 = vperm.xlu0 %570, %v555
  %v572 = vpop.permute.xlu0 %571
  %v574 = vmul.f32 %v562, %v556
  %v575 = vmul.f32 %v567, %v557
  %v576 = vmul.f32 %v572, %v558
  %v577 = vmul.f32 %v574, %v550
  %v578 = vmul.f32 %v575, %v551
  %v579 = vmul.f32 %v576, %v552
  %v580 = vld [vmem:[%s15] sm:$0xff]
  %v581 = vld [vmem:[%s15 + $0x8] sm:$0xff]
  %v582 = vld [vmem:[%s15 + $0x10] sm:$0xff]
  %584 = vset.pattern.permute.xlu0 0
  %585 = vperm.xlu0 %584, %v580
  %v586 = vpop.permute.xlu0 %585
  %589 = vset.pattern.permute.xlu0 0
  %590 = vperm.xlu0 %589, %v581
  %v591 = vpop.permute.xlu0 %590
  %594 = vset.pattern.permute.xlu0 0
  %595 = vperm.xlu0 %594, %v582
  %v596 = vpop.permute.xlu0 %595
  %v598 = vadd.f32 %v577, %v586
  %v599 = vadd.f32 %v578, %v591
  %v600 = vadd.f32 %v579, %v596
  %v601 = vmax.f32 %v598, 0.0
  %v602 = vmax.f32 %v599, 0.0
  %v603 = vmax.f32 %v600, 0.0
  %v604 = vld [vmem:[%s33] sm:$0xff]
  %v605 = vld [vmem:[%s33 + $0x8] sm:$0xff]
  %v606 = vld [vmem:[%s33 + $0x10] sm:$0xff]
  %v607 = vld [vmem:[%s17] sm:$0xff]
  %v608 = vld [vmem:[%s17 + $0x8] sm:$0xff]
  %v609 = vld [vmem:[%s17 + $0x10] sm:$0xff]
  %v610 = vld [vmem:[%s17 + $0x18] sm:$0xff]
  %v611 = vld [vmem:[%s19] sm:$0x1]
  %v613 = vlaneseq
  %v614 = vshrl.u32 %v613, 7
  %v615 = vsub.s32 0, %v614
  %v616 = vrot.slane %v611, %v615
  %v619 = vsel %vm516, %v601, 0
  %v622 = vsel %vm516, %v602, 0
  %v625 = vsel %vm516, %v603, 0
  %627 = vmatprep.subr.mxu0 0.0
  %628 = vmatpush1.msra.mxu0 0.0
  %629 = vmatprep.subr.mxu0 0.0
  %630 = vmatpush1.msra.mxu0 0.0
  %631 = vmatprep.subr.mxu0 0.0
  %632 = vmatpush1.msra.mxu0 0.0
  %633 = vmatprep.subr.mxu0 0.0
  %634 = vmatpush1.msra.mxu0 0.0
  %635 = vmatprep.subr.mxu0 0.0
  %636 = vmatpush1.msra.mxu0 0.0
  %637 = vmatprep.subr.mxu0 0.0
  %638 = vmatpush1.msra.mxu0 0.0
  %639 = vmatprep.subr.mxu0 0.0
  %640 = vmatpush1.msra.mxu0 0.0
  %641 = vmatprep.subr.mxu0 0.0
  %642 = vmatpush1.msra.mxu0 0.0
  %643 = vmatprep.subr.mxu0 0.0
  %644 = vmatpush1.msra.mxu0 0.0
  %645 = vmatprep.subr.mxu0 0.0
  %646 = vmatpush1.msra.mxu0 0.0
  %647 = vmatprep.subr.mxu0 0.0
  %648 = vmatpush1.msra.mxu0 0.0
  %649 = vmatprep.subr.mxu0 0.0
  %650 = vmatpush1.msra.mxu0 0.0
  %651 = vmatprep.subr.mxu0 0.0
  %652 = vmatpush1.msra.mxu0 %v610
  %653 = vmatprep.subr.mxu0 0.0
  %654 = vmatpush1.msra.mxu0 %v609
  %655 = vmatprep.subr.mxu0 0.0
  %656 = vmatpush1.msra.mxu0 %v608
  %657 = vmatprep.subr.mxu0 0.0
  %658 = vmatpush1.msra.mxu0 %v607
  %659 = vmatprep.subr.mxu0 0.0
  %660 = vmatpush2.msra.mxu0 0.0
  %661 = vmatprep.subr.mxu0 0.0
  %662 = vmatpush2.msra.mxu0 0.0
  %663 = vmatprep.subr.mxu0 0.0
  %664 = vmatpush2.msra.mxu0 0.0
  %665 = vmatprep.subr.mxu0 0.0
  %666 = vmatpush2.msra.mxu0 0.0
  %667 = vmatprep.subr.mxu0 0.0
  %668 = vmatpush2.msra.mxu0 0.0
  %669 = vmatprep.subr.mxu0 0.0
  %670 = vmatpush2.msra.mxu0 0.0
  %671 = vmatprep.subr.mxu0 0.0
  %672 = vmatpush2.msra.mxu0 0.0
  %673 = vmatprep.subr.mxu0 0.0
  %674 = vmatpush2.msra.mxu0 0.0
  %675 = vmatprep.subr.mxu0 0.0
  %676 = vmatpush2.msra.mxu0 0.0
  %677 = vmatprep.subr.mxu0 0.0
  %678 = vmatpush2.msra.mxu0 0.0
  %679 = vmatprep.subr.mxu0 0.0
  %680 = vmatpush2.msra.mxu0 0.0
  %681 = vmatprep.subr.mxu0 0.0
  %682 = vmatpush2.msra.mxu0 0.0
  %683 = vmatprep.subr.mxu0 0.0
  %684 = vmatpush2.msra.mxu0 0.0
  %685 = vmatprep.subr.mxu0 0.0
  %686 = vmatpush2.msra.mxu0 0.0
  %687 = vmatprep.subr.mxu0 0.0
  %688 = vmatpush2.msra.mxu0 0.0
  %689 = vmatprep.subr.mxu0 0.0
  %690 = vmatpush2.msra.mxu0 0.0
  %691 = vmatprep.mubr.f32.mxu0 0.0
  %692 = vmatmul.mubr.f32.gmra.mxu0 %v619
  %v693 = vpop.f32.mrf.mxu0
  %v694 = vadd.f32 %v616, %v693
  %v695 = vpop.f32.mrf.mxu0
  %696 = vmatprep.mubr.f32.mxu0 0.0
  %697 = vmatmul.mubr.f32.gmra.mxu0 %v622
  %v698 = vpop.f32.mrf.mxu0
  %v699 = vadd.f32 %v616, %v698
  %v700 = vpop.f32.mrf.mxu0
  %701 = vmatprep.mubr.f32.mxu0 0.0
  %702 = vmatmul.mubr.f32.gmra.mxu0 %v625
  %v703 = vpop.f32.mrf.mxu0
  %v704 = vadd.f32 %v616, %v703
  %v705 = vpop.f32.mrf.mxu0
  %706 = vdwg.mxu0
  %v707 = vld [vmem:[%s21] sm:$0xff]
  %v708 = vld [vmem:[%s21 + $0x8] sm:$0xff]
  %v709 = vld [vmem:[%s21 + $0x10] sm:$0xff]
  %v710 = vld [vmem:[%s21 + $0x18] sm:$0xff]
  %v711 = vld [vmem:[%s23] sm:$0x1]
  %v713 = vlaneseq
  %v714 = vshrl.u32 %v713, 7
  %v715 = vsub.s32 0, %v714
  %v716 = vrot.slane %v711, %v715
  %718 = vmatprep.subr.mxu0 0.0
  %719 = vmatpush1.msra.mxu0 0.0
  %720 = vmatprep.subr.mxu0 0.0
  %721 = vmatpush1.msra.mxu0 0.0
  %722 = vmatprep.subr.mxu0 0.0
  %723 = vmatpush1.msra.mxu0 0.0
  %724 = vmatprep.subr.mxu0 0.0
  %725 = vmatpush1.msra.mxu0 0.0
  %726 = vmatprep.subr.mxu0 0.0
  %727 = vmatpush1.msra.mxu0 0.0
  %728 = vmatprep.subr.mxu0 0.0
  %729 = vmatpush1.msra.mxu0 0.0
  %730 = vmatprep.subr.mxu0 0.0
  %731 = vmatpush1.msra.mxu0 0.0
  %732 = vmatprep.subr.mxu0 0.0
  %733 = vmatpush1.msra.mxu0 0.0
  %734 = vmatprep.subr.mxu0 0.0
  %735 = vmatpush1.msra.mxu0 0.0
  %736 = vmatprep.subr.mxu0 0.0
  %737 = vmatpush1.msra.mxu0 0.0
  %738 = vmatprep.subr.mxu0 0.0
  %739 = vmatpush1.msra.mxu0 0.0
  %740 = vmatprep.subr.mxu0 0.0
  %741 = vmatpush1.msra.mxu0 0.0
  %742 = vmatprep.subr.mxu0 0.0
  %743 = vmatpush1.msra.mxu0 %v710
  %744 = vmatprep.subr.mxu0 0.0
  %745 = vmatpush1.msra.mxu0 %v709
  %746 = vmatprep.subr.mxu0 0.0
  %747 = vmatpush1.msra.mxu0 %v708
  %748 = vmatprep.subr.mxu0 0.0
  %749 = vmatpush1.msra.mxu0 %v707
  %750 = vmatprep.subr.mxu0 0.0
  %751 = vmatpush2.msra.mxu0 0.0
  %752 = vmatprep.subr.mxu0 0.0
  %753 = vmatpush2.msra.mxu0 0.0
  %754 = vmatprep.subr.mxu0 0.0
  %755 = vmatpush2.msra.mxu0 0.0
  %756 = vmatprep.subr.mxu0 0.0
  %757 = vmatpush2.msra.mxu0 0.0
  %758 = vmatprep.subr.mxu0 0.0
  %759 = vmatpush2.msra.mxu0 0.0
  %760 = vmatprep.subr.mxu0 0.0
  %761 = vmatpush2.msra.mxu0 0.0
  %762 = vmatprep.subr.mxu0 0.0
  %763 = vmatpush2.msra.mxu0 0.0
  %764 = vmatprep.subr.mxu0 0.0
  %765 = vmatpush2.msra.mxu0 0.0
  %766 = vmatprep.subr.mxu0 0.0
  %767 = vmatpush2.msra.mxu0 0.0
  %768 = vmatprep.subr.mxu0 0.0
  %769 = vmatpush2.msra.mxu0 0.0
  %770 = vmatprep.subr.mxu0 0.0
  %771 = vmatpush2.msra.mxu0 0.0
  %772 = vmatprep.subr.mxu0 0.0
  %773 = vmatpush2.msra.mxu0 0.0
  %774 = vmatprep.subr.mxu0 0.0
  %775 = vmatpush2.msra.mxu0 0.0
  %776 = vmatprep.subr.mxu0 0.0
  %777 = vmatpush2.msra.mxu0 0.0
  %778 = vmatprep.subr.mxu0 0.0
  %779 = vmatpush2.msra.mxu0 0.0
  %780 = vmatprep.subr.mxu0 0.0
  %781 = vmatpush2.msra.mxu0 0.0
  %782 = vmatprep.mubr.f32.mxu0 0.0
  %783 = vmatmul.mubr.f32.gmra.mxu0 %v619
  %v784 = vpop.f32.mrf.mxu0
  %v785 = vadd.f32 %v716, %v784
  %v786 = vpop.f32.mrf.mxu0
  %787 = vmatprep.mubr.f32.mxu0 0.0
  %788 = vmatmul.mubr.f32.gmra.mxu0 %v622
  %v789 = vpop.f32.mrf.mxu0
  %v790 = vadd.f32 %v716, %v789
  %v791 = vpop.f32.mrf.mxu0
  %792 = vmatprep.mubr.f32.mxu0 0.0
  %793 = vmatmul.mubr.f32.gmra.mxu0 %v625
  %v794 = vpop.f32.mrf.mxu0
  %v795 = vadd.f32 %v716, %v794
  %v796 = vpop.f32.mrf.mxu0
  %797 = vdwg.mxu0
  %v798 = vld [vmem:[%s25] sm:$0xff]
  %v799 = vld [vmem:[%s25 + $0x8] sm:$0xff]
  %v800 = vld [vmem:[%s25 + $0x10] sm:$0xff]
  %v801 = vld [vmem:[%s25 + $0x18] sm:$0xff]
  %v802 = vld [vmem:[%s27] sm:$0x1]
  %v804 = vlaneseq
  %v805 = vshrl.u32 %v804, 7
  %v806 = vsub.s32 0, %v805
  %v807 = vrot.slane %v802, %v806
  %809 = vmatprep.subr.mxu0 0.0
  %810 = vmatpush1.msra.mxu0 0.0
  %811 = vmatprep.subr.mxu0 0.0
  %812 = vmatpush1.msra.mxu0 0.0
  %813 = vmatprep.subr.mxu0 0.0
  %814 = vmatpush1.msra.mxu0 0.0
  %815 = vmatprep.subr.mxu0 0.0
  %816 = vmatpush1.msra.mxu0 0.0
  %817 = vmatprep.subr.mxu0 0.0
  %818 = vmatpush1.msra.mxu0 0.0
  %819 = vmatprep.subr.mxu0 0.0
  %820 = vmatpush1.msra.mxu0 0.0
  %821 = vmatprep.subr.mxu0 0.0
  %822 = vmatpush1.msra.mxu0 0.0
  %823 = vmatprep.subr.mxu0 0.0
  %824 = vmatpush1.msra.mxu0 0.0
  %825 = vmatprep.subr.mxu0 0.0
  %826 = vmatpush1.msra.mxu0 0.0
  %827 = vmatprep.subr.mxu0 0.0
  %828 = vmatpush1.msra.mxu0 0.0
  %829 = vmatprep.subr.mxu0 0.0
  %830 = vmatpush1.msra.mxu0 0.0
  %831 = vmatprep.subr.mxu0 0.0
  %832 = vmatpush1.msra.mxu0 0.0
  %833 = vmatprep.subr.mxu0 0.0
  %834 = vmatpush1.msra.mxu0 %v801
  %835 = vmatprep.subr.mxu0 0.0
  %836 = vmatpush1.msra.mxu0 %v800
  %837 = vmatprep.subr.mxu0 0.0
  %838 = vmatpush1.msra.mxu0 %v799
  %839 = vmatprep.subr.mxu0 0.0
  %840 = vmatpush1.msra.mxu0 %v798
  %841 = vmatprep.subr.mxu0 0.0
  %842 = vmatpush2.msra.mxu0 0.0
  %843 = vmatprep.subr.mxu0 0.0
  %844 = vmatpush2.msra.mxu0 0.0
  %845 = vmatprep.subr.mxu0 0.0
  %846 = vmatpush2.msra.mxu0 0.0
  %847 = vmatprep.subr.mxu0 0.0
  %848 = vmatpush2.msra.mxu0 0.0
  %849 = vmatprep.subr.mxu0 0.0
  %850 = vmatpush2.msra.mxu0 0.0
  %851 = vmatprep.subr.mxu0 0.0
  %852 = vmatpush2.msra.mxu0 0.0
  %853 = vmatprep.subr.mxu0 0.0
  %854 = vmatpush2.msra.mxu0 0.0
  %855 = vmatprep.subr.mxu0 0.0
  %856 = vmatpush2.msra.mxu0 0.0
  %857 = vmatprep.subr.mxu0 0.0
  %858 = vmatpush2.msra.mxu0 0.0
  %859 = vmatprep.subr.mxu0 0.0
  %860 = vmatpush2.msra.mxu0 0.0
  %861 = vmatprep.subr.mxu0 0.0
  %862 = vmatpush2.msra.mxu0 0.0
  %863 = vmatprep.subr.mxu0 0.0
  %864 = vmatpush2.msra.mxu0 0.0
  %865 = vmatprep.subr.mxu0 0.0
  %866 = vmatpush2.msra.mxu0 0.0
  %867 = vmatprep.subr.mxu0 0.0
  %868 = vmatpush2.msra.mxu0 0.0
  %869 = vmatprep.subr.mxu0 0.0
  %870 = vmatpush2.msra.mxu0 0.0
  %871 = vmatprep.subr.mxu0 0.0
  %872 = vmatpush2.msra.mxu0 0.0
  %873 = vmatprep.mubr.f32.mxu0 0.0
  %874 = vmatmul.mubr.f32.gmra.mxu0 %v619
  %v875 = vpop.f32.mrf.mxu0
  %v876 = vadd.f32 %v807, %v875
  %v877 = vpop.f32.mrf.mxu0
  %878 = vmatprep.mubr.f32.mxu0 0.0
  %879 = vmatmul.mubr.f32.gmra.mxu0 %v622
  %v880 = vpop.f32.mrf.mxu0
  %v881 = vadd.f32 %v807, %v880
  %v882 = vpop.f32.mrf.mxu0
  %883 = vmatprep.mubr.f32.mxu0 0.0
  %884 = vmatmul.mubr.f32.gmra.mxu0 %v625
  %v885 = vpop.f32.mrf.mxu0
  %v886 = vadd.f32 %v807, %v885
  %v887 = vpop.f32.mrf.mxu0
  %888 = vdwg.mxu0
  %vm889 = vcmask 130048
  %v891 = vsel %vm889, %v694, 0
  %v894 = vsel %vm889, %v699, 0
  %v897 = vsel %vm889, %v704, 0
  %v900 = vsel %vm889, %v785, 0
  %v903 = vsel %vm889, %v790, 0
  %v906 = vsel %vm889, %v795, 0
  %908 = vmatprep.subr.mxu0 0.0
  %909 = vmatpush1.xpose.msra.mxu0 0.0
  %910 = vmatprep.subr.mxu0 0.0
  %911 = vmatpush1.xpose.msra.mxu0 0.0
  %912 = vmatprep.subr.mxu0 0.0
  %913 = vmatpush1.xpose.msra.mxu0 0.0
  %914 = vmatprep.subr.mxu0 0.0
  %915 = vmatpush1.xpose.msra.mxu0 0.0
  %916 = vmatprep.subr.mxu0 0.0
  %917 = vmatpush1.xpose.msra.mxu0 0.0
  %918 = vmatprep.subr.mxu0 0.0
  %919 = vmatpush1.xpose.msra.mxu0 0.0
  %920 = vmatprep.subr.mxu0 0.0
  %921 = vmatpush1.xpose.msra.mxu0 0.0
  %922 = vmatprep.subr.mxu0 0.0
  %923 = vmatpush1.xpose.msra.mxu0 0.0
  %924 = vmatprep.subr.mxu0 0.0
  %925 = vmatpush1.xpose.msra.mxu0 0.0
  %926 = vmatprep.subr.mxu0 0.0
  %927 = vmatpush1.xpose.msra.mxu0 0.0
  %928 = vmatprep.subr.mxu0 0.0
  %929 = vmatpush1.xpose.msra.mxu0 0.0
  %930 = vmatprep.subr.mxu0 0.0
  %931 = vmatpush1.xpose.msra.mxu0 0.0
  %932 = vmatprep.subr.mxu0 0.0
  %933 = vmatpush1.xpose.msra.mxu0 0.0
  %934 = vmatprep.subr.mxu0 0.0
  %935 = vmatpush1.xpose.msra.mxu0 %v906
  %936 = vmatprep.subr.mxu0 0.0
  %937 = vmatpush1.xpose.msra.mxu0 %v903
  %938 = vmatprep.subr.mxu0 0.0
  %939 = vmatpush1.xpose.msra.mxu0 %v900
  %940 = vmatprep.subr.mxu0 0.0
  %941 = vmatpush2.xpose.msra.mxu0 0.0
  %942 = vmatprep.subr.mxu0 0.0
  %943 = vmatpush2.xpose.msra.mxu0 0.0
  %944 = vmatprep.subr.mxu0 0.0
  %945 = vmatpush2.xpose.msra.mxu0 0.0
  %946 = vmatprep.subr.mxu0 0.0
  %947 = vmatpush2.xpose.msra.mxu0 0.0
  %948 = vmatprep.subr.mxu0 0.0
  %949 = vmatpush2.xpose.msra.mxu0 0.0
  %950 = vmatprep.subr.mxu0 0.0
  %951 = vmatpush2.xpose.msra.mxu0 0.0
  %952 = vmatprep.subr.mxu0 0.0
  %953 = vmatpush2.xpose.msra.mxu0 0.0
  %954 = vmatprep.subr.mxu0 0.0
  %955 = vmatpush2.xpose.msra.mxu0 0.0
  %956 = vmatprep.subr.mxu0 0.0
  %957 = vmatpush2.xpose.msra.mxu0 0.0
  %958 = vmatprep.subr.mxu0 0.0
  %959 = vmatpush2.xpose.msra.mxu0 0.0
  %960 = vmatprep.subr.mxu0 0.0
  %961 = vmatpush2.xpose.msra.mxu0 0.0
  %962 = vmatprep.subr.mxu0 0.0
  %963 = vmatpush2.xpose.msra.mxu0 0.0
  %964 = vmatprep.subr.mxu0 0.0
  %965 = vmatpush2.xpose.msra.mxu0 0.0
  %966 = vmatprep.subr.mxu0 0.0
  %967 = vmatpush2.xpose.msra.mxu0 0.0
  %968 = vmatprep.subr.mxu0 0.0
  %969 = vmatpush2.xpose.msra.mxu0 0.0
  %970 = vmatprep.subr.mxu0 0.0
  %971 = vmatpush2.xpose.msra.mxu0 0.0
  %972 = vmatprep.mubr.f32.mxu0 0.0
  %973 = vmatmul.mubr.f32.gmra.mxu0 %v891
  %v974 = vpop.f32.mrf.mxu0
  %v975 = vadd.f32 0.0, %v974
  %v976 = vpop.f32.mrf.mxu0
  %977 = vmatprep.mubr.f32.mxu0 0.0
  %978 = vmatmul.mubr.f32.gmra.mxu0 %v894
  %v979 = vpop.f32.mrf.mxu0
  %v980 = vadd.f32 0.0, %v979
  %v981 = vpop.f32.mrf.mxu0
  %982 = vmatprep.mubr.f32.mxu0 0.0
  %983 = vmatmul.mubr.f32.gmra.mxu0 %v897
  %v984 = vpop.f32.mrf.mxu0
  %v985 = vadd.f32 0.0, %v984
  %v986 = vpop.f32.mrf.mxu0
  %987 = vdwg.mxu0
  %v988 = vmul.f32 %v975, 0.25
  %v989 = vmul.f32 %v980, 0.25
  %v990 = vmul.f32 %v985, 0.25
  %v991 = vadd.f32 %v988, %v604
  %v992 = vadd.f32 %v989, %v605
  %v993 = vadd.f32 %v990, %v606
  %v994 = vsel %vm343, %v991, -inf
  %995 = vmax.xlane.f32.xlu0 %v994
  %v996 = vpop.xlane.xlu0 %995
  %v997 = vsel %vm343, %v992, -inf
  %998 = vmax.xlane.f32.xlu0 %v997
  %v999 = vpop.xlane.xlu0 %998
  %v1000 = vsel %vm343, %v993, -inf
  %1001 = vmax.xlane.f32.xlu0 %v1000
  %v1002 = vpop.xlane.xlu0 %1001
  %v1003 = vsub.f32 %v991, %v996
  %v1004 = vsub.f32 %v992, %v999
  %v1005 = vsub.f32 %v993, %v1002
  %v1006 = vmul.f32 %v1003, 1.442695
  %v1007 = vpow.pop %v1006
  %v1008 = vmul.f32 %v1004, 1.442695
  %v1009 = vpow.pop %v1008
  %v1010 = vmul.f32 %v1005, 1.442695
  %v1011 = vpow.pop %v1010
  %v1012 = vsel %vm343, %v1007, 0.0
  %1013 = vadd.xlane.f32.xlu0 %v1012
  %v1014 = vpop.xlane.xlu0 %1013
  %v1015 = vsel %vm343, %v1009, 0.0
  %1016 = vadd.xlane.f32.xlu0 %v1015
  %v1017 = vpop.xlane.xlu0 %1016
  %v1018 = vsel %vm343, %v1011, 0.0
  %1019 = vadd.xlane.f32.xlu0 %v1018
  %v1020 = vpop.xlane.xlu0 %1019
  %v1021 = vrcp.pop %v1014
  %v1022 = vrcp.pop %v1017
  %v1023 = vrcp.pop %v1020
  %v1024 = vmul.f32 %v1007, %v1021
  %v1025 = vmul.f32 %v1009, %v1022
  %v1026 = vmul.f32 %v1011, %v1023
  %v1028 = vsel %vm343, %v1024, 0
  %v1031 = vsel %vm343, %v1025, 0
  %v1034 = vsel %vm343, %v1026, 0
  %1036 = vmatprep.subr.mxu0 0.0
  %1037 = vmatpush1.msra.mxu0 0.0
  %1038 = vmatprep.subr.mxu0 0.0
  %1039 = vmatpush1.msra.mxu0 0.0
  %1040 = vmatprep.subr.mxu0 0.0
  %1041 = vmatpush1.msra.mxu0 0.0
  %1042 = vmatprep.subr.mxu0 0.0
  %1043 = vmatpush1.msra.mxu0 0.0
  %1044 = vmatprep.subr.mxu0 0.0
  %1045 = vmatpush1.msra.mxu0 0.0
  %1046 = vmatprep.subr.mxu0 0.0
  %1047 = vmatpush1.msra.mxu0 0.0
  %1048 = vmatprep.subr.mxu0 0.0
  %1049 = vmatpush1.msra.mxu0 0.0
  %1050 = vmatprep.subr.mxu0 0.0
  %1051 = vmatpush1.msra.mxu0 0.0
  %1052 = vmatprep.subr.mxu0 0.0
  %1053 = vmatpush1.msra.mxu0 0.0
  %1054 = vmatprep.subr.mxu0 0.0
  %1055 = vmatpush1.msra.mxu0 0.0
  %1056 = vmatprep.subr.mxu0 0.0
  %1057 = vmatpush1.msra.mxu0 0.0
  %1058 = vmatprep.subr.mxu0 0.0
  %1059 = vmatpush1.msra.mxu0 0.0
  %1060 = vmatprep.subr.mxu0 0.0
  %1061 = vmatpush1.msra.mxu0 0.0
  %1062 = vmatprep.subr.mxu0 0.0
  %1063 = vmatpush1.msra.mxu0 %v886
  %1064 = vmatprep.subr.mxu0 0.0
  %1065 = vmatpush1.msra.mxu0 %v881
  %1066 = vmatprep.subr.mxu0 0.0
  %1067 = vmatpush1.msra.mxu0 %v876
  %1068 = vmatprep.subr.mxu0 0.0
  %1069 = vmatpush2.msra.mxu0 0.0
  %1070 = vmatprep.subr.mxu0 0.0
  %1071 = vmatpush2.msra.mxu0 0.0
  %1072 = vmatprep.subr.mxu0 0.0
  %1073 = vmatpush2.msra.mxu0 0.0
  %1074 = vmatprep.subr.mxu0 0.0
  %1075 = vmatpush2.msra.mxu0 0.0
  %1076 = vmatprep.subr.mxu0 0.0
  %1077 = vmatpush2.msra.mxu0 0.0
  %1078 = vmatprep.subr.mxu0 0.0
  %1079 = vmatpush2.msra.mxu0 0.0
  %1080 = vmatprep.subr.mxu0 0.0
  %1081 = vmatpush2.msra.mxu0 0.0
  %1082 = vmatprep.subr.mxu0 0.0
  %1083 = vmatpush2.msra.mxu0 0.0
  %1084 = vmatprep.subr.mxu0 0.0
  %1085 = vmatpush2.msra.mxu0 0.0
  %1086 = vmatprep.subr.mxu0 0.0
  %1087 = vmatpush2.msra.mxu0 0.0
  %1088 = vmatprep.subr.mxu0 0.0
  %1089 = vmatpush2.msra.mxu0 0.0
  %1090 = vmatprep.subr.mxu0 0.0
  %1091 = vmatpush2.msra.mxu0 0.0
  %1092 = vmatprep.subr.mxu0 0.0
  %1093 = vmatpush2.msra.mxu0 0.0
  %1094 = vmatprep.subr.mxu0 0.0
  %1095 = vmatpush2.msra.mxu0 0.0
  %1096 = vmatprep.subr.mxu0 0.0
  %1097 = vmatpush2.msra.mxu0 0.0
  %1098 = vmatprep.subr.mxu0 0.0
  %1099 = vmatpush2.msra.mxu0 0.0
  %1100 = vmatprep.mubr.f32.mxu0 0.0
  %1101 = vmatmul.mubr.f32.gmra.mxu0 %v1028
  %v1102 = vpop.f32.mrf.mxu0
  %v1103 = vadd.f32 0.0, %v1102
  %v1104 = vpop.f32.mrf.mxu0
  %1105 = vmatprep.mubr.f32.mxu0 0.0
  %1106 = vmatmul.mubr.f32.gmra.mxu0 %v1031
  %v1107 = vpop.f32.mrf.mxu0
  %v1108 = vadd.f32 0.0, %v1107
  %v1109 = vpop.f32.mrf.mxu0
  %1110 = vmatprep.mubr.f32.mxu0 0.0
  %1111 = vmatmul.mubr.f32.gmra.mxu0 %v1034
  %v1112 = vpop.f32.mrf.mxu0
  %v1113 = vadd.f32 0.0, %v1112
  %v1114 = vpop.f32.mrf.mxu0
  %1115 = vdwg.mxu0
  %v1116 = vld [vmem:[%s29] sm:$0xff]
  %v1117 = vld [vmem:[%s29 + $0x8] sm:$0xff]
  %s1118 = scalar_lea.vmem %s17, 32
  %v1119 = vld [vmem:[%s1118] sm:$0xff]
  %v1120 = vld [vmem:[%s1118 + $0x8] sm:$0xff]
  %v1121 = vld [vmem:[%s1118 + $0x10] sm:$0xff]
  %v1122 = vld [vmem:[%s1118 + $0x18] sm:$0xff]
  %s1123 = scalar_lea.vmem %s19, 1
  %v1124 = vld [vmem:[%s1123] sm:$0x1]
  %v1126 = vlaneseq
  %v1127 = vshrl.u32 %v1126, 7
  %v1128 = vsub.s32 0, %v1127
  %v1129 = vrot.slane %v1124, %v1128
  %1131 = vmatprep.subr.mxu0 0.0
  %1132 = vmatpush1.msra.mxu0 0.0
  %1133 = vmatprep.subr.mxu0 0.0
  %1134 = vmatpush1.msra.mxu0 0.0
  %1135 = vmatprep.subr.mxu0 0.0
  %1136 = vmatpush1.msra.mxu0 0.0
  %1137 = vmatprep.subr.mxu0 0.0
  %1138 = vmatpush1.msra.mxu0 0.0
  %1139 = vmatprep.subr.mxu0 0.0
  %1140 = vmatpush1.msra.mxu0 0.0
  %1141 = vmatprep.subr.mxu0 0.0
  %1142 = vmatpush1.msra.mxu0 0.0
  %1143 = vmatprep.subr.mxu0 0.0
  %1144 = vmatpush1.msra.mxu0 0.0
  %1145 = vmatprep.subr.mxu0 0.0
  %1146 = vmatpush1.msra.mxu0 0.0
  %1147 = vmatprep.subr.mxu0 0.0
  %1148 = vmatpush1.msra.mxu0 0.0
  %1149 = vmatprep.subr.mxu0 0.0
  %1150 = vmatpush1.msra.mxu0 0.0
  %1151 = vmatprep.subr.mxu0 0.0
  %1152 = vmatpush1.msra.mxu0 0.0
  %1153 = vmatprep.subr.mxu0 0.0
  %1154 = vmatpush1.msra.mxu0 0.0
  %1155 = vmatprep.subr.mxu0 0.0
  %1156 = vmatpush1.msra.mxu0 %v1122
  %1157 = vmatprep.subr.mxu0 0.0
  %1158 = vmatpush1.msra.mxu0 %v1121
  %1159 = vmatprep.subr.mxu0 0.0
  %1160 = vmatpush1.msra.mxu0 %v1120
  %1161 = vmatprep.subr.mxu0 0.0
  %1162 = vmatpush1.msra.mxu0 %v1119
  %1163 = vmatprep.subr.mxu0 0.0
  %1164 = vmatpush2.msra.mxu0 0.0
  %1165 = vmatprep.subr.mxu0 0.0
  %1166 = vmatpush2.msra.mxu0 0.0
  %1167 = vmatprep.subr.mxu0 0.0
  %1168 = vmatpush2.msra.mxu0 0.0
  %1169 = vmatprep.subr.mxu0 0.0
  %1170 = vmatpush2.msra.mxu0 0.0
  %1171 = vmatprep.subr.mxu0 0.0
  %1172 = vmatpush2.msra.mxu0 0.0
  %1173 = vmatprep.subr.mxu0 0.0
  %1174 = vmatpush2.msra.mxu0 0.0
  %1175 = vmatprep.subr.mxu0 0.0
  %1176 = vmatpush2.msra.mxu0 0.0
  %1177 = vmatprep.subr.mxu0 0.0
  %1178 = vmatpush2.msra.mxu0 0.0
  %1179 = vmatprep.subr.mxu0 0.0
  %1180 = vmatpush2.msra.mxu0 0.0
  %1181 = vmatprep.subr.mxu0 0.0
  %1182 = vmatpush2.msra.mxu0 0.0
  %1183 = vmatprep.subr.mxu0 0.0
  %1184 = vmatpush2.msra.mxu0 0.0
  %1185 = vmatprep.subr.mxu0 0.0
  %1186 = vmatpush2.msra.mxu0 0.0
  %1187 = vmatprep.subr.mxu0 0.0
  %1188 = vmatpush2.msra.mxu0 0.0
  %1189 = vmatprep.subr.mxu0 0.0
  %1190 = vmatpush2.msra.mxu0 0.0
  %1191 = vmatprep.subr.mxu0 0.0
  %1192 = vmatpush2.msra.mxu0 0.0
  %1193 = vmatprep.subr.mxu0 0.0
  %1194 = vmatpush2.msra.mxu0 0.0
  %1195 = vmatprep.mubr.f32.mxu0 0.0
  %1196 = vmatmul.mubr.f32.gmra.mxu0 %v619
  %v1197 = vpop.f32.mrf.mxu0
  %v1198 = vadd.f32 %v1129, %v1197
  %v1199 = vpop.f32.mrf.mxu0
  %1200 = vmatprep.mubr.f32.mxu0 0.0
  %1201 = vmatmul.mubr.f32.gmra.mxu0 %v622
  %v1202 = vpop.f32.mrf.mxu0
  %v1203 = vadd.f32 %v1129, %v1202
  %v1204 = vpop.f32.mrf.mxu0
  %1205 = vmatprep.mubr.f32.mxu0 0.0
  %1206 = vmatmul.mubr.f32.gmra.mxu0 %v625
  %v1207 = vpop.f32.mrf.mxu0
  %v1208 = vadd.f32 %v1129, %v1207
  %v1209 = vpop.f32.mrf.mxu0
  %1210 = vdwg.mxu0
  %s1211 = scalar_lea.vmem %s21, 32
  %v1212 = vld [vmem:[%s1211] sm:$0xff]
  %v1213 = vld [vmem:[%s1211 + $0x8] sm:$0xff]
  %v1214 = vld [vmem:[%s1211 + $0x10] sm:$0xff]
  %v1215 = vld [vmem:[%s1211 + $0x18] sm:$0xff]
  %s1216 = scalar_lea.vmem %s23, 1
  %v1217 = vld [vmem:[%s1216] sm:$0x1]
  %v1219 = vlaneseq
  %v1220 = vshrl.u32 %v1219, 7
  %v1221 = vsub.s32 0, %v1220
  %v1222 = vrot.slane %v1217, %v1221
  %1224 = vmatprep.subr.mxu0 0.0
  %1225 = vmatpush1.msra.mxu0 0.0
  %1226 = vmatprep.subr.mxu0 0.0
  %1227 = vmatpush1.msra.mxu0 0.0
  %1228 = vmatprep.subr.mxu0 0.0
  %1229 = vmatpush1.msra.mxu0 0.0
  %1230 = vmatprep.subr.mxu0 0.0
  %1231 = vmatpush1.msra.mxu0 0.0
  %1232 = vmatprep.subr.mxu0 0.0
  %1233 = vmatpush1.msra.mxu0 0.0
  %1234 = vmatprep.subr.mxu0 0.0
  %1235 = vmatpush1.msra.mxu0 0.0
  %1236 = vmatprep.subr.mxu0 0.0
  %1237 = vmatpush1.msra.mxu0 0.0
  %1238 = vmatprep.subr.mxu0 0.0
  %1239 = vmatpush1.msra.mxu0 0.0
  %1240 = vmatprep.subr.mxu0 0.0
  %1241 = vmatpush1.msra.mxu0 0.0
  %1242 = vmatprep.subr.mxu0 0.0
  %1243 = vmatpush1.msra.mxu0 0.0
  %1244 = vmatprep.subr.mxu0 0.0
  %1245 = vmatpush1.msra.mxu0 0.0
  %1246 = vmatprep.subr.mxu0 0.0
  %1247 = vmatpush1.msra.mxu0 0.0
  %1248 = vmatprep.subr.mxu0 0.0
  %1249 = vmatpush1.msra.mxu0 %v1215
  %1250 = vmatprep.subr.mxu0 0.0
  %1251 = vmatpush1.msra.mxu0 %v1214
  %1252 = vmatprep.subr.mxu0 0.0
  %1253 = vmatpush1.msra.mxu0 %v1213
  %1254 = vmatprep.subr.mxu0 0.0
  %1255 = vmatpush1.msra.mxu0 %v1212
  %1256 = vmatprep.subr.mxu0 0.0
  %1257 = vmatpush2.msra.mxu0 0.0
  %1258 = vmatprep.subr.mxu0 0.0
  %1259 = vmatpush2.msra.mxu0 0.0
  %1260 = vmatprep.subr.mxu0 0.0
  %1261 = vmatpush2.msra.mxu0 0.0
  %1262 = vmatprep.subr.mxu0 0.0
  %1263 = vmatpush2.msra.mxu0 0.0
  %1264 = vmatprep.subr.mxu0 0.0
  %1265 = vmatpush2.msra.mxu0 0.0
  %1266 = vmatprep.subr.mxu0 0.0
  %1267 = vmatpush2.msra.mxu0 0.0
  %1268 = vmatprep.subr.mxu0 0.0
  %1269 = vmatpush2.msra.mxu0 0.0
  %1270 = vmatprep.subr.mxu0 0.0
  %1271 = vmatpush2.msra.mxu0 0.0
  %1272 = vmatprep.subr.mxu0 0.0
  %1273 = vmatpush2.msra.mxu0 0.0
  %1274 = vmatprep.subr.mxu0 0.0
  %1275 = vmatpush2.msra.mxu0 0.0
  %1276 = vmatprep.subr.mxu0 0.0
  %1277 = vmatpush2.msra.mxu0 0.0
  %1278 = vmatprep.subr.mxu0 0.0
  %1279 = vmatpush2.msra.mxu0 0.0
  %1280 = vmatprep.subr.mxu0 0.0
  %1281 = vmatpush2.msra.mxu0 0.0
  %1282 = vmatprep.subr.mxu0 0.0
  %1283 = vmatpush2.msra.mxu0 0.0
  %1284 = vmatprep.subr.mxu0 0.0
  %1285 = vmatpush2.msra.mxu0 0.0
  %1286 = vmatprep.subr.mxu0 0.0
  %1287 = vmatpush2.msra.mxu0 0.0
  %1288 = vmatprep.mubr.f32.mxu0 0.0
  %1289 = vmatmul.mubr.f32.gmra.mxu0 %v619
  %v1290 = vpop.f32.mrf.mxu0
  %v1291 = vadd.f32 %v1222, %v1290
  %v1292 = vpop.f32.mrf.mxu0
  %1293 = vmatprep.mubr.f32.mxu0 0.0
  %1294 = vmatmul.mubr.f32.gmra.mxu0 %v622
  %v1295 = vpop.f32.mrf.mxu0
  %v1296 = vadd.f32 %v1222, %v1295
  %v1297 = vpop.f32.mrf.mxu0
  %1298 = vmatprep.mubr.f32.mxu0 0.0
  %1299 = vmatmul.mubr.f32.gmra.mxu0 %v625
  %v1300 = vpop.f32.mrf.mxu0
  %v1301 = vadd.f32 %v1222, %v1300
  %v1302 = vpop.f32.mrf.mxu0
  %1303 = vdwg.mxu0
  %s1304 = scalar_lea.vmem %s25, 32
  %v1305 = vld [vmem:[%s1304] sm:$0xff]
  %v1306 = vld [vmem:[%s1304 + $0x8] sm:$0xff]
  %v1307 = vld [vmem:[%s1304 + $0x10] sm:$0xff]
  %v1308 = vld [vmem:[%s1304 + $0x18] sm:$0xff]
  %s1309 = scalar_lea.vmem %s27, 1
  %v1310 = vld [vmem:[%s1309] sm:$0x1]
  %v1312 = vlaneseq
  %v1313 = vshrl.u32 %v1312, 7
  %v1314 = vsub.s32 0, %v1313
  %v1315 = vrot.slane %v1310, %v1314
  %1317 = vmatprep.subr.mxu0 0.0
  %1318 = vmatpush1.msra.mxu0 0.0
  %1319 = vmatprep.subr.mxu0 0.0
  %1320 = vmatpush1.msra.mxu0 0.0
  %1321 = vmatprep.subr.mxu0 0.0
  %1322 = vmatpush1.msra.mxu0 0.0
  %1323 = vmatprep.subr.mxu0 0.0
  %1324 = vmatpush1.msra.mxu0 0.0
  %1325 = vmatprep.subr.mxu0 0.0
  %1326 = vmatpush1.msra.mxu0 0.0
  %1327 = vmatprep.subr.mxu0 0.0
  %1328 = vmatpush1.msra.mxu0 0.0
  %1329 = vmatprep.subr.mxu0 0.0
  %1330 = vmatpush1.msra.mxu0 0.0
  %1331 = vmatprep.subr.mxu0 0.0
  %1332 = vmatpush1.msra.mxu0 0.0
  %1333 = vmatprep.subr.mxu0 0.0
  %1334 = vmatpush1.msra.mxu0 0.0
  %1335 = vmatprep.subr.mxu0 0.0
  %1336 = vmatpush1.msra.mxu0 0.0
  %1337 = vmatprep.subr.mxu0 0.0
  %1338 = vmatpush1.msra.mxu0 0.0
  %1339 = vmatprep.subr.mxu0 0.0
  %1340 = vmatpush1.msra.mxu0 0.0
  %1341 = vmatprep.subr.mxu0 0.0
  %1342 = vmatpush1.msra.mxu0 %v1308
  %1343 = vmatprep.subr.mxu0 0.0
  %1344 = vmatpush1.msra.mxu0 %v1307
  %1345 = vmatprep.subr.mxu0 0.0
  %1346 = vmatpush1.msra.mxu0 %v1306
  %1347 = vmatprep.subr.mxu0 0.0
  %1348 = vmatpush1.msra.mxu0 %v1305
  %1349 = vmatprep.subr.mxu0 0.0
  %1350 = vmatpush2.msra.mxu0 0.0
  %1351 = vmatprep.subr.mxu0 0.0
  %1352 = vmatpush2.msra.mxu0 0.0
  %1353 = vmatprep.subr.mxu0 0.0
  %1354 = vmatpush2.msra.mxu0 0.0
  %1355 = vmatprep.subr.mxu0 0.0
  %1356 = vmatpush2.msra.mxu0 0.0
  %1357 = vmatprep.subr.mxu0 0.0
  %1358 = vmatpush2.msra.mxu0 0.0
  %1359 = vmatprep.subr.mxu0 0.0
  %1360 = vmatpush2.msra.mxu0 0.0
  %1361 = vmatprep.subr.mxu0 0.0
  %1362 = vmatpush2.msra.mxu0 0.0
  %1363 = vmatprep.subr.mxu0 0.0
  %1364 = vmatpush2.msra.mxu0 0.0
  %1365 = vmatprep.subr.mxu0 0.0
  %1366 = vmatpush2.msra.mxu0 0.0
  %1367 = vmatprep.subr.mxu0 0.0
  %1368 = vmatpush2.msra.mxu0 0.0
  %1369 = vmatprep.subr.mxu0 0.0
  %1370 = vmatpush2.msra.mxu0 0.0
  %1371 = vmatprep.subr.mxu0 0.0
  %1372 = vmatpush2.msra.mxu0 0.0
  %1373 = vmatprep.subr.mxu0 0.0
  %1374 = vmatpush2.msra.mxu0 0.0
  %1375 = vmatprep.subr.mxu0 0.0
  %1376 = vmatpush2.msra.mxu0 0.0
  %1377 = vmatprep.subr.mxu0 0.0
  %1378 = vmatpush2.msra.mxu0 0.0
  %1379 = vmatprep.subr.mxu0 0.0
  %1380 = vmatpush2.msra.mxu0 0.0
  %1381 = vmatprep.mubr.f32.mxu0 0.0
  %1382 = vmatmul.mubr.f32.gmra.mxu0 %v619
  %v1383 = vpop.f32.mrf.mxu0
  %v1384 = vadd.f32 %v1315, %v1383
  %v1385 = vpop.f32.mrf.mxu0
  %1386 = vmatprep.mubr.f32.mxu0 0.0
  %1387 = vmatmul.mubr.f32.gmra.mxu0 %v622
  %v1388 = vpop.f32.mrf.mxu0
  %v1389 = vadd.f32 %v1315, %v1388
  %v1390 = vpop.f32.mrf.mxu0
  %1391 = vmatprep.mubr.f32.mxu0 0.0
  %1392 = vmatmul.mubr.f32.gmra.mxu0 %v625
  %v1393 = vpop.f32.mrf.mxu0
  %v1394 = vadd.f32 %v1315, %v1393
  %v1395 = vpop.f32.mrf.mxu0
  %1396 = vdwg.mxu0
  %v1398 = vsel %vm889, %v1198, 0
  %v1401 = vsel %vm889, %v1203, 0
  %v1404 = vsel %vm889, %v1208, 0
  %v1407 = vsel %vm889, %v1291, 0
  %v1410 = vsel %vm889, %v1296, 0
  %v1413 = vsel %vm889, %v1301, 0
  %1415 = vmatprep.subr.mxu0 0.0
  %1416 = vmatpush1.xpose.msra.mxu0 0.0
  %1417 = vmatprep.subr.mxu0 0.0
  %1418 = vmatpush1.xpose.msra.mxu0 0.0
  %1419 = vmatprep.subr.mxu0 0.0
  %1420 = vmatpush1.xpose.msra.mxu0 0.0
  %1421 = vmatprep.subr.mxu0 0.0
  %1422 = vmatpush1.xpose.msra.mxu0 0.0
  %1423 = vmatprep.subr.mxu0 0.0
  %1424 = vmatpush1.xpose.msra.mxu0 0.0
  %1425 = vmatprep.subr.mxu0 0.0
  %1426 = vmatpush1.xpose.msra.mxu0 0.0
  %1427 = vmatprep.subr.mxu0 0.0
  %1428 = vmatpush1.xpose.msra.mxu0 0.0
  %1429 = vmatprep.subr.mxu0 0.0
  %1430 = vmatpush1.xpose.msra.mxu0 0.0
  %1431 = vmatprep.subr.mxu0 0.0
  %1432 = vmatpush1.xpose.msra.mxu0 0.0
  %1433 = vmatprep.subr.mxu0 0.0
  %1434 = vmatpush1.xpose.msra.mxu0 0.0
  %1435 = vmatprep.subr.mxu0 0.0
  %1436 = vmatpush1.xpose.msra.mxu0 0.0
  %1437 = vmatprep.subr.mxu0 0.0
  %1438 = vmatpush1.xpose.msra.mxu0 0.0
  %1439 = vmatprep.subr.mxu0 0.0
  %1440 = vmatpush1.xpose.msra.mxu0 0.0
  %1441 = vmatprep.subr.mxu0 0.0
  %1442 = vmatpush1.xpose.msra.mxu0 %v1413
  %1443 = vmatprep.subr.mxu0 0.0
  %1444 = vmatpush1.xpose.msra.mxu0 %v1410
  %1445 = vmatprep.subr.mxu0 0.0
  %1446 = vmatpush1.xpose.msra.mxu0 %v1407
  %1447 = vmatprep.subr.mxu0 0.0
  %1448 = vmatpush2.xpose.msra.mxu0 0.0
  %1449 = vmatprep.subr.mxu0 0.0
  %1450 = vmatpush2.xpose.msra.mxu0 0.0
  %1451 = vmatprep.subr.mxu0 0.0
  %1452 = vmatpush2.xpose.msra.mxu0 0.0
  %1453 = vmatprep.subr.mxu0 0.0
  %1454 = vmatpush2.xpose.msra.mxu0 0.0
  %1455 = vmatprep.subr.mxu0 0.0
  %1456 = vmatpush2.xpose.msra.mxu0 0.0
  %1457 = vmatprep.subr.mxu0 0.0
  %1458 = vmatpush2.xpose.msra.mxu0 0.0
  %1459 = vmatprep.subr.mxu0 0.0
  %1460 = vmatpush2.xpose.msra.mxu0 0.0
  %1461 = vmatprep.subr.mxu0 0.0
  %1462 = vmatpush2.xpose.msra.mxu0 0.0
  %1463 = vmatprep.subr.mxu0 0.0
  %1464 = vmatpush2.xpose.msra.mxu0 0.0
  %1465 = vmatprep.subr.mxu0 0.0
  %1466 = vmatpush2.xpose.msra.mxu0 0.0
  %1467 = vmatprep.subr.mxu0 0.0
  %1468 = vmatpush2.xpose.msra.mxu0 0.0
  %1469 = vmatprep.subr.mxu0 0.0
  %1470 = vmatpush2.xpose.msra.mxu0 0.0
  %1471 = vmatprep.subr.mxu0 0.0
  %1472 = vmatpush2.xpose.msra.mxu0 0.0
  %1473 = vmatprep.subr.mxu0 0.0
  %1474 = vmatpush2.xpose.msra.mxu0 0.0
  %1475 = vmatprep.subr.mxu0 0.0
  %1476 = vmatpush2.xpose.msra.mxu0 0.0
  %1477 = vmatprep.subr.mxu0 0.0
  %1478 = vmatpush2.xpose.msra.mxu0 0.0
  %1479 = vmatprep.mubr.f32.mxu0 0.0
  %1480 = vmatmul.mubr.f32.gmra.mxu0 %v1398
  %v1481 = vpop.f32.mrf.mxu0
  %v1482 = vadd.f32 0.0, %v1481
  %v1483 = vpop.f32.mrf.mxu0
  %1484 = vmatprep.mubr.f32.mxu0 0.0
  %1485 = vmatmul.mubr.f32.gmra.mxu0 %v1401
  %v1486 = vpop.f32.mrf.mxu0
  %v1487 = vadd.f32 0.0, %v1486
  %v1488 = vpop.f32.mrf.mxu0
  %1489 = vmatprep.mubr.f32.mxu0 0.0
  %1490 = vmatmul.mubr.f32.gmra.mxu0 %v1404
  %v1491 = vpop.f32.mrf.mxu0
  %v1492 = vadd.f32 0.0, %v1491
  %v1493 = vpop.f32.mrf.mxu0
  %1494 = vdwg.mxu0
  %v1495 = vmul.f32 %v1482, 0.25
  %v1496 = vmul.f32 %v1487, 0.25
  %v1497 = vmul.f32 %v1492, 0.25
  %v1498 = vadd.f32 %v1495, %v604
  %v1499 = vadd.f32 %v1496, %v605
  %v1500 = vadd.f32 %v1497, %v606
  %v1501 = vsel %vm343, %v1498, -inf
  %1502 = vmax.xlane.f32.xlu0 %v1501
  %v1503 = vpop.xlane.xlu0 %1502
  %v1504 = vsel %vm343, %v1499, -inf
  %1505 = vmax.xlane.f32.xlu0 %v1504
  %v1506 = vpop.xlane.xlu0 %1505
  %v1507 = vsel %vm343, %v1500, -inf
  %1508 = vmax.xlane.f32.xlu0 %v1507
  %v1509 = vpop.xlane.xlu0 %1508
  %v1510 = vsub.f32 %v1498, %v1503
  %v1511 = vsub.f32 %v1499, %v1506
  %v1512 = vsub.f32 %v1500, %v1509
  %v1513 = vmul.f32 %v1510, 1.442695
  %v1514 = vpow.pop %v1513
  %v1515 = vmul.f32 %v1511, 1.442695
  %v1516 = vpow.pop %v1515
  %v1517 = vmul.f32 %v1512, 1.442695
  %v1518 = vpow.pop %v1517
  %v1519 = vsel %vm343, %v1514, 0.0
  %1520 = vadd.xlane.f32.xlu0 %v1519
  %v1521 = vpop.xlane.xlu0 %1520
  %v1522 = vsel %vm343, %v1516, 0.0
  %1523 = vadd.xlane.f32.xlu0 %v1522
  %v1524 = vpop.xlane.xlu0 %1523
  %v1525 = vsel %vm343, %v1518, 0.0
  %1526 = vadd.xlane.f32.xlu0 %v1525
  %v1527 = vpop.xlane.xlu0 %1526
  %v1528 = vrcp.pop %v1521
  %v1529 = vrcp.pop %v1524
  %v1530 = vrcp.pop %v1527
  %v1531 = vmul.f32 %v1514, %v1528
  %v1532 = vmul.f32 %v1516, %v1529
  %v1533 = vmul.f32 %v1518, %v1530
  %v1535 = vsel %vm343, %v1531, 0
  %v1538 = vsel %vm343, %v1532, 0
  %v1541 = vsel %vm343, %v1533, 0
  %1543 = vmatprep.subr.mxu0 0.0
  %1544 = vmatpush1.msra.mxu0 0.0
  %1545 = vmatprep.subr.mxu0 0.0
  %1546 = vmatpush1.msra.mxu0 0.0
  %1547 = vmatprep.subr.mxu0 0.0
  %1548 = vmatpush1.msra.mxu0 0.0
  %1549 = vmatprep.subr.mxu0 0.0
  %1550 = vmatpush1.msra.mxu0 0.0
  %1551 = vmatprep.subr.mxu0 0.0
  %1552 = vmatpush1.msra.mxu0 0.0
  %1553 = vmatprep.subr.mxu0 0.0
  %1554 = vmatpush1.msra.mxu0 0.0
  %1555 = vmatprep.subr.mxu0 0.0
  %1556 = vmatpush1.msra.mxu0 0.0
  %1557 = vmatprep.subr.mxu0 0.0
  %1558 = vmatpush1.msra.mxu0 0.0
  %1559 = vmatprep.subr.mxu0 0.0
  %1560 = vmatpush1.msra.mxu0 0.0
  %1561 = vmatprep.subr.mxu0 0.0
  %1562 = vmatpush1.msra.mxu0 0.0
  %1563 = vmatprep.subr.mxu0 0.0
  %1564 = vmatpush1.msra.mxu0 0.0
  %1565 = vmatprep.subr.mxu0 0.0
  %1566 = vmatpush1.msra.mxu0 0.0
  %1567 = vmatprep.subr.mxu0 0.0
  %1568 = vmatpush1.msra.mxu0 0.0
  %1569 = vmatprep.subr.mxu0 0.0
  %1570 = vmatpush1.msra.mxu0 %v1394
  %1571 = vmatprep.subr.mxu0 0.0
  %1572 = vmatpush1.msra.mxu0 %v1389
  %1573 = vmatprep.subr.mxu0 0.0
  %1574 = vmatpush1.msra.mxu0 %v1384
  %1575 = vmatprep.subr.mxu0 0.0
  %1576 = vmatpush2.msra.mxu0 0.0
  %1577 = vmatprep.subr.mxu0 0.0
  %1578 = vmatpush2.msra.mxu0 0.0
  %1579 = vmatprep.subr.mxu0 0.0
  %1580 = vmatpush2.msra.mxu0 0.0
  %1581 = vmatprep.subr.mxu0 0.0
  %1582 = vmatpush2.msra.mxu0 0.0
  %1583 = vmatprep.subr.mxu0 0.0
  %1584 = vmatpush2.msra.mxu0 0.0
  %1585 = vmatprep.subr.mxu0 0.0
  %1586 = vmatpush2.msra.mxu0 0.0
  %1587 = vmatprep.subr.mxu0 0.0
  %1588 = vmatpush2.msra.mxu0 0.0
  %1589 = vmatprep.subr.mxu0 0.0
  %1590 = vmatpush2.msra.mxu0 0.0
  %1591 = vmatprep.subr.mxu0 0.0
  %1592 = vmatpush2.msra.mxu0 0.0
  %1593 = vmatprep.subr.mxu0 0.0
  %1594 = vmatpush2.msra.mxu0 0.0
  %1595 = vmatprep.subr.mxu0 0.0
  %1596 = vmatpush2.msra.mxu0 0.0
  %1597 = vmatprep.subr.mxu0 0.0
  %1598 = vmatpush2.msra.mxu0 0.0
  %1599 = vmatprep.subr.mxu0 0.0
  %1600 = vmatpush2.msra.mxu0 0.0
  %1601 = vmatprep.subr.mxu0 0.0
  %1602 = vmatpush2.msra.mxu0 0.0
  %1603 = vmatprep.subr.mxu0 0.0
  %1604 = vmatpush2.msra.mxu0 0.0
  %1605 = vmatprep.subr.mxu0 0.0
  %1606 = vmatpush2.msra.mxu0 0.0
  %1607 = vmatprep.mubr.f32.mxu0 0.0
  %1608 = vmatmul.mubr.f32.gmra.mxu0 %v1535
  %v1609 = vpop.f32.mrf.mxu0
  %v1610 = vadd.f32 0.0, %v1609
  %v1611 = vpop.f32.mrf.mxu0
  %1612 = vmatprep.mubr.f32.mxu0 0.0
  %1613 = vmatmul.mubr.f32.gmra.mxu0 %v1538
  %v1614 = vpop.f32.mrf.mxu0
  %v1615 = vadd.f32 0.0, %v1614
  %v1616 = vpop.f32.mrf.mxu0
  %1617 = vmatprep.mubr.f32.mxu0 0.0
  %1618 = vmatmul.mubr.f32.gmra.mxu0 %v1541
  %v1619 = vpop.f32.mrf.mxu0
  %v1620 = vadd.f32 0.0, %v1619
  %v1621 = vpop.f32.mrf.mxu0
  %1622 = vdwg.mxu0
  %s1623 = scalar_lea.vmem %s29, 16
  %v1624 = vld [vmem:[%s1623] sm:$0xff]
  %v1625 = vld [vmem:[%s1623 + $0x8] sm:$0xff]
  %v1627 = vsel %vm889, %v1610, 0
  %v1630 = vsel %vm889, %v1615, 0
  %v1633 = vsel %vm889, %v1620, 0
  %1635 = vmatprep.subr.mxu0 0.0
  %1636 = vmatpush1.msra.mxu0 0.0
  %1637 = vmatprep.subr.mxu0 0.0
  %1638 = vmatpush1.msra.mxu0 0.0
  %1639 = vmatprep.subr.mxu0 0.0
  %1640 = vmatpush1.msra.mxu0 0.0
  %1641 = vmatprep.subr.mxu0 0.0
  %1642 = vmatpush1.msra.mxu0 0.0
  %1643 = vmatprep.subr.mxu0 0.0
  %1644 = vmatpush1.msra.mxu0 0.0
  %1645 = vmatprep.subr.mxu0 0.0
  %1646 = vmatpush1.msra.mxu0 0.0
  %1647 = vmatprep.subr.mxu0 0.0
  %1648 = vmatpush1.msra.mxu0 0.0
  %1649 = vmatprep.subr.mxu0 0.0
  %1650 = vmatpush1.msra.mxu0 0.0
  %1651 = vmatprep.subr.mxu0 0.0
  %1652 = vmatpush1.msra.mxu0 0.0
  %1653 = vmatprep.subr.mxu0 0.0
  %1654 = vmatpush1.msra.mxu0 0.0
  %1655 = vmatprep.subr.mxu0 0.0
  %1656 = vmatpush1.msra.mxu0 0.0
  %1657 = vmatprep.subr.mxu0 0.0
  %1658 = vmatpush1.msra.mxu0 0.0
  %1659 = vmatprep.subr.mxu0 0.0
  %1660 = vmatpush1.msra.mxu0 0.0
  %1661 = vmatprep.subr.mxu0 0.0
  %1662 = vmatpush1.msra.mxu0 0.0
  %1663 = vmatprep.subr.mxu0 0.0
  %1664 = vmatpush1.msra.mxu0 %v1625
  %1665 = vmatprep.subr.mxu0 0.0
  %1666 = vmatpush1.msra.mxu0 %v1624
  %1667 = vmatprep.subr.mxu0 0.0
  %1668 = vmatpush2.msra.mxu0 0.0
  %1669 = vmatprep.subr.mxu0 0.0
  %1670 = vmatpush2.msra.mxu0 0.0
  %1671 = vmatprep.subr.mxu0 0.0
  %1672 = vmatpush2.msra.mxu0 0.0
  %1673 = vmatprep.subr.mxu0 0.0
  %1674 = vmatpush2.msra.mxu0 0.0
  %1675 = vmatprep.subr.mxu0 0.0
  %1676 = vmatpush2.msra.mxu0 0.0
  %1677 = vmatprep.subr.mxu0 0.0
  %1678 = vmatpush2.msra.mxu0 0.0
  %1679 = vmatprep.subr.mxu0 0.0
  %1680 = vmatpush2.msra.mxu0 0.0
  %1681 = vmatprep.subr.mxu0 0.0
  %1682 = vmatpush2.msra.mxu0 0.0
  %1683 = vmatprep.subr.mxu0 0.0
  %1684 = vmatpush2.msra.mxu0 0.0
  %1685 = vmatprep.subr.mxu0 0.0
  %1686 = vmatpush2.msra.mxu0 0.0
  %1687 = vmatprep.subr.mxu0 0.0
  %1688 = vmatpush2.msra.mxu0 0.0
  %1689 = vmatprep.subr.mxu0 0.0
  %1690 = vmatpush2.msra.mxu0 0.0
  %1691 = vmatprep.subr.mxu0 0.0
  %1692 = vmatpush2.msra.mxu0 0.0
  %1693 = vmatprep.subr.mxu0 0.0
  %1694 = vmatpush2.msra.mxu0 0.0
  %1695 = vmatprep.subr.mxu0 0.0
  %1696 = vmatpush2.msra.mxu0 0.0
  %1697 = vmatprep.subr.mxu0 0.0
  %1698 = vmatpush2.msra.mxu0 0.0
  %1699 = vmatprep.mubr.f32.mxu0 0.0
  %1700 = vmatmul.mubr.f32.gmra.mxu0 %v1627
  %v1701 = vpop.f32.mrf.mxu0
  %v1702 = vadd.f32 0.0, %v1701
  %v1703 = vpop.f32.mrf.mxu0
  %1704 = vmatprep.mubr.f32.mxu0 0.0
  %1705 = vmatmul.mubr.f32.gmra.mxu0 %v1630
  %v1706 = vpop.f32.mrf.mxu0
  %v1707 = vadd.f32 0.0, %v1706
  %v1708 = vpop.f32.mrf.mxu0
  %1709 = vmatprep.mubr.f32.mxu0 0.0
  %1710 = vmatmul.mubr.f32.gmra.mxu0 %v1633
  %v1711 = vpop.f32.mrf.mxu0
  %v1712 = vadd.f32 0.0, %v1711
  %v1713 = vpop.f32.mrf.mxu0
  %1714 = vdwg.mxu0
  %v1716 = vsel %vm889, %v1103, 0
  %v1719 = vsel %vm889, %v1108, 0
  %v1722 = vsel %vm889, %v1113, 0
  %1724 = vmatprep.subr.mxu0 0.0
  %1725 = vmatpush1.msra.mxu0 0.0
  %1726 = vmatprep.subr.mxu0 0.0
  %1727 = vmatpush1.msra.mxu0 0.0
  %1728 = vmatprep.subr.mxu0 0.0
  %1729 = vmatpush1.msra.mxu0 0.0
  %1730 = vmatprep.subr.mxu0 0.0
  %1731 = vmatpush1.msra.mxu0 0.0
  %1732 = vmatprep.subr.mxu0 0.0
  %1733 = vmatpush1.msra.mxu0 0.0
  %1734 = vmatprep.subr.mxu0 0.0
  %1735 = vmatpush1.msra.mxu0 0.0
  %1736 = vmatprep.subr.mxu0 0.0
  %1737 = vmatpush1.msra.mxu0 0.0
  %1738 = vmatprep.subr.mxu0 0.0
  %1739 = vmatpush1.msra.mxu0 0.0
  %1740 = vmatprep.subr.mxu0 0.0
  %1741 = vmatpush1.msra.mxu0 0.0
  %1742 = vmatprep.subr.mxu0 0.0
  %1743 = vmatpush1.msra.mxu0 0.0
  %1744 = vmatprep.subr.mxu0 0.0
  %1745 = vmatpush1.msra.mxu0 0.0
  %1746 = vmatprep.subr.mxu0 0.0
  %1747 = vmatpush1.msra.mxu0 0.0
  %1748 = vmatprep.subr.mxu0 0.0
  %1749 = vmatpush1.msra.mxu0 0.0
  %1750 = vmatprep.subr.mxu0 0.0
  %1751 = vmatpush1.msra.mxu0 0.0
  %1752 = vmatprep.subr.mxu0 0.0
  %1753 = vmatpush1.msra.mxu0 %v1117
  %1754 = vmatprep.subr.mxu0 0.0
  %1755 = vmatpush1.msra.mxu0 %v1116
  %1756 = vmatprep.subr.mxu0 0.0
  %1757 = vmatpush2.msra.mxu0 0.0
  %1758 = vmatprep.subr.mxu0 0.0
  %1759 = vmatpush2.msra.mxu0 0.0
  %1760 = vmatprep.subr.mxu0 0.0
  %1761 = vmatpush2.msra.mxu0 0.0
  %1762 = vmatprep.subr.mxu0 0.0
  %1763 = vmatpush2.msra.mxu0 0.0
  %1764 = vmatprep.subr.mxu0 0.0
  %1765 = vmatpush2.msra.mxu0 0.0
  %1766 = vmatprep.subr.mxu0 0.0
  %1767 = vmatpush2.msra.mxu0 0.0
  %1768 = vmatprep.subr.mxu0 0.0
  %1769 = vmatpush2.msra.mxu0 0.0
  %1770 = vmatprep.subr.mxu0 0.0
  %1771 = vmatpush2.msra.mxu0 0.0
  %1772 = vmatprep.subr.mxu0 0.0
  %1773 = vmatpush2.msra.mxu0 0.0
  %1774 = vmatprep.subr.mxu0 0.0
  %1775 = vmatpush2.msra.mxu0 0.0
  %1776 = vmatprep.subr.mxu0 0.0
  %1777 = vmatpush2.msra.mxu0 0.0
  %1778 = vmatprep.subr.mxu0 0.0
  %1779 = vmatpush2.msra.mxu0 0.0
  %1780 = vmatprep.subr.mxu0 0.0
  %1781 = vmatpush2.msra.mxu0 0.0
  %1782 = vmatprep.subr.mxu0 0.0
  %1783 = vmatpush2.msra.mxu0 0.0
  %1784 = vmatprep.subr.mxu0 0.0
  %1785 = vmatpush2.msra.mxu0 0.0
  %1786 = vmatprep.subr.mxu0 0.0
  %1787 = vmatpush2.msra.mxu0 0.0
  %1788 = vmatprep.mubr.f32.mxu0 0.0
  %1789 = vmatmul.mubr.f32.gmra.mxu0 %v1716
  %v1790 = vpop.f32.mrf.mxu0
  %v1791 = vadd.f32 %v1702, %v1790
  %v1792 = vpop.f32.mrf.mxu0
  %1793 = vmatprep.mubr.f32.mxu0 0.0
  %1794 = vmatmul.mubr.f32.gmra.mxu0 %v1719
  %v1795 = vpop.f32.mrf.mxu0
  %v1796 = vadd.f32 %v1707, %v1795
  %v1797 = vpop.f32.mrf.mxu0
  %1798 = vmatprep.mubr.f32.mxu0 0.0
  %1799 = vmatmul.mubr.f32.gmra.mxu0 %v1722
  %v1800 = vpop.f32.mrf.mxu0
  %v1801 = vadd.f32 %v1712, %v1800
  %v1802 = vpop.f32.mrf.mxu0
  %1803 = vdwg.mxu0
  %v1804 = vadd.f32 %v601, %v1791
  %v1805 = vadd.f32 %v602, %v1796
  %v1806 = vadd.f32 %v603, %v1801
  %v1807 = vld [vmem:[%s31] sm:$0x1]
  %v1809 = vlaneseq
  %v1810 = vshrl.u32 %v1809, 7
  %v1811 = vsub.s32 0, %v1810
  %v1812 = vrot.slane %v1807, %v1811
  %v1814 = vadd.f32 %v1804, %v1812
  %v1815 = vadd.f32 %v1805, %v1812
  %v1816 = vadd.f32 %v1806, %v1812
  %v1817 = vsel %vm516, %v1814, 0.0
  %1818 = vadd.xlane.f32.xlu0 %v1817
  %v1819 = vpop.xlane.xlu0 %1818
  %v1820 = vsel %vm516, %v1815, 0.0
  %1821 = vadd.xlane.f32.xlu0 %v1820
  %v1822 = vpop.xlane.xlu0 %1821
  %v1823 = vsel %vm516, %v1816, 0.0
  %1824 = vadd.xlane.f32.xlu0 %v1823
  %v1825 = vpop.xlane.xlu0 %1824
  %v1826 = vrcp.pop 32.0
  %v1827 = vmul.f32 %v1819, %v1826
  %v1828 = vmul.f32 %v1822, %v1826
  %v1829 = vmul.f32 %v1825, %v1826
  %v1830 = vsub.f32 %v1814, %v1827
  %v1831 = vsub.f32 %v1815, %v1828
  %v1832 = vsub.f32 %v1816, %v1829
  %v1833 = vld [vmem:[%s35] sm:$0x1]
  %v1835 = vlaneseq
  %v1836 = vshrl.u32 %v1835, 7
  %v1837 = vsub.s32 0, %v1836
  %v1838 = vrot.slane %v1833, %v1837
  %v1840 = vmul.f32 %v1838, %v1830
  %v1841 = vmul.f32 %v1838, %v1831
  %v1842 = vmul.f32 %v1838, %v1832
  %v1843 = vmul.f32 %v1830, %v1830
  %v1844 = vmul.f32 %v1831, %v1831
  %v1845 = vmul.f32 %v1832, %v1832
  %v1846 = vsel %vm516, %v1843, 0.0
  %1847 = vadd.xlane.f32.xlu0 %v1846
  %v1848 = vpop.xlane.xlu0 %1847
  %v1849 = vsel %vm516, %v1844, 0.0
  %1850 = vadd.xlane.f32.xlu0 %v1849
  %v1851 = vpop.xlane.xlu0 %1850
  %v1852 = vsel %vm516, %v1845, 0.0
  %1853 = vadd.xlane.f32.xlu0 %v1852
  %v1854 = vpop.xlane.xlu0 %1853
  %v1855 = vmul.f32 %v1848, %v1826
  %v1856 = vmul.f32 %v1851, %v1826
  %v1857 = vmul.f32 %v1854, %v1826
  %v1858 = vadd.f32 %v1855, 1e-05
  %v1859 = vadd.f32 %v1856, 1e-05
  %v1860 = vadd.f32 %v1857, 1e-05
  %v1861 = vrsqrt.pop %v1858
  %v1862 = vrsqrt.pop %v1859
  %v1863 = vrsqrt.pop %v1860
  %v1864 = vmul.f32 %v1840, %v1861
  %v1865 = vmul.f32 %v1841, %v1862
  %v1866 = vmul.f32 %v1842, %v1863
  %v1867 = vld [vmem:[%s37] sm:$0x1]
  %v1869 = vlaneseq
  %v1870 = vshrl.u32 %v1869, 7
  %v1871 = vsub.s32 0, %v1870
  %v1872 = vrot.slane %v1867, %v1871
  %v1874 = vadd.f32 %v1864, %v1872
  %v1875 = vadd.f32 %v1865, %v1872
  %v1876 = vadd.f32 %v1866, %v1872
  %v1877 = vpack.c.bf16 %v1875, %v1874
  %v1878 = vpack.c.bf16 %v1876, %v1876
  %v1879 = vld [vmem:[%s39] sm:$0xff]
  %v1880 = vld [vmem:[%s39 + $0x8] sm:$0xff]
  %v1881 = vld [vmem:[%s39 + $0x10] sm:$0xff]
  %v1882 = vld [vmem:[%s39 + $0x18] sm:$0xff]
  %v1883 = vld [vmem:[%s39 + $0x20] sm:$0xff]
  %v1884 = vld [vmem:[%s39 + $0x28] sm:$0xff]
  %v1885 = vld [vmem:[%s39 + $0x30] sm:$0xff]
  %v1886 = vld [vmem:[%s39 + $0x38] sm:$0xff]
  %v1887 = vld [vmem:[%s39 + $0x40] sm:$0xff]
  %v1888 = vld [vmem:[%s39 + $0x48] sm:$0xff]
  %v1889 = vld [vmem:[%s39 + $0x50] sm:$0xff]
  %v1890 = vld [vmem:[%s39 + $0x58] sm:$0xff]
  %v1891 = vld [vmem:[%s39 + $0x60] sm:$0xff]
  %v1892 = vld [vmem:[%s39 + $0x68] sm:$0xff]
  %v1893 = vld [vmem:[%s39 + $0x70] sm:$0xff]
  %v1894 = vld [vmem:[%s39 + $0x78] sm:$0xff]
  %v1895 = vld [vmem:[%s39 + $0x80] sm:$0xff]
  %v1896 = vld [vmem:[%s39 + $0x88] sm:$0xff]
  %v1897 = vld [vmem:[%s39 + $0x90] sm:$0xff]
  %v1898 = vld [vmem:[%s39 + $0x98] sm:$0xff]
  %v1899 = vld [vmem:[%s39 + $0xa0] sm:$0xff]
  %v1900 = vld [vmem:[%s39 + $0xa8] sm:$0xff]
  %v1901 = vld [vmem:[%s39 + $0xb0] sm:$0xff]
  %v1902 = vld [vmem:[%s39 + $0xb8] sm:$0xff]
  %v1903 = vld [vmem:[%s39 + $0xc0] sm:$0xff]
  %v1904 = vld [vmem:[%s39 + $0xc8] sm:$0xff]
  %v1905 = vld [vmem:[%s39 + $0xd0] sm:$0xff]
  %v1906 = vld [vmem:[%s39 + $0xd8] sm:$0xff]
  %v1907 = vld [vmem:[%s39 + $0xe0] sm:$0xff]
  %v1908 = vld [vmem:[%s39 + $0xe8] sm:$0xff]
  %v1909 = vld [vmem:[%s39 + $0xf0] sm:$0xff]
  %v1910 = vld [vmem:[%s39 + $0xf8] sm:$0xff]
  %v1911 = vld [vmem:[%s41] sm:$0xff]
  %v1912 = vld [vmem:[%s41 + $0x8] sm:$0xff]
  %v1915 = vlaneseq
  %v1916 = vshrl.u32 %v1915, 7
  %v1917 = vsub.s32 0, %v1916
  %v1918 = vrot.slane %v1911, %v1917
  %v1919 = vlaneseq
  %v1920 = vshrl.u32 %v1919, 7
  %v1921 = vsub.s32 1, %v1920
  %v1922 = vrot.slane %v1911, %v1921
  %v1923 = vlaneseq
  %v1924 = vshrl.u32 %v1923, 7
  %v1925 = vsub.s32 2, %v1924
  %v1926 = vrot.slane %v1911, %v1925
  %v1927 = vlaneseq
  %v1928 = vshrl.u32 %v1927, 7
  %v1929 = vsub.s32 3, %v1928
  %v1930 = vrot.slane %v1911, %v1929
  %v1931 = vlaneseq
  %v1932 = vshrl.u32 %v1931, 7
  %v1933 = vsub.s32 4, %v1932
  %v1934 = vrot.slane %v1911, %v1933
  %v1935 = vlaneseq
  %v1936 = vshrl.u32 %v1935, 7
  %v1937 = vsub.s32 5, %v1936
  %v1938 = vrot.slane %v1911, %v1937
  %v1939 = vlaneseq
  %v1940 = vshrl.u32 %v1939, 7
  %v1941 = vsub.s32 6, %v1940
  %v1942 = vrot.slane %v1911, %v1941
  %v1943 = vlaneseq
  %v1944 = vshrl.u32 %v1943, 7
  %v1945 = vsub.s32 7, %v1944
  %v1946 = vrot.slane %v1911, %v1945
  %v1947 = vlaneseq
  %v1948 = vshrl.u32 %v1947, 7
  %v1949 = vsub.s32 0, %v1948
  %v1950 = vrot.slane %v1912, %v1949
  %v1951 = vlaneseq
  %v1952 = vshrl.u32 %v1951, 7
  %v1953 = vsub.s32 1, %v1952
  %v1954 = vrot.slane %v1912, %v1953
  %v1955 = vlaneseq
  %v1956 = vshrl.u32 %v1955, 7
  %v1957 = vsub.s32 2, %v1956
  %v1958 = vrot.slane %v1912, %v1957
  %v1959 = vlaneseq
  %v1960 = vshrl.u32 %v1959, 7
  %v1961 = vsub.s32 3, %v1960
  %v1962 = vrot.slane %v1912, %v1961
  %v1963 = vlaneseq
  %v1964 = vshrl.u32 %v1963, 7
  %v1965 = vsub.s32 4, %v1964
  %v1966 = vrot.slane %v1912, %v1965
  %v1967 = vlaneseq
  %v1968 = vshrl.u32 %v1967, 7
  %v1969 = vsub.s32 5, %v1968
  %v1970 = vrot.slane %v1912, %v1969
  %v1971 = vlaneseq
  %v1972 = vshrl.u32 %v1971, 7
  %v1973 = vsub.s32 6, %v1972
  %v1974 = vrot.slane %v1912, %v1973
  %v1975 = vlaneseq
  %v1976 = vshrl.u32 %v1975, 7
  %v1977 = vsub.s32 7, %v1976
  %v1978 = vrot.slane %v1912, %v1977
  %v2027 = vunpack.c.l.b16 %v1879
  %v2028 = vunpack.c.h.b16 %v1879
  %v2029 = vunpack.c.l.b16 %v1880
  %v2030 = vunpack.c.h.b16 %v1880
  %v2031 = vunpack.c.l.b16 %v1881
  %v2032 = vunpack.c.h.b16 %v1881
  %v2033 = vunpack.c.l.b16 %v1882
  %v2034 = vunpack.c.h.b16 %v1882
  %v2035 = vunpack.c.l.b16 %v1883
  %v2036 = vunpack.c.h.b16 %v1883
  %v2037 = vunpack.c.l.b16 %v1884
  %v2038 = vunpack.c.h.b16 %v1884
  %v2039 = vunpack.c.l.b16 %v1885
  %v2040 = vunpack.c.h.b16 %v1885
  %v2041 = vunpack.c.l.b16 %v1886
  %v2042 = vunpack.c.h.b16 %v1886
  %v2043 = vunpack.c.l.b16 %v1887
  %v2044 = vunpack.c.h.b16 %v1887
  %v2045 = vunpack.c.l.b16 %v1888
  %v2046 = vunpack.c.h.b16 %v1888
  %v2047 = vunpack.c.l.b16 %v1889
  %v2048 = vunpack.c.h.b16 %v1889
  %v2049 = vunpack.c.l.b16 %v1890
  %v2050 = vunpack.c.h.b16 %v1890
  %v2051 = vunpack.c.l.b16 %v1891
  %v2052 = vunpack.c.h.b16 %v1891
  %v2053 = vunpack.c.l.b16 %v1892
  %v2054 = vunpack.c.h.b16 %v1892
  %v2055 = vunpack.c.l.b16 %v1893
  %v2056 = vunpack.c.h.b16 %v1893
  %v2057 = vunpack.c.l.b16 %v1894
  %v2058 = vunpack.c.h.b16 %v1894
  %v2059 = vunpack.c.l.b16 %v1895
  %v2060 = vunpack.c.h.b16 %v1895
  %v2061 = vunpack.c.l.b16 %v1896
  %v2062 = vunpack.c.h.b16 %v1896
  %v2063 = vunpack.c.l.b16 %v1897
  %v2064 = vunpack.c.h.b16 %v1897
  %v2065 = vunpack.c.l.b16 %v1898
  %v2066 = vunpack.c.h.b16 %v1898
  %v2067 = vunpack.c.l.b16 %v1899
  %v2068 = vunpack.c.h.b16 %v1899
  %v2069 = vunpack.c.l.b16 %v1900
  %v2070 = vunpack.c.h.b16 %v1900
  %v2071 = vunpack.c.l.b16 %v1901
  %v2072 = vunpack.c.h.b16 %v1901
  %v2073 = vunpack.c.l.b16 %v1902
  %v2074 = vunpack.c.h.b16 %v1902
  %v2075 = vunpack.c.l.b16 %v1903
  %v2076 = vunpack.c.h.b16 %v1903
  %v2077 = vunpack.c.l.b16 %v1904
  %v2078 = vunpack.c.h.b16 %v1904
  %v2079 = vunpack.c.l.b16 %v1905
  %v2080 = vunpack.c.h.b16 %v1905
  %v2081 = vunpack.c.l.b16 %v1906
  %v2082 = vunpack.c.h.b16 %v1906
  %v2083 = vunpack.c.l.b16 %v1907
  %v2084 = vunpack.c.h.b16 %v1907
  %v2085 = vunpack.c.l.b16 %v1908
  %v2086 = vunpack.c.h.b16 %v1908
  %v2087 = vunpack.c.l.b16 %v1909
  %v2088 = vunpack.c.h.b16 %v1909
  %v2089 = vunpack.c.l.b16 %v1910
  %v2090 = vunpack.c.h.b16 %v1910
  %v2091 = vpack.c.b16 %v2043, %v2027
  %v2092 = vpack.c.b16 %v2044, %v2028
  %v2093 = vpack.c.b16 %v2045, %v2029
  %v2094 = vpack.c.b16 %v2046, %v2030
  %v2095 = vpack.c.b16 %v2047, %v2031
  %v2096 = vpack.c.b16 %v2048, %v2032
  %v2097 = vpack.c.b16 %v2049, %v2033
  %v2098 = vpack.c.b16 %v2050, %v2034
  %v2099 = vpack.c.b16 %v2051, %v2035
  %v2100 = vpack.c.b16 %v2052, %v2036
  %v2101 = vpack.c.b16 %v2053, %v2037
  %v2102 = vpack.c.b16 %v2054, %v2038
  %v2103 = vpack.c.b16 %v2055, %v2039
  %v2104 = vpack.c.b16 %v2056, %v2040
  %v2105 = vpack.c.b16 %v2057, %v2041
  %v2106 = vpack.c.b16 %v2058, %v2042
  %v2107 = vpack.c.b16 %v2075, %v2059
  %v2108 = vpack.c.b16 %v2076, %v2060
  %v2109 = vpack.c.b16 %v2077, %v2061
  %v2110 = vpack.c.b16 %v2078, %v2062
  %v2111 = vpack.c.b16 %v2079, %v2063
  %v2112 = vpack.c.b16 %v2080, %v2064
  %v2113 = vpack.c.b16 %v2081, %v2065
  %v2114 = vpack.c.b16 %v2082, %v2066
  %v2115 = vpack.c.b16 %v2083, %v2067
  %v2116 = vpack.c.b16 %v2084, %v2068
  %v2117 = vpack.c.b16 %v2085, %v2069
  %v2118 = vpack.c.b16 %v2086, %v2070
  %v2119 = vpack.c.b16 %v2087, %v2071
  %v2120 = vpack.c.b16 %v2088, %v2072
  %v2121 = vpack.c.b16 %v2089, %v2073
  %v2122 = vpack.c.b16 %v2090, %v2074
  %v2156 = vsel %vm516, %v1877, 0
  %v2159 = vsel %vm516, %v1878, 0
  %2161 = vmatprep.subr.bf16.mxu0 0
  %2162 = vmatpush1.bf16.msra.mxu0 0
  %2163 = vmatprep.subr.bf16.mxu0 0
  %2164 = vmatpush1.bf16.msra.mxu0 0
  %2165 = vmatprep.subr.bf16.mxu0 0
  %2166 = vmatpush1.bf16.msra.mxu0 0
  %2167 = vmatprep.subr.bf16.mxu0 0
  %2168 = vmatpush1.bf16.msra.mxu0 0
  %2169 = vmatprep.subr.bf16.mxu0 0
  %2170 = vmatpush1.bf16.msra.mxu0 0
  %2171 = vmatprep.subr.bf16.mxu0 0
  %2172 = vmatpush1.bf16.msra.mxu0 0
  %2173 = vmatprep.subr.bf16.mxu0 %v2108
  %2174 = vmatpush1.bf16.msra.mxu0 %v2107
  %2175 = vmatprep.subr.bf16.mxu0 %v2092
  %2176 = vmatpush1.bf16.msra.mxu0 %v2091
  %2177 = vmatprep.subr.bf16.mxu0 0
  %2178 = vmatpush2.bf16.msra.mxu0 0
  %2179 = vmatprep.subr.bf16.mxu0 0
  %2180 = vmatpush2.bf16.msra.mxu0 0
  %2181 = vmatprep.subr.bf16.mxu0 0
  %2182 = vmatpush2.bf16.msra.mxu0 0
  %2183 = vmatprep.subr.bf16.mxu0 0
  %2184 = vmatpush2.bf16.msra.mxu0 0
  %2185 = vmatprep.subr.bf16.mxu0 0
  %2186 = vmatpush2.bf16.msra.mxu0 0
  %2187 = vmatprep.subr.bf16.mxu0 0
  %2188 = vmatpush2.bf16.msra.mxu0 0
  %2189 = vmatprep.subr.bf16.mxu0 0
  %2190 = vmatpush2.bf16.msra.mxu0 0
  %2191 = vmatprep.subr.bf16.mxu0 0
  %2192 = vmatpush2.bf16.msra.mxu0 0
  %2193 = vmatprep.mubr.bf16.mxu0 0
  %2194 = vmatmul.mubr.bf16.gmra.mxu0 %v2156
  %v2195 = vpop.f32.mrf.mxu0
  %v2196 = vadd.f32 %v1918, %v2195
  %v2197 = vpop.f32.mrf.mxu0
  %v2198 = vadd.f32 %v1922, %v2197
  %v2199 = vpop.f32.mrf.mxu0
  %v2200 = vadd.f32 %v1918, %v2199
  %v2201 = vpop.f32.mrf.mxu0
  %v2202 = vadd.f32 %v1922, %v2201
  %2203 = vmatprep.mubr.bf16.mxu0 0
  %2204 = vmatmul.mubr.bf16.gmra.mxu0 %v2159
  %v2205 = vpop.f32.mrf.mxu0
  %v2206 = vadd.f32 %v1918, %v2205
  %v2207 = vpop.f32.mrf.mxu0
  %v2208 = vadd.f32 %v1922, %v2207
  %v2209 = vpop.f32.mrf.mxu0
  %v2210 = vpop.f32.mrf.mxu0
  %2211 = vdwg.mxu0
  %2212 = vmatprep.subr.bf16.mxu0 0
  %2213 = vmatpush1.bf16.msra.mxu0 0
  %2214 = vmatprep.subr.bf16.mxu0 0
  %2215 = vmatpush1.bf16.msra.mxu0 0
  %2216 = vmatprep.subr.bf16.mxu0 0
  %2217 = vmatpush1.bf16.msra.mxu0 0
  %2218 = vmatprep.subr.bf16.mxu0 0
  %2219 = vmatpush1.bf16.msra.mxu0 0
  %2220 = vmatprep.subr.bf16.mxu0 0
  %2221 = vmatpush1.bf16.msra.mxu0 0
  %2222 = vmatprep.subr.bf16.mxu0 0
  %2223 = vmatpush1.bf16.msra.mxu0 0
  %2224 = vmatprep.subr.bf16.mxu0 %v2110
  %2225 = vmatpush1.bf16.msra.mxu0 %v2109
  %2226 = vmatprep.subr.bf16.mxu0 %v2094
  %2227 = vmatpush1.bf16.msra.mxu0 %v2093
  %2228 = vmatprep.subr.bf16.mxu0 0
  %2229 = vmatpush2.bf16.msra.mxu0 0
  %2230 = vmatprep.subr.bf16.mxu0 0
  %2231 = vmatpush2.bf16.msra.mxu0 0
  %2232 = vmatprep.subr.bf16.mxu0 0
  %2233 = vmatpush2.bf16.msra.mxu0 0
  %2234 = vmatprep.subr.bf16.mxu0 0
  %2235 = vmatpush2.bf16.msra.mxu0 0
  %2236 = vmatprep.subr.bf16.mxu0 0
  %2237 = vmatpush2.bf16.msra.mxu0 0
  %2238 = vmatprep.subr.bf16.mxu0 0
  %2239 = vmatpush2.bf16.msra.mxu0 0
  %2240 = vmatprep.subr.bf16.mxu0 0
  %2241 = vmatpush2.bf16.msra.mxu0 0
  %2242 = vmatprep.subr.bf16.mxu0 0
  %2243 = vmatpush2.bf16.msra.mxu0 0
  %2244 = vmatprep.mubr.bf16.mxu0 0
  %2245 = vmatmul.mubr.bf16.gmra.mxu0 %v2156
  %v2246 = vpop.f32.mrf.mxu0
  %v2247 = vadd.f32 %v1926, %v2246
  %v2248 = vpop.f32.mrf.mxu0
  %v2249 = vadd.f32 %v1930, %v2248
  %v2250 = vpop.f32.mrf.mxu0
  %v2251 = vadd.f32 %v1926, %v2250
  %v2252 = vpop.f32.mrf.mxu0
  %v2253 = vadd.f32 %v1930, %v2252
  %2254 = vmatprep.mubr.bf16.mxu0 0
  %2255 = vmatmul.mubr.bf16.gmra.mxu0 %v2159
  %v2256 = vpop.f32.mrf.mxu0
  %v2257 = vadd.f32 %v1926, %v2256
  %v2258 = vpop.f32.mrf.mxu0
  %v2259 = vadd.f32 %v1930, %v2258
  %v2260 = vpop.f32.mrf.mxu0
  %v2261 = vpop.f32.mrf.mxu0
  %2262 = vdwg.mxu0
  %2263 = vmatprep.subr.bf16.mxu0 0
  %2264 = vmatpush1.bf16.msra.mxu0 0
  %2265 = vmatprep.subr.bf16.mxu0 0
  %2266 = vmatpush1.bf16.msra.mxu0 0
  %2267 = vmatprep.subr.bf16.mxu0 0
  %2268 = vmatpush1.bf16.msra.mxu0 0
  %2269 = vmatprep.subr.bf16.mxu0 0
  %2270 = vmatpush1.bf16.msra.mxu0 0
  %2271 = vmatprep.subr.bf16.mxu0 0
  %2272 = vmatpush1.bf16.msra.mxu0 0
  %2273 = vmatprep.subr.bf16.mxu0 0
  %2274 = vmatpush1.bf16.msra.mxu0 0
  %2275 = vmatprep.subr.bf16.mxu0 %v2112
  %2276 = vmatpush1.bf16.msra.mxu0 %v2111
  %2277 = vmatprep.subr.bf16.mxu0 %v2096
  %2278 = vmatpush1.bf16.msra.mxu0 %v2095
  %2279 = vmatprep.subr.bf16.mxu0 0
  %2280 = vmatpush2.bf16.msra.mxu0 0
  %2281 = vmatprep.subr.bf16.mxu0 0
  %2282 = vmatpush2.bf16.msra.mxu0 0
  %2283 = vmatprep.subr.bf16.mxu0 0
  %2284 = vmatpush2.bf16.msra.mxu0 0
  %2285 = vmatprep.subr.bf16.mxu0 0
  %2286 = vmatpush2.bf16.msra.mxu0 0
  %2287 = vmatprep.subr.bf16.mxu0 0
  %2288 = vmatpush2.bf16.msra.mxu0 0
  %2289 = vmatprep.subr.bf16.mxu0 0
  %2290 = vmatpush2.bf16.msra.mxu0 0
  %2291 = vmatprep.subr.bf16.mxu0 0
  %2292 = vmatpush2.bf16.msra.mxu0 0
  %2293 = vmatprep.subr.bf16.mxu0 0
  %2294 = vmatpush2.bf16.msra.mxu0 0
  %2295 = vmatprep.mubr.bf16.mxu0 0
  %2296 = vmatmul.mubr.bf16.gmra.mxu0 %v2156
  %v2297 = vpop.f32.mrf.mxu0
  %v2298 = vadd.f32 %v1934, %v2297
  %v2299 = vpop.f32.mrf.mxu0
  %v2300 = vadd.f32 %v1938, %v2299
  %v2301 = vpop.f32.mrf.mxu0
  %v2302 = vadd.f32 %v1934, %v2301
  %v2303 = vpop.f32.mrf.mxu0
  %v2304 = vadd.f32 %v1938, %v2303
  %2305 = vmatprep.mubr.bf16.mxu0 0
  %2306 = vmatmul.mubr.bf16.gmra.mxu0 %v2159
  %v2307 = vpop.f32.mrf.mxu0
  %v2308 = vadd.f32 %v1934, %v2307
  %v2309 = vpop.f32.mrf.mxu0
  %v2310 = vadd.f32 %v1938, %v2309
  %v2311 = vpop.f32.mrf.mxu0
  %v2312 = vpop.f32.mrf.mxu0
  %2313 = vdwg.mxu0
  %2314 = vmatprep.subr.bf16.mxu0 0
  %2315 = vmatpush1.bf16.msra.mxu0 0
  %2316 = vmatprep.subr.bf16.mxu0 0
  %2317 = vmatpush1.bf16.msra.mxu0 0
  %2318 = vmatprep.subr.bf16.mxu0 0
  %2319 = vmatpush1.bf16.msra.mxu0 0
  %2320 = vmatprep.subr.bf16.mxu0 0
  %2321 = vmatpush1.bf16.msra.mxu0 0
  %2322 = vmatprep.subr.bf16.mxu0 0
  %2323 = vmatpush1.bf16.msra.mxu0 0
  %2324 = vmatprep.subr.bf16.mxu0 0
  %2325 = vmatpush1.bf16.msra.mxu0 0
  %2326 = vmatprep.subr.bf16.mxu0 %v2114
  %2327 = vmatpush1.bf16.msra.mxu0 %v2113
  %2328 = vmatprep.subr.bf16.mxu0 %v2098
  %2329 = vmatpush1.bf16.msra.mxu0 %v2097
  %2330 = vmatprep.subr.bf16.mxu0 0
  %2331 = vmatpush2.bf16.msra.mxu0 0
  %2332 = vmatprep.subr.bf16.mxu0 0
  %2333 = vmatpush2.bf16.msra.mxu0 0
  %2334 = vmatprep.subr.bf16.mxu0 0
  %2335 = vmatpush2.bf16.msra.mxu0 0
  %2336 = vmatprep.subr.bf16.mxu0 0
  %2337 = vmatpush2.bf16.msra.mxu0 0
  %2338 = vmatprep.subr.bf16.mxu0 0
  %2339 = vmatpush2.bf16.msra.mxu0 0
  %2340 = vmatprep.subr.bf16.mxu0 0
  %2341 = vmatpush2.bf16.msra.mxu0 0
  %2342 = vmatprep.subr.bf16.mxu0 0
  %2343 = vmatpush2.bf16.msra.mxu0 0
  %2344 = vmatprep.subr.bf16.mxu0 0
  %2345 = vmatpush2.bf16.msra.mxu0 0
  %2346 = vmatprep.mubr.bf16.mxu0 0
  %2347 = vmatmul.mubr.bf16.gmra.mxu0 %v2156
  %v2348 = vpop.f32.mrf.mxu0
  %v2349 = vadd.f32 %v1942, %v2348
  %v2350 = vpop.f32.mrf.mxu0
  %v2351 = vadd.f32 %v1946, %v2350
  %v2352 = vpop.f32.mrf.mxu0
  %v2353 = vadd.f32 %v1942, %v2352
  %v2354 = vpop.f32.mrf.mxu0
  %v2355 = vadd.f32 %v1946, %v2354
  %2356 = vmatprep.mubr.bf16.mxu0 0
  %2357 = vmatmul.mubr.bf16.gmra.mxu0 %v2159
  %v2358 = vpop.f32.mrf.mxu0
  %v2359 = vadd.f32 %v1942, %v2358
  %v2360 = vpop.f32.mrf.mxu0
  %v2361 = vadd.f32 %v1946, %v2360
  %v2362 = vpop.f32.mrf.mxu0
  %v2363 = vpop.f32.mrf.mxu0
  %2364 = vdwg.mxu0
  %2365 = vmatprep.subr.bf16.mxu0 0
  %2366 = vmatpush1.bf16.msra.mxu0 0
  %2367 = vmatprep.subr.bf16.mxu0 0
  %2368 = vmatpush1.bf16.msra.mxu0 0
  %2369 = vmatprep.subr.bf16.mxu0 0
  %2370 = vmatpush1.bf16.msra.mxu0 0
  %2371 = vmatprep.subr.bf16.mxu0 0
  %2372 = vmatpush1.bf16.msra.mxu0 0
  %2373 = vmatprep.subr.bf16.mxu0 0
  %2374 = vmatpush1.bf16.msra.mxu0 0
  %2375 = vmatprep.subr.bf16.mxu0 0
  %2376 = vmatpush1.bf16.msra.mxu0 0
  %2377 = vmatprep.subr.bf16.mxu0 %v2116
  %2378 = vmatpush1.bf16.msra.mxu0 %v2115
  %2379 = vmatprep.subr.bf16.mxu0 %v2100
  %2380 = vmatpush1.bf16.msra.mxu0 %v2099
  %2381 = vmatprep.subr.bf16.mxu0 0
  %2382 = vmatpush2.bf16.msra.mxu0 0
  %2383 = vmatprep.subr.bf16.mxu0 0
  %2384 = vmatpush2.bf16.msra.mxu0 0
  %2385 = vmatprep.subr.bf16.mxu0 0
  %2386 = vmatpush2.bf16.msra.mxu0 0
  %2387 = vmatprep.subr.bf16.mxu0 0
  %2388 = vmatpush2.bf16.msra.mxu0 0
  %2389 = vmatprep.subr.bf16.mxu0 0
  %2390 = vmatpush2.bf16.msra.mxu0 0
  %2391 = vmatprep.subr.bf16.mxu0 0
  %2392 = vmatpush2.bf16.msra.mxu0 0
  %2393 = vmatprep.subr.bf16.mxu0 0
  %2394 = vmatpush2.bf16.msra.mxu0 0
  %2395 = vmatprep.subr.bf16.mxu0 0
  %2396 = vmatpush2.bf16.msra.mxu0 0
  %2397 = vmatprep.mubr.bf16.mxu0 0
  %2398 = vmatmul.mubr.bf16.gmra.mxu0 %v2156
  %v2399 = vpop.f32.mrf.mxu0
  %v2400 = vadd.f32 %v1950, %v2399
  %v2401 = vpop.f32.mrf.mxu0
  %v2402 = vadd.f32 %v1954, %v2401
  %v2403 = vpop.f32.mrf.mxu0
  %v2404 = vadd.f32 %v1950, %v2403
  %v2405 = vpop.f32.mrf.mxu0
  %v2406 = vadd.f32 %v1954, %v2405
  %2407 = vmatprep.mubr.bf16.mxu0 0
  %2408 = vmatmul.mubr.bf16.gmra.mxu0 %v2159
  %v2409 = vpop.f32.mrf.mxu0
  %v2410 = vadd.f32 %v1950, %v2409
  %v2411 = vpop.f32.mrf.mxu0
  %v2412 = vadd.f32 %v1954, %v2411
  %v2413 = vpop.f32.mrf.mxu0
  %v2414 = vpop.f32.mrf.mxu0
  %2415 = vdwg.mxu0
  %2416 = vmatprep.subr.bf16.mxu0 0
  %2417 = vmatpush1.bf16.msra.mxu0 0
  %2418 = vmatprep.subr.bf16.mxu0 0
  %2419 = vmatpush1.bf16.msra.mxu0 0
  %2420 = vmatprep.subr.bf16.mxu0 0
  %2421 = vmatpush1.bf16.msra.mxu0 0
  %2422 = vmatprep.subr.bf16.mxu0 0
  %2423 = vmatpush1.bf16.msra.mxu0 0
  %2424 = vmatprep.subr.bf16.mxu0 0
  %2425 = vmatpush1.bf16.msra.mxu0 0
  %2426 = vmatprep.subr.bf16.mxu0 0
  %2427 = vmatpush1.bf16.msra.mxu0 0
  %2428 = vmatprep.subr.bf16.mxu0 %v2118
  %2429 = vmatpush1.bf16.msra.mxu0 %v2117
  %2430 = vmatprep.subr.bf16.mxu0 %v2102
  %2431 = vmatpush1.bf16.msra.mxu0 %v2101
  %2432 = vmatprep.subr.bf16.mxu0 0
  %2433 = vmatpush2.bf16.msra.mxu0 0
  %2434 = vmatprep.subr.bf16.mxu0 0
  %2435 = vmatpush2.bf16.msra.mxu0 0
  %2436 = vmatprep.subr.bf16.mxu0 0
  %2437 = vmatpush2.bf16.msra.mxu0 0
  %2438 = vmatprep.subr.bf16.mxu0 0
  %2439 = vmatpush2.bf16.msra.mxu0 0
  %2440 = vmatprep.subr.bf16.mxu0 0
  %2441 = vmatpush2.bf16.msra.mxu0 0
  %2442 = vmatprep.subr.bf16.mxu0 0
  %2443 = vmatpush2.bf16.msra.mxu0 0
  %2444 = vmatprep.subr.bf16.mxu0 0
  %2445 = vmatpush2.bf16.msra.mxu0 0
  %2446 = vmatprep.subr.bf16.mxu0 0
  %2447 = vmatpush2.bf16.msra.mxu0 0
  %2448 = vmatprep.mubr.bf16.mxu0 0
  %2449 = vmatmul.mubr.bf16.gmra.mxu0 %v2156
  %v2450 = vpop.f32.mrf.mxu0
  %v2451 = vadd.f32 %v1958, %v2450
  %v2452 = vpop.f32.mrf.mxu0
  %v2453 = vadd.f32 %v1962, %v2452
  %v2454 = vpop.f32.mrf.mxu0
  %v2455 = vadd.f32 %v1958, %v2454
  %v2456 = vpop.f32.mrf.mxu0
  %v2457 = vadd.f32 %v1962, %v2456
  %2458 = vmatprep.mubr.bf16.mxu0 0
  %2459 = vmatmul.mubr.bf16.gmra.mxu0 %v2159
  %v2460 = vpop.f32.mrf.mxu0
  %v2461 = vadd.f32 %v1958, %v2460
  %v2462 = vpop.f32.mrf.mxu0
  %v2463 = vadd.f32 %v1962, %v2462
  %v2464 = vpop.f32.mrf.mxu0
  %v2465 = vpop.f32.mrf.mxu0
  %2466 = vdwg.mxu0
  %2467 = vmatprep.subr.bf16.mxu0 0
  %2468 = vmatpush1.bf16.msra.mxu0 0
  %2469 = vmatprep.subr.bf16.mxu0 0
  %2470 = vmatpush1.bf16.msra.mxu0 0
  %2471 = vmatprep.subr.bf16.mxu0 0
  %2472 = vmatpush1.bf16.msra.mxu0 0
  %2473 = vmatprep.subr.bf16.mxu0 0
  %2474 = vmatpush1.bf16.msra.mxu0 0
  %2475 = vmatprep.subr.bf16.mxu0 0
  %2476 = vmatpush1.bf16.msra.mxu0 0
  %2477 = vmatprep.subr.bf16.mxu0 0
  %2478 = vmatpush1.bf16.msra.mxu0 0
  %2479 = vmatprep.subr.bf16.mxu0 %v2120
  %2480 = vmatpush1.bf16.msra.mxu0 %v2119
  %2481 = vmatprep.subr.bf16.mxu0 %v2104
  %2482 = vmatpush1.bf16.msra.mxu0 %v2103
  %2483 = vmatprep.subr.bf16.mxu0 0
  %2484 = vmatpush2.bf16.msra.mxu0 0
  %2485 = vmatprep.subr.bf16.mxu0 0
  %2486 = vmatpush2.bf16.msra.mxu0 0
  %2487 = vmatprep.subr.bf16.mxu0 0
  %2488 = vmatpush2.bf16.msra.mxu0 0
  %2489 = vmatprep.subr.bf16.mxu0 0
  %2490 = vmatpush2.bf16.msra.mxu0 0
  %2491 = vmatprep.subr.bf16.mxu0 0
  %2492 = vmatpush2.bf16.msra.mxu0 0
  %2493 = vmatprep.subr.bf16.mxu0 0
  %2494 = vmatpush2.bf16.msra.mxu0 0
  %2495 = vmatprep.subr.bf16.mxu0 0
  %2496 = vmatpush2.bf16.msra.mxu0 0
  %2497 = vmatprep.subr.bf16.mxu0 0
  %2498 = vmatpush2.bf16.msra.mxu0 0
  %2499 = vmatprep.mubr.bf16.mxu0 0
  %2500 = vmatmul.mubr.bf16.gmra.mxu0 %v2156
  %v2501 = vpop.f32.mrf.mxu0
  %v2502 = vadd.f32 %v1966, %v2501
  %v2503 = vpop.f32.mrf.mxu0
  %v2504 = vadd.f32 %v1970, %v2503
  %v2505 = vpop.f32.mrf.mxu0
  %v2506 = vadd.f32 %v1966, %v2505
  %v2507 = vpop.f32.mrf.mxu0
  %v2508 = vadd.f32 %v1970, %v2507
  %2509 = vmatprep.mubr.bf16.mxu0 0
  %2510 = vmatmul.mubr.bf16.gmra.mxu0 %v2159
  %v2511 = vpop.f32.mrf.mxu0
  %v2512 = vadd.f32 %v1966, %v2511
  %v2513 = vpop.f32.mrf.mxu0
  %v2514 = vadd.f32 %v1970, %v2513
  %v2515 = vpop.f32.mrf.mxu0
  %v2516 = vpop.f32.mrf.mxu0
  %2517 = vdwg.mxu0
  %2518 = vmatprep.subr.bf16.mxu0 0
  %2519 = vmatpush1.bf16.msra.mxu0 0
  %2520 = vmatprep.subr.bf16.mxu0 0
  %2521 = vmatpush1.bf16.msra.mxu0 0
  %2522 = vmatprep.subr.bf16.mxu0 0
  %2523 = vmatpush1.bf16.msra.mxu0 0
  %2524 = vmatprep.subr.bf16.mxu0 0
  %2525 = vmatpush1.bf16.msra.mxu0 0
  %2526 = vmatprep.subr.bf16.mxu0 0
  %2527 = vmatpush1.bf16.msra.mxu0 0
  %2528 = vmatprep.subr.bf16.mxu0 0
  %2529 = vmatpush1.bf16.msra.mxu0 0
  %2530 = vmatprep.subr.bf16.mxu0 %v2122
  %2531 = vmatpush1.bf16.msra.mxu0 %v2121
  %2532 = vmatprep.subr.bf16.mxu0 %v2106
  %2533 = vmatpush1.bf16.msra.mxu0 %v2105
  %2534 = vmatprep.subr.bf16.mxu0 0
  %2535 = vmatpush2.bf16.msra.mxu0 0
  %2536 = vmatprep.subr.bf16.mxu0 0
  %2537 = vmatpush2.bf16.msra.mxu0 0
  %2538 = vmatprep.subr.bf16.mxu0 0
  %2539 = vmatpush2.bf16.msra.mxu0 0
  %2540 = vmatprep.subr.bf16.mxu0 0
  %2541 = vmatpush2.bf16.msra.mxu0 0
  %2542 = vmatprep.subr.bf16.mxu0 0
  %2543 = vmatpush2.bf16.msra.mxu0 0
  %2544 = vmatprep.subr.bf16.mxu0 0
  %2545 = vmatpush2.bf16.msra.mxu0 0
  %2546 = vmatprep.subr.bf16.mxu0 0
  %2547 = vmatpush2.bf16.msra.mxu0 0
  %2548 = vmatprep.subr.bf16.mxu0 0
  %2549 = vmatpush2.bf16.msra.mxu0 0
  %2550 = vmatprep.mubr.bf16.mxu0 0
  %2551 = vmatmul.mubr.bf16.gmra.mxu0 %v2156
  %v2552 = vpop.f32.mrf.mxu0
  %v2553 = vadd.f32 %v1974, %v2552
  %v2554 = vpop.f32.mrf.mxu0
  %v2555 = vadd.f32 %v1978, %v2554
  %v2556 = vpop.f32.mrf.mxu0
  %v2557 = vadd.f32 %v1974, %v2556
  %v2558 = vpop.f32.mrf.mxu0
  %v2559 = vadd.f32 %v1978, %v2558
  %2560 = vmatprep.mubr.bf16.mxu0 0
  %2561 = vmatmul.mubr.bf16.gmra.mxu0 %v2159
  %v2562 = vpop.f32.mrf.mxu0
  %v2563 = vadd.f32 %v1974, %v2562
  %v2564 = vpop.f32.mrf.mxu0
  %v2565 = vadd.f32 %v1978, %v2564
  %v2566 = vpop.f32.mrf.mxu0
  %v2567 = vpop.f32.mrf.mxu0
  %2568 = vdwg.mxu0
  %v2569 = vmax.f32 %v2196, 0.0
  %v2570 = vmax.f32 %v2198, 0.0
  %v2571 = vmax.f32 %v2247, 0.0
  %v2572 = vmax.f32 %v2249, 0.0
  %v2573 = vmax.f32 %v2298, 0.0
  %v2574 = vmax.f32 %v2300, 0.0
  %v2575 = vmax.f32 %v2349, 0.0
  %v2576 = vmax.f32 %v2351, 0.0
  %v2577 = vmax.f32 %v2400, 0.0
  %v2578 = vmax.f32 %v2402, 0.0
  %v2579 = vmax.f32 %v2451, 0.0
  %v2580 = vmax.f32 %v2453, 0.0
  %v2581 = vmax.f32 %v2502, 0.0
  %v2582 = vmax.f32 %v2504, 0.0
  %v2583 = vmax.f32 %v2553, 0.0
  %v2584 = vmax.f32 %v2555, 0.0
  %v2585 = vmax.f32 %v2200, 0.0
  %v2586 = vmax.f32 %v2202, 0.0
  %v2587 = vmax.f32 %v2251, 0.0
  %v2588 = vmax.f32 %v2253, 0.0
  %v2589 = vmax.f32 %v2302, 0.0
  %v2590 = vmax.f32 %v2304, 0.0
  %v2591 = vmax.f32 %v2353, 0.0
  %v2592 = vmax.f32 %v2355, 0.0
  %v2593 = vmax.f32 %v2404, 0.0
  %v2594 = vmax.f32 %v2406, 0.0
  %v2595 = vmax.f32 %v2455, 0.0
  %v2596 = vmax.f32 %v2457, 0.0
  %v2597 = vmax.f32 %v2506, 0.0
  %v2598 = vmax.f32 %v2508, 0.0
  %v2599 = vmax.f32 %v2557, 0.0
  %v2600 = vmax.f32 %v2559, 0.0
  %v2601 = vmax.f32 %v2206, 0.0
  %v2602 = vmax.f32 %v2208, 0.0
  %v2603 = vmax.f32 %v2257, 0.0
  %v2604 = vmax.f32 %v2259, 0.0
  %v2605 = vmax.f32 %v2308, 0.0
  %v2606 = vmax.f32 %v2310, 0.0
  %v2607 = vmax.f32 %v2359, 0.0
  %v2608 = vmax.f32 %v2361, 0.0
  %v2609 = vmax.f32 %v2410, 0.0
  %v2610 = vmax.f32 %v2412, 0.0
  %v2611 = vmax.f32 %v2461, 0.0
  %v2612 = vmax.f32 %v2463, 0.0
  %v2613 = vmax.f32 %v2512, 0.0
  %v2614 = vmax.f32 %v2514, 0.0
  %v2615 = vmax.f32 %v2563, 0.0
  %v2616 = vmax.f32 %v2565, 0.0
  %v2617 = vpack.c.bf16 %v2585, %v2569
  %v2618 = vpack.c.bf16 %v2586, %v2570
  %v2619 = vpack.c.bf16 %v2587, %v2571
  %v2620 = vpack.c.bf16 %v2588, %v2572
  %v2621 = vpack.c.bf16 %v2589, %v2573
  %v2622 = vpack.c.bf16 %v2590, %v2574
  %v2623 = vpack.c.bf16 %v2591, %v2575
  %v2624 = vpack.c.bf16 %v2592, %v2576
  %v2625 = vpack.c.bf16 %v2593, %v2577
  %v2626 = vpack.c.bf16 %v2594, %v2578
  %v2627 = vpack.c.bf16 %v2595, %v2579
  %v2628 = vpack.c.bf16 %v2596, %v2580
  %v2629 = vpack.c.bf16 %v2597, %v2581
  %v2630 = vpack.c.bf16 %v2598, %v2582
  %v2631 = vpack.c.bf16 %v2599, %v2583
  %v2632 = vpack.c.bf16 %v2600, %v2584
  %v2633 = vpack.c.bf16 %v2601, %v2601
  %v2634 = vpack.c.bf16 %v2602, %v2602
  %v2635 = vpack.c.bf16 %v2603, %v2603
  %v2636 = vpack.c.bf16 %v2604, %v2604
  %v2637 = vpack.c.bf16 %v2605, %v2605
  %v2638 = vpack.c.bf16 %v2606, %v2606
  %v2639 = vpack.c.bf16 %v2607, %v2607
  %v2640 = vpack.c.bf16 %v2608, %v2608
  %v2641 = vpack.c.bf16 %v2609, %v2609
  %v2642 = vpack.c.bf16 %v2610, %v2610
  %v2643 = vpack.c.bf16 %v2611, %v2611
  %v2644 = vpack.c.bf16 %v2612, %v2612
  %v2645 = vpack.c.bf16 %v2613, %v2613
  %v2646 = vpack.c.bf16 %v2614, %v2614
  %v2647 = vpack.c.bf16 %v2615, %v2615
  %v2648 = vpack.c.bf16 %v2616, %v2616
  %v2649 = vld [vmem:[%s43] sm:$0xf]
  %v2650 = vld [vmem:[%s43 + $0x4] sm:$0xf]
  %v2651 = vld [vmem:[%s43 + $0x8] sm:$0xf]
  %v2652 = vld [vmem:[%s43 + $0xc] sm:$0xf]
  %v2653 = vld [vmem:[%s43 + $0x10] sm:$0xf]
  %v2654 = vld [vmem:[%s43 + $0x14] sm:$0xf]
  %v2655 = vld [vmem:[%s43 + $0x18] sm:$0xf]
  %v2656 = vld [vmem:[%s43 + $0x1c] sm:$0xf]
  %v2657 = vld [vmem:[%s43 + $0x20] sm:$0xf]
  %v2658 = vld [vmem:[%s43 + $0x24] sm:$0xf]
  %v2659 = vld [vmem:[%s43 + $0x28] sm:$0xf]
  %v2660 = vld [vmem:[%s43 + $0x2c] sm:$0xf]
  %v2661 = vld [vmem:[%s43 + $0x30] sm:$0xf]
  %v2662 = vld [vmem:[%s43 + $0x34] sm:$0xf]
  %v2663 = vld [vmem:[%s43 + $0x38] sm:$0xf]
  %v2664 = vld [vmem:[%s43 + $0x3c] sm:$0xf]
  %v2665 = vld [vmem:[%s43 + $0x40] sm:$0xf]
  %v2666 = vld [vmem:[%s43 + $0x44] sm:$0xf]
  %v2667 = vld [vmem:[%s43 + $0x48] sm:$0xf]
  %v2668 = vld [vmem:[%s43 + $0x4c] sm:$0xf]
  %v2669 = vld [vmem:[%s43 + $0x50] sm:$0xf]
  %v2670 = vld [vmem:[%s43 + $0x54] sm:$0xf]
  %v2671 = vld [vmem:[%s43 + $0x58] sm:$0xf]
  %v2672 = vld [vmem:[%s43 + $0x5c] sm:$0xf]
  %v2673 = vld [vmem:[%s43 + $0x60] sm:$0xf]
  %v2674 = vld [vmem:[%s43 + $0x64] sm:$0xf]
  %v2675 = vld [vmem:[%s43 + $0x68] sm:$0xf]
  %v2676 = vld [vmem:[%s43 + $0x6c] sm:$0xf]
  %v2677 = vld [vmem:[%s43 + $0x70] sm:$0xf]
  %v2678 = vld [vmem:[%s43 + $0x74] sm:$0xf]
  %v2679 = vld [vmem:[%s43 + $0x78] sm:$0xf]
  %v2680 = vld [vmem:[%s43 + $0x7c] sm:$0xf]
  %v2681 = vld [vmem:[%s43 + $0x80] sm:$0xf]
  %v2682 = vld [vmem:[%s43 + $0x84] sm:$0xf]
  %v2683 = vld [vmem:[%s43 + $0x88] sm:$0xf]
  %v2684 = vld [vmem:[%s43 + $0x8c] sm:$0xf]
  %v2685 = vld [vmem:[%s43 + $0x90] sm:$0xf]
  %v2686 = vld [vmem:[%s43 + $0x94] sm:$0xf]
  %v2687 = vld [vmem:[%s43 + $0x98] sm:$0xf]
  %v2688 = vld [vmem:[%s43 + $0x9c] sm:$0xf]
  %v2689 = vld [vmem:[%s43 + $0xa0] sm:$0xf]
  %v2690 = vld [vmem:[%s43 + $0xa4] sm:$0xf]
  %v2691 = vld [vmem:[%s43 + $0xa8] sm:$0xf]
  %v2692 = vld [vmem:[%s43 + $0xac] sm:$0xf]
  %v2693 = vld [vmem:[%s43 + $0xb0] sm:$0xf]
  %v2694 = vld [vmem:[%s43 + $0xb4] sm:$0xf]
  %v2695 = vld [vmem:[%s43 + $0xb8] sm:$0xf]
  %v2696 = vld [vmem:[%s43 + $0xbc] sm:$0xf]
  %v2697 = vld [vmem:[%s43 + $0xc0] sm:$0xf]
  %v2698 = vld [vmem:[%s43 + $0xc4] sm:$0xf]
  %v2699 = vld [vmem:[%s43 + $0xc8] sm:$0xf]
  %v2700 = vld [vmem:[%s43 + $0xcc] sm:$0xf]
  %v2701 = vld [vmem:[%s43 + $0xd0] sm:$0xf]
  %v2702 = vld [vmem:[%s43 + $0xd4] sm:$0xf]
  %v2703 = vld [vmem:[%s43 + $0xd8] sm:$0xf]
  %v2704 = vld [vmem:[%s43 + $0xdc] sm:$0xf]
  %v2705 = vld [vmem:[%s43 + $0xe0] sm:$0xf]
  %v2706 = vld [vmem:[%s43 + $0xe4] sm:$0xf]
  %v2707 = vld [vmem:[%s43 + $0xe8] sm:$0xf]
  %v2708 = vld [vmem:[%s43 + $0xec] sm:$0xf]
  %v2709 = vld [vmem:[%s43 + $0xf0] sm:$0xf]
  %v2710 = vld [vmem:[%s43 + $0xf4] sm:$0xf]
  %v2711 = vld [vmem:[%s43 + $0xf8] sm:$0xf]
  %v2712 = vld [vmem:[%s43 + $0xfc] sm:$0xf]
  %v2713 = vld [vmem:[%s43 + $0x100] sm:$0xf]
  %v2714 = vld [vmem:[%s43 + $0x104] sm:$0xf]
  %v2715 = vld [vmem:[%s43 + $0x108] sm:$0xf]
  %v2716 = vld [vmem:[%s43 + $0x10c] sm:$0xf]
  %v2717 = vld [vmem:[%s43 + $0x110] sm:$0xf]
  %v2718 = vld [vmem:[%s43 + $0x114] sm:$0xf]
  %v2719 = vld [vmem:[%s43 + $0x118] sm:$0xf]
  %v2720 = vld [vmem:[%s43 + $0x11c] sm:$0xf]
  %v2721 = vld [vmem:[%s43 + $0x120] sm:$0xf]
  %v2722 = vld [vmem:[%s43 + $0x124] sm:$0xf]
  %v2723 = vld [vmem:[%s43 + $0x128] sm:$0xf]
  %v2724 = vld [vmem:[%s43 + $0x12c] sm:$0xf]
  %v2725 = vld [vmem:[%s43 + $0x130] sm:$0xf]
  %v2726 = vld [vmem:[%s43 + $0x134] sm:$0xf]
  %v2727 = vld [vmem:[%s43 + $0x138] sm:$0xf]
  %v2728 = vld [vmem:[%s43 + $0x13c] sm:$0xf]
  %v2729 = vld [vmem:[%s43 + $0x140] sm:$0xf]
  %v2730 = vld [vmem:[%s43 + $0x144] sm:$0xf]
  %v2731 = vld [vmem:[%s43 + $0x148] sm:$0xf]
  %v2732 = vld [vmem:[%s43 + $0x14c] sm:$0xf]
  %v2733 = vld [vmem:[%s43 + $0x150] sm:$0xf]
  %v2734 = vld [vmem:[%s43 + $0x154] sm:$0xf]
  %v2735 = vld [vmem:[%s43 + $0x158] sm:$0xf]
  %v2736 = vld [vmem:[%s43 + $0x15c] sm:$0xf]
  %v2737 = vld [vmem:[%s43 + $0x160] sm:$0xf]
  %v2738 = vld [vmem:[%s43 + $0x164] sm:$0xf]
  %v2739 = vld [vmem:[%s43 + $0x168] sm:$0xf]
  %v2740 = vld [vmem:[%s43 + $0x16c] sm:$0xf]
  %v2741 = vld [vmem:[%s43 + $0x170] sm:$0xf]
  %v2742 = vld [vmem:[%s43 + $0x174] sm:$0xf]
  %v2743 = vld [vmem:[%s43 + $0x178] sm:$0xf]
  %v2744 = vld [vmem:[%s43 + $0x17c] sm:$0xf]
  %v2745 = vld [vmem:[%s43 + $0x180] sm:$0xf]
  %v2746 = vld [vmem:[%s43 + $0x184] sm:$0xf]
  %v2747 = vld [vmem:[%s43 + $0x188] sm:$0xf]
  %v2748 = vld [vmem:[%s43 + $0x18c] sm:$0xf]
  %v2749 = vld [vmem:[%s43 + $0x190] sm:$0xf]
  %v2750 = vld [vmem:[%s43 + $0x194] sm:$0xf]
  %v2751 = vld [vmem:[%s43 + $0x198] sm:$0xf]
  %v2752 = vld [vmem:[%s43 + $0x19c] sm:$0xf]
  %v2753 = vld [vmem:[%s43 + $0x1a0] sm:$0xf]
  %v2754 = vld [vmem:[%s43 + $0x1a4] sm:$0xf]
  %v2755 = vld [vmem:[%s43 + $0x1a8] sm:$0xf]
  %v2756 = vld [vmem:[%s43 + $0x1ac] sm:$0xf]
  %v2757 = vld [vmem:[%s43 + $0x1b0] sm:$0xf]
  %v2758 = vld [vmem:[%s43 + $0x1b4] sm:$0xf]
  %v2759 = vld [vmem:[%s43 + $0x1b8] sm:$0xf]
  %v2760 = vld [vmem:[%s43 + $0x1bc] sm:$0xf]
  %v2761 = vld [vmem:[%s43 + $0x1c0] sm:$0xf]
  %v2762 = vld [vmem:[%s43 + $0x1c4] sm:$0xf]
  %v2763 = vld [vmem:[%s43 + $0x1c8] sm:$0xf]
  %v2764 = vld [vmem:[%s43 + $0x1cc] sm:$0xf]
  %v2765 = vld [vmem:[%s43 + $0x1d0] sm:$0xf]
  %v2766 = vld [vmem:[%s43 + $0x1d4] sm:$0xf]
  %v2767 = vld [vmem:[%s43 + $0x1d8] sm:$0xf]
  %v2768 = vld [vmem:[%s43 + $0x1dc] sm:$0xf]
  %v2769 = vld [vmem:[%s43 + $0x1e0] sm:$0xf]
  %v2770 = vld [vmem:[%s43 + $0x1e4] sm:$0xf]
  %v2771 = vld [vmem:[%s43 + $0x1e8] sm:$0xf]
  %v2772 = vld [vmem:[%s43 + $0x1ec] sm:$0xf]
  %v2773 = vld [vmem:[%s43 + $0x1f0] sm:$0xf]
  %v2774 = vld [vmem:[%s43 + $0x1f4] sm:$0xf]
  %v2775 = vld [vmem:[%s43 + $0x1f8] sm:$0xf]
  %v2776 = vld [vmem:[%s43 + $0x1fc] sm:$0xf]
  %v2777 = vld [vmem:[%s43 + $0x200] sm:$0xf]
  %v2778 = vld [vmem:[%s43 + $0x204] sm:$0xf]
  %v2779 = vld [vmem:[%s43 + $0x208] sm:$0xf]
  %v2780 = vld [vmem:[%s43 + $0x20c] sm:$0xf]
  %v2781 = vld [vmem:[%s43 + $0x210] sm:$0xf]
  %v2782 = vld [vmem:[%s43 + $0x214] sm:$0xf]
  %v2783 = vld [vmem:[%s43 + $0x218] sm:$0xf]
  %v2784 = vld [vmem:[%s43 + $0x21c] sm:$0xf]
  %v2785 = vld [vmem:[%s43 + $0x220] sm:$0xf]
  %v2786 = vld [vmem:[%s43 + $0x224] sm:$0xf]
  %v2787 = vld [vmem:[%s43 + $0x228] sm:$0xf]
  %v2788 = vld [vmem:[%s43 + $0x22c] sm:$0xf]
  %v2789 = vld [vmem:[%s43 + $0x230] sm:$0xf]
  %v2790 = vld [vmem:[%s43 + $0x234] sm:$0xf]
  %v2791 = vld [vmem:[%s43 + $0x238] sm:$0xf]
  %v2792 = vld [vmem:[%s43 + $0x23c] sm:$0xf]
  %v2793 = vld [vmem:[%s43 + $0x240] sm:$0xf]
  %v2794 = vld [vmem:[%s43 + $0x244] sm:$0xf]
  %v2795 = vld [vmem:[%s43 + $0x248] sm:$0xf]
  %v2796 = vld [vmem:[%s43 + $0x24c] sm:$0xf]
  %v2797 = vld [vmem:[%s43 + $0x250] sm:$0xf]
  %v2798 = vld [vmem:[%s43 + $0x254] sm:$0xf]
  %v2799 = vld [vmem:[%s43 + $0x258] sm:$0xf]
  %v2800 = vld [vmem:[%s43 + $0x25c] sm:$0xf]
  %v2801 = vld [vmem:[%s43 + $0x260] sm:$0xf]
  %v2802 = vld [vmem:[%s43 + $0x264] sm:$0xf]
  %v2803 = vld [vmem:[%s43 + $0x268] sm:$0xf]
  %v2804 = vld [vmem:[%s43 + $0x26c] sm:$0xf]
  %v2805 = vld [vmem:[%s43 + $0x270] sm:$0xf]
  %v2806 = vld [vmem:[%s43 + $0x274] sm:$0xf]
  %v2807 = vld [vmem:[%s43 + $0x278] sm:$0xf]
  %v2808 = vld [vmem:[%s43 + $0x27c] sm:$0xf]
  %v2809 = vld [vmem:[%s43 + $0x280] sm:$0xf]
  %v2810 = vld [vmem:[%s43 + $0x284] sm:$0xf]
  %v2811 = vld [vmem:[%s43 + $0x288] sm:$0xf]
  %v2812 = vld [vmem:[%s43 + $0x28c] sm:$0xf]
  %v2813 = vld [vmem:[%s43 + $0x290] sm:$0xf]
  %v2814 = vld [vmem:[%s43 + $0x294] sm:$0xf]
  %v2815 = vld [vmem:[%s43 + $0x298] sm:$0xf]
  %v2816 = vld [vmem:[%s43 + $0x29c] sm:$0xf]
  %v2817 = vld [vmem:[%s43 + $0x2a0] sm:$0xf]
  %v2818 = vld [vmem:[%s43 + $0x2a4] sm:$0xf]
  %v2819 = vld [vmem:[%s43 + $0x2a8] sm:$0xf]
  %v2820 = vld [vmem:[%s43 + $0x2ac] sm:$0xf]
  %v2821 = vld [vmem:[%s43 + $0x2b0] sm:$0xf]
  %v2822 = vld [vmem:[%s43 + $0x2b4] sm:$0xf]
  %v2823 = vld [vmem:[%s43 + $0x2b8] sm:$0xf]
  %v2824 = vld [vmem:[%s43 + $0x2bc] sm:$0xf]
  %v2825 = vld [vmem:[%s43 + $0x2c0] sm:$0xf]
  %v2826 = vld [vmem:[%s43 + $0x2c4] sm:$0xf]
  %v2827 = vld [vmem:[%s43 + $0x2c8] sm:$0xf]
  %v2828 = vld [vmem:[%s43 + $0x2cc] sm:$0xf]
  %v2829 = vld [vmem:[%s43 + $0x2d0] sm:$0xf]
  %v2830 = vld [vmem:[%s43 + $0x2d4] sm:$0xf]
  %v2831 = vld [vmem:[%s43 + $0x2d8] sm:$0xf]
  %v2832 = vld [vmem:[%s43 + $0x2dc] sm:$0xf]
  %v2833 = vld [vmem:[%s43 + $0x2e0] sm:$0xf]
  %v2834 = vld [vmem:[%s43 + $0x2e4] sm:$0xf]
  %v2835 = vld [vmem:[%s43 + $0x2e8] sm:$0xf]
  %v2836 = vld [vmem:[%s43 + $0x2ec] sm:$0xf]
  %v2837 = vld [vmem:[%s43 + $0x2f0] sm:$0xf]
  %v2838 = vld [vmem:[%s43 + $0x2f4] sm:$0xf]
  %v2839 = vld [vmem:[%s43 + $0x2f8] sm:$0xf]
  %v2840 = vld [vmem:[%s43 + $0x2fc] sm:$0xf]
  %v2841 = vld [vmem:[%s43 + $0x300] sm:$0xf]
  %v2842 = vld [vmem:[%s43 + $0x304] sm:$0xf]
  %v2843 = vld [vmem:[%s43 + $0x308] sm:$0xf]
  %v2844 = vld [vmem:[%s43 + $0x30c] sm:$0xf]
  %v2845 = vld [vmem:[%s43 + $0x310] sm:$0xf]
  %v2846 = vld [vmem:[%s43 + $0x314] sm:$0xf]
  %v2847 = vld [vmem:[%s43 + $0x318] sm:$0xf]
  %v2848 = vld [vmem:[%s43 + $0x31c] sm:$0xf]
  %v2849 = vld [vmem:[%s43 + $0x320] sm:$0xf]
  %v2850 = vld [vmem:[%s43 + $0x324] sm:$0xf]
  %v2851 = vld [vmem:[%s43 + $0x328] sm:$0xf]
  %v2852 = vld [vmem:[%s43 + $0x32c] sm:$0xf]
  %v2853 = vld [vmem:[%s43 + $0x330] sm:$0xf]
  %v2854 = vld [vmem:[%s43 + $0x334] sm:$0xf]
  %v2855 = vld [vmem:[%s43 + $0x338] sm:$0xf]
  %v2856 = vld [vmem:[%s43 + $0x33c] sm:$0xf]
  %v2857 = vld [vmem:[%s43 + $0x340] sm:$0xf]
  %v2858 = vld [vmem:[%s43 + $0x344] sm:$0xf]
  %v2859 = vld [vmem:[%s43 + $0x348] sm:$0xf]
  %v2860 = vld [vmem:[%s43 + $0x34c] sm:$0xf]
  %v2861 = vld [vmem:[%s43 + $0x350] sm:$0xf]
  %v2862 = vld [vmem:[%s43 + $0x354] sm:$0xf]
  %v2863 = vld [vmem:[%s43 + $0x358] sm:$0xf]
  %v2864 = vld [vmem:[%s43 + $0x35c] sm:$0xf]
  %v2865 = vld [vmem:[%s43 + $0x360] sm:$0xf]
  %v2866 = vld [vmem:[%s43 + $0x364] sm:$0xf]
  %v2867 = vld [vmem:[%s43 + $0x368] sm:$0xf]
  %v2868 = vld [vmem:[%s43 + $0x36c] sm:$0xf]
  %v2869 = vld [vmem:[%s43 + $0x370] sm:$0xf]
  %v2870 = vld [vmem:[%s43 + $0x374] sm:$0xf]
  %v2871 = vld [vmem:[%s43 + $0x378] sm:$0xf]
  %v2872 = vld [vmem:[%s43 + $0x37c] sm:$0xf]
  %v2873 = vld [vmem:[%s43 + $0x380] sm:$0xf]
  %v2874 = vld [vmem:[%s43 + $0x384] sm:$0xf]
  %v2875 = vld [vmem:[%s43 + $0x388] sm:$0xf]
  %v2876 = vld [vmem:[%s43 + $0x38c] sm:$0xf]
  %v2877 = vld [vmem:[%s43 + $0x390] sm:$0xf]
  %v2878 = vld [vmem:[%s43 + $0x394] sm:$0xf]
  %v2879 = vld [vmem:[%s43 + $0x398] sm:$0xf]
  %v2880 = vld [vmem:[%s43 + $0x39c] sm:$0xf]
  %v2881 = vld [vmem:[%s43 + $0x3a0] sm:$0xf]
  %v2882 = vld [vmem:[%s43 + $0x3a4] sm:$0xf]
  %v2883 = vld [vmem:[%s43 + $0x3a8] sm:$0xf]
  %v2884 = vld [vmem:[%s43 + $0x3ac] sm:$0xf]
  %v2885 = vld [vmem:[%s43 + $0x3b0] sm:$0xf]
  %v2886 = vld [vmem:[%s43 + $0x3b4] sm:$0xf]
  %v2887 = vld [vmem:[%s43 + $0x3b8] sm:$0xf]
  %v2888 = vld [vmem:[%s43 + $0x3bc] sm:$0xf]
  %v2889 = vld [vmem:[%s43 + $0x3c0] sm:$0xf]
  %v2890 = vld [vmem:[%s43 + $0x3c4] sm:$0xf]
  %v2891 = vld [vmem:[%s43 + $0x3c8] sm:$0xf]
  %v2892 = vld [vmem:[%s43 + $0x3cc] sm:$0xf]
  %v2893 = vld [vmem:[%s43 + $0x3d0] sm:$0xf]
  %v2894 = vld [vmem:[%s43 + $0x3d4] sm:$0xf]
  %v2895 = vld [vmem:[%s43 + $0x3d8] sm:$0xf]
  %v2896 = vld [vmem:[%s43 + $0x3dc] sm:$0xf]
  %v2897 = vld [vmem:[%s43 + $0x3e0] sm:$0xf]
  %v2898 = vld [vmem:[%s43 + $0x3e4] sm:$0xf]
  %v2899 = vld [vmem:[%s43 + $0x3e8] sm:$0xf]
  %v2900 = vld [vmem:[%s43 + $0x3ec] sm:$0xf]
  %v2901 = vld [vmem:[%s43 + $0x3f0] sm:$0xf]
  %v2902 = vld [vmem:[%s43 + $0x3f4] sm:$0xf]
  %v2903 = vld [vmem:[%s43 + $0x3f8] sm:$0xf]
  %v2904 = vld [vmem:[%s43 + $0x3fc] sm:$0xf]
  %v2905 = vld [vmem:[%s45] sm:$0x1]
  %v2907 = vlaneseq
  %v2908 = vshrl.u32 %v2907, 7
  %v2909 = vsub.s32 0, %v2908
  %v2910 = vrot.slane %v2905, %v2909
  %v3168 = vunpack.c.l.b16 %v2649
  %v3169 = vunpack.c.l.b16 %v2650
  %v3170 = vunpack.c.l.b16 %v2651
  %v3171 = vunpack.c.l.b16 %v2652
  %v3172 = vunpack.c.l.b16 %v2653
  %v3173 = vunpack.c.l.b16 %v2654
  %v3174 = vunpack.c.l.b16 %v2655
  %v3175 = vunpack.c.l.b16 %v2656
  %v3176 = vunpack.c.l.b16 %v2657
  %v3177 = vunpack.c.l.b16 %v2658
  %v3178 = vunpack.c.l.b16 %v2659
  %v3179 = vunpack.c.l.b16 %v2660
  %v3180 = vunpack.c.l.b16 %v2661
  %v3181 = vunpack.c.l.b16 %v2662
  %v3182 = vunpack.c.l.b16 %v2663
  %v3183 = vunpack.c.l.b16 %v2664
  %v3184 = vunpack.c.l.b16 %v2665
  %v3185 = vunpack.c.l.b16 %v2666
  %v3186 = vunpack.c.l.b16 %v2667
  %v3187 = vunpack.c.l.b16 %v2668
  %v3188 = vunpack.c.l.b16 %v2669
  %v3189 = vunpack.c.l.b16 %v2670
  %v3190 = vunpack.c.l.b16 %v2671
  %v3191 = vunpack.c.l.b16 %v2672
  %v3192 = vunpack.c.l.b16 %v2673
  %v3193 = vunpack.c.l.b16 %v2674
  %v3194 = vunpack.c.l.b16 %v2675
  %v3195 = vunpack.c.l.b16 %v2676
  %v3196 = vunpack.c.l.b16 %v2677
  %v3197 = vunpack.c.l.b16 %v2678
  %v3198 = vunpack.c.l.b16 %v2679
  %v3199 = vunpack.c.l.b16 %v2680
  %v3200 = vunpack.c.l.b16 %v2681
  %v3201 = vunpack.c.l.b16 %v2682
  %v3202 = vunpack.c.l.b16 %v2683
  %v3203 = vunpack.c.l.b16 %v2684
  %v3204 = vunpack.c.l.b16 %v2685
  %v3205 = vunpack.c.l.b16 %v2686
  %v3206 = vunpack.c.l.b16 %v2687
  %v3207 = vunpack.c.l.b16 %v2688
  %v3208 = vunpack.c.l.b16 %v2689
  %v3209 = vunpack.c.l.b16 %v2690
  %v3210 = vunpack.c.l.b16 %v2691
  %v3211 = vunpack.c.l.b16 %v2692
  %v3212 = vunpack.c.l.b16 %v2693
  %v3213 = vunpack.c.l.b16 %v2694
  %v3214 = vunpack.c.l.b16 %v2695
  %v3215 = vunpack.c.l.b16 %v2696
  %v3216 = vunpack.c.l.b16 %v2697
  %v3217 = vunpack.c.l.b16 %v2698
  %v3218 = vunpack.c.l.b16 %v2699
  %v3219 = vunpack.c.l.b16 %v2700
  %v3220 = vunpack.c.l.b16 %v2701
  %v3221 = vunpack.c.l.b16 %v2702
  %v3222 = vunpack.c.l.b16 %v2703
  %v3223 = vunpack.c.l.b16 %v2704
  %v3224 = vunpack.c.l.b16 %v2705
  %v3225 = vunpack.c.l.b16 %v2706
  %v3226 = vunpack.c.l.b16 %v2707
  %v3227 = vunpack.c.l.b16 %v2708
  %v3228 = vunpack.c.l.b16 %v2709
  %v3229 = vunpack.c.l.b16 %v2710
  %v3230 = vunpack.c.l.b16 %v2711
  %v3231 = vunpack.c.l.b16 %v2712
  %v3232 = vunpack.c.l.b16 %v2713
  %v3233 = vunpack.c.l.b16 %v2714
  %v3234 = vunpack.c.l.b16 %v2715
  %v3235 = vunpack.c.l.b16 %v2716
  %v3236 = vunpack.c.l.b16 %v2717
  %v3237 = vunpack.c.l.b16 %v2718
  %v3238 = vunpack.c.l.b16 %v2719
  %v3239 = vunpack.c.l.b16 %v2720
  %v3240 = vunpack.c.l.b16 %v2721
  %v3241 = vunpack.c.l.b16 %v2722
  %v3242 = vunpack.c.l.b16 %v2723
  %v3243 = vunpack.c.l.b16 %v2724
  %v3244 = vunpack.c.l.b16 %v2725
  %v3245 = vunpack.c.l.b16 %v2726
  %v3246 = vunpack.c.l.b16 %v2727
  %v3247 = vunpack.c.l.b16 %v2728
  %v3248 = vunpack.c.l.b16 %v2729
  %v3249 = vunpack.c.l.b16 %v2730
  %v3250 = vunpack.c.l.b16 %v2731
  %v3251 = vunpack.c.l.b16 %v2732
  %v3252 = vunpack.c.l.b16 %v2733
  %v3253 = vunpack.c.l.b16 %v2734
  %v3254 = vunpack.c.l.b16 %v2735
  %v3255 = vunpack.c.l.b16 %v2736
  %v3256 = vunpack.c.l.b16 %v2737
  %v3257 = vunpack.c.l.b16 %v2738
  %v3258 = vunpack.c.l.b16 %v2739
  %v3259 = vunpack.c.l.b16 %v2740
  %v3260 = vunpack.c.l.b16 %v2741
  %v3261 = vunpack.c.l.b16 %v2742
  %v3262 = vunpack.c.l.b16 %v2743
  %v3263 = vunpack.c.l.b16 %v2744
  %v3264 = vunpack.c.l.b16 %v2745
  %v3265 = vunpack.c.l.b16 %v2746
  %v3266 = vunpack.c.l.b16 %v2747
  %v3267 = vunpack.c.l.b16 %v2748
  %v3268 = vunpack.c.l.b16 %v2749
  %v3269 = vunpack.c.l.b16 %v2750
  %v3270 = vunpack.c.l.b16 %v2751
  %v3271 = vunpack.c.l.b16 %v2752
  %v3272 = vunpack.c.l.b16 %v2753
  %v3273 = vunpack.c.l.b16 %v2754
  %v3274 = vunpack.c.l.b16 %v2755
  %v3275 = vunpack.c.l.b16 %v2756
  %v3276 = vunpack.c.l.b16 %v2757
  %v3277 = vunpack.c.l.b16 %v2758
  %v3278 = vunpack.c.l.b16 %v2759
  %v3279 = vunpack.c.l.b16 %v2760
  %v3280 = vunpack.c.l.b16 %v2761
  %v3281 = vunpack.c.l.b16 %v2762
  %v3282 = vunpack.c.l.b16 %v2763
  %v3283 = vunpack.c.l.b16 %v2764
  %v3284 = vunpack.c.l.b16 %v2765
  %v3285 = vunpack.c.l.b16 %v2766
  %v3286 = vunpack.c.l.b16 %v2767
  %v3287 = vunpack.c.l.b16 %v2768
  %v3288 = vunpack.c.l.b16 %v2769
  %v3289 = vunpack.c.l.b16 %v2770
  %v3290 = vunpack.c.l.b16 %v2771
  %v3291 = vunpack.c.l.b16 %v2772
  %v3292 = vunpack.c.l.b16 %v2773
  %v3293 = vunpack.c.l.b16 %v2774
  %v3294 = vunpack.c.l.b16 %v2775
  %v3295 = vunpack.c.l.b16 %v2776
  %v3296 = vunpack.c.l.b16 %v2777
  %v3297 = vunpack.c.l.b16 %v2778
  %v3298 = vunpack.c.l.b16 %v2779
  %v3299 = vunpack.c.l.b16 %v2780
  %v3300 = vunpack.c.l.b16 %v2781
  %v3301 = vunpack.c.l.b16 %v2782
  %v3302 = vunpack.c.l.b16 %v2783
  %v3303 = vunpack.c.l.b16 %v2784
  %v3304 = vunpack.c.l.b16 %v2785
  %v3305 = vunpack.c.l.b16 %v2786
  %v3306 = vunpack.c.l.b16 %v2787
  %v3307 = vunpack.c.l.b16 %v2788
  %v3308 = vunpack.c.l.b16 %v2789
  %v3309 = vunpack.c.l.b16 %v2790
  %v3310 = vunpack.c.l.b16 %v2791
  %v3311 = vunpack.c.l.b16 %v2792
  %v3312 = vunpack.c.l.b16 %v2793
  %v3313 = vunpack.c.l.b16 %v2794
  %v3314 = vunpack.c.l.b16 %v2795
  %v3315 = vunpack.c.l.b16 %v2796
  %v3316 = vunpack.c.l.b16 %v2797
  %v3317 = vunpack.c.l.b16 %v2798
  %v3318 = vunpack.c.l.b16 %v2799
  %v3319 = vunpack.c.l.b16 %v2800
  %v3320 = vunpack.c.l.b16 %v2801
  %v3321 = vunpack.c.l.b16 %v2802
  %v3322 = vunpack.c.l.b16 %v2803
  %v3323 = vunpack.c.l.b16 %v2804
  %v3324 = vunpack.c.l.b16 %v2805
  %v3325 = vunpack.c.l.b16 %v2806
  %v3326 = vunpack.c.l.b16 %v2807
  %v3327 = vunpack.c.l.b16 %v2808
  %v3328 = vunpack.c.l.b16 %v2809
  %v3329 = vunpack.c.l.b16 %v2810
  %v3330 = vunpack.c.l.b16 %v2811
  %v3331 = vunpack.c.l.b16 %v2812
  %v3332 = vunpack.c.l.b16 %v2813
  %v3333 = vunpack.c.l.b16 %v2814
  %v3334 = vunpack.c.l.b16 %v2815
  %v3335 = vunpack.c.l.b16 %v2816
  %v3336 = vunpack.c.l.b16 %v2817
  %v3337 = vunpack.c.l.b16 %v2818
  %v3338 = vunpack.c.l.b16 %v2819
  %v3339 = vunpack.c.l.b16 %v2820
  %v3340 = vunpack.c.l.b16 %v2821
  %v3341 = vunpack.c.l.b16 %v2822
  %v3342 = vunpack.c.l.b16 %v2823
  %v3343 = vunpack.c.l.b16 %v2824
  %v3344 = vunpack.c.l.b16 %v2825
  %v3345 = vunpack.c.l.b16 %v2826
  %v3346 = vunpack.c.l.b16 %v2827
  %v3347 = vunpack.c.l.b16 %v2828
  %v3348 = vunpack.c.l.b16 %v2829
  %v3349 = vunpack.c.l.b16 %v2830
  %v3350 = vunpack.c.l.b16 %v2831
  %v3351 = vunpack.c.l.b16 %v2832
  %v3352 = vunpack.c.l.b16 %v2833
  %v3353 = vunpack.c.l.b16 %v2834
  %v3354 = vunpack.c.l.b16 %v2835
  %v3355 = vunpack.c.l.b16 %v2836
  %v3356 = vunpack.c.l.b16 %v2837
  %v3357 = vunpack.c.l.b16 %v2838
  %v3358 = vunpack.c.l.b16 %v2839
  %v3359 = vunpack.c.l.b16 %v2840
  %v3360 = vunpack.c.l.b16 %v2841
  %v3361 = vunpack.c.l.b16 %v2842
  %v3362 = vunpack.c.l.b16 %v2843
  %v3363 = vunpack.c.l.b16 %v2844
  %v3364 = vunpack.c.l.b16 %v2845
  %v3365 = vunpack.c.l.b16 %v2846
  %v3366 = vunpack.c.l.b16 %v2847
  %v3367 = vunpack.c.l.b16 %v2848
  %v3368 = vunpack.c.l.b16 %v2849
  %v3369 = vunpack.c.l.b16 %v2850
  %v3370 = vunpack.c.l.b16 %v2851
  %v3371 = vunpack.c.l.b16 %v2852
  %v3372 = vunpack.c.l.b16 %v2853
  %v3373 = vunpack.c.l.b16 %v2854
  %v3374 = vunpack.c.l.b16 %v2855
  %v3375 = vunpack.c.l.b16 %v2856
  %v3376 = vunpack.c.l.b16 %v2857
  %v3377 = vunpack.c.l.b16 %v2858
  %v3378 = vunpack.c.l.b16 %v2859
  %v3379 = vunpack.c.l.b16 %v2860
  %v3380 = vunpack.c.l.b16 %v2861
  %v3381 = vunpack.c.l.b16 %v2862
  %v3382 = vunpack.c.l.b16 %v2863
  %v3383 = vunpack.c.l.b16 %v2864
  %v3384 = vunpack.c.l.b16 %v2865
  %v3385 = vunpack.c.l.b16 %v2866
  %v3386 = vunpack.c.l.b16 %v2867
  %v3387 = vunpack.c.l.b16 %v2868
  %v3388 = vunpack.c.l.b16 %v2869
  %v3389 = vunpack.c.l.b16 %v2870
  %v3390 = vunpack.c.l.b16 %v2871
  %v3391 = vunpack.c.l.b16 %v2872
  %v3392 = vunpack.c.l.b16 %v2873
  %v3393 = vunpack.c.l.b16 %v2874
  %v3394 = vunpack.c.l.b16 %v2875
  %v3395 = vunpack.c.l.b16 %v2876
  %v3396 = vunpack.c.l.b16 %v2877
  %v3397 = vunpack.c.l.b16 %v2878
  %v3398 = vunpack.c.l.b16 %v2879
  %v3399 = vunpack.c.l.b16 %v2880
  %v3400 = vunpack.c.l.b16 %v2881
  %v3401 = vunpack.c.l.b16 %v2882
  %v3402 = vunpack.c.l.b16 %v2883
  %v3403 = vunpack.c.l.b16 %v2884
  %v3404 = vunpack.c.l.b16 %v2885
  %v3405 = vunpack.c.l.b16 %v2886
  %v3406 = vunpack.c.l.b16 %v2887
  %v3407 = vunpack.c.l.b16 %v2888
  %v3408 = vunpack.c.l.b16 %v2889
  %v3409 = vunpack.c.l.b16 %v2890
  %v3410 = vunpack.c.l.b16 %v2891
  %v3411 = vunpack.c.l.b16 %v2892
  %v3412 = vunpack.c.l.b16 %v2893
  %v3413 = vunpack.c.l.b16 %v2894
  %v3414 = vunpack.c.l.b16 %v2895
  %v3415 = vunpack.c.l.b16 %v2896
  %v3416 = vunpack.c.l.b16 %v2897
  %v3417 = vunpack.c.l.b16 %v2898
  %v3418 = vunpack.c.l.b16 %v2899
  %v3419 = vunpack.c.l.b16 %v2900
  %v3420 = vunpack.c.l.b16 %v2901
  %v3421 = vunpack.c.l.b16 %v2902
  %v3422 = vunpack.c.l.b16 %v2903
  %v3423 = vunpack.c.l.b16 %v2904
  %v3424 = vpack.c.b16 %v3169, %v3168
  %v3425 = vpack.c.b16 %v3171, %v3170
  %v3426 = vpack.c.b16 %v3173, %v3172
  %v3427 = vpack.c.b16 %v3175, %v3174
  %v3428 = vpack.c.b16 %v3177, %v3176
  %v3429 = vpack.c.b16 %v3179, %v3178
  %v3430 = vpack.c.b16 %v3181, %v3180
  %v3431 = vpack.c.b16 %v3183, %v3182
  %v3432 = vpack.c.b16 %v3185, %v3184
  %v3433 = vpack.c.b16 %v3187, %v3186
  %v3434 = vpack.c.b16 %v3189, %v3188
  %v3435 = vpack.c.b16 %v3191, %v3190
  %v3436 = vpack.c.b16 %v3193, %v3192
  %v3437 = vpack.c.b16 %v3195, %v3194
  %v3438 = vpack.c.b16 %v3197, %v3196
  %v3439 = vpack.c.b16 %v3199, %v3198
  %v3440 = vpack.c.b16 %v3201, %v3200
  %v3441 = vpack.c.b16 %v3203, %v3202
  %v3442 = vpack.c.b16 %v3205, %v3204
  %v3443 = vpack.c.b16 %v3207, %v3206
  %v3444 = vpack.c.b16 %v3209, %v3208
  %v3445 = vpack.c.b16 %v3211, %v3210
  %v3446 = vpack.c.b16 %v3213, %v3212
  %v3447 = vpack.c.b16 %v3215, %v3214
  %v3448 = vpack.c.b16 %v3217, %v3216
  %v3449 = vpack.c.b16 %v3219, %v3218
  %v3450 = vpack.c.b16 %v3221, %v3220
  %v3451 = vpack.c.b16 %v3223, %v3222
  %v3452 = vpack.c.b16 %v3225, %v3224
  %v3453 = vpack.c.b16 %v3227, %v3226
  %v3454 = vpack.c.b16 %v3229, %v3228
  %v3455 = vpack.c.b16 %v3231, %v3230
  %v3456 = vpack.c.b16 %v3233, %v3232
  %v3457 = vpack.c.b16 %v3235, %v3234
  %v3458 = vpack.c.b16 %v3237, %v3236
  %v3459 = vpack.c.b16 %v3239, %v3238
  %v3460 = vpack.c.b16 %v3241, %v3240
  %v3461 = vpack.c.b16 %v3243, %v3242
  %v3462 = vpack.c.b16 %v3245, %v3244
  %v3463 = vpack.c.b16 %v3247, %v3246
  %v3464 = vpack.c.b16 %v3249, %v3248
  %v3465 = vpack.c.b16 %v3251, %v3250
  %v3466 = vpack.c.b16 %v3253, %v3252
  %v3467 = vpack.c.b16 %v3255, %v3254
  %v3468 = vpack.c.b16 %v3257, %v3256
  %v3469 = vpack.c.b16 %v3259, %v3258
  %v3470 = vpack.c.b16 %v3261, %v3260
  %v3471 = vpack.c.b16 %v3263, %v3262
  %v3472 = vpack.c.b16 %v3265, %v3264
  %v3473 = vpack.c.b16 %v3267, %v3266
  %v3474 = vpack.c.b16 %v3269, %v3268
  %v3475 = vpack.c.b16 %v3271, %v3270
  %v3476 = vpack.c.b16 %v3273, %v3272
  %v3477 = vpack.c.b16 %v3275, %v3274
  %v3478 = vpack.c.b16 %v3277, %v3276
  %v3479 = vpack.c.b16 %v3279, %v3278
  %v3480 = vpack.c.b16 %v3281, %v3280
  %v3481 = vpack.c.b16 %v3283, %v3282
  %v3482 = vpack.c.b16 %v3285, %v3284
  %v3483 = vpack.c.b16 %v3287, %v3286
  %v3484 = vpack.c.b16 %v3289, %v3288
  %v3485 = vpack.c.b16 %v3291, %v3290
  %v3486 = vpack.c.b16 %v3293, %v3292
  %v3487 = vpack.c.b16 %v3295, %v3294
  %v3488 = vpack.c.b16 %v3297, %v3296
  %v3489 = vpack.c.b16 %v3299, %v3298
  %v3490 = vpack.c.b16 %v3301, %v3300
  %v3491 = vpack.c.b16 %v3303, %v3302
  %v3492 = vpack.c.b16 %v3305, %v3304
  %v3493 = vpack.c.b16 %v3307, %v3306
  %v3494 = vpack.c.b16 %v3309, %v3308
  %v3495 = vpack.c.b16 %v3311, %v3310
  %v3496 = vpack.c.b16 %v3313, %v3312
  %v3497 = vpack.c.b16 %v3315, %v3314
  %v3498 = vpack.c.b16 %v3317, %v3316
  %v3499 = vpack.c.b16 %v3319, %v3318
  %v3500 = vpack.c.b16 %v3321, %v3320
  %v3501 = vpack.c.b16 %v3323, %v3322
  %v3502 = vpack.c.b16 %v3325, %v3324
  %v3503 = vpack.c.b16 %v3327, %v3326
  %v3504 = vpack.c.b16 %v3329, %v3328
  %v3505 = vpack.c.b16 %v3331, %v3330
  %v3506 = vpack.c.b16 %v3333, %v3332
  %v3507 = vpack.c.b16 %v3335, %v3334
  %v3508 = vpack.c.b16 %v3337, %v3336
  %v3509 = vpack.c.b16 %v3339, %v3338
  %v3510 = vpack.c.b16 %v3341, %v3340
  %v3511 = vpack.c.b16 %v3343, %v3342
  %v3512 = vpack.c.b16 %v3345, %v3344
  %v3513 = vpack.c.b16 %v3347, %v3346
  %v3514 = vpack.c.b16 %v3349, %v3348
  %v3515 = vpack.c.b16 %v3351, %v3350
  %v3516 = vpack.c.b16 %v3353, %v3352
  %v3517 = vpack.c.b16 %v3355, %v3354
  %v3518 = vpack.c.b16 %v3357, %v3356
  %v3519 = vpack.c.b16 %v3359, %v3358
  %v3520 = vpack.c.b16 %v3361, %v3360
  %v3521 = vpack.c.b16 %v3363, %v3362
  %v3522 = vpack.c.b16 %v3365, %v3364
  %v3523 = vpack.c.b16 %v3367, %v3366
  %v3524 = vpack.c.b16 %v3369, %v3368
  %v3525 = vpack.c.b16 %v3371, %v3370
  %v3526 = vpack.c.b16 %v3373, %v3372
  %v3527 = vpack.c.b16 %v3375, %v3374
  %v3528 = vpack.c.b16 %v3377, %v3376
  %v3529 = vpack.c.b16 %v3379, %v3378
  %v3530 = vpack.c.b16 %v3381, %v3380
  %v3531 = vpack.c.b16 %v3383, %v3382
  %v3532 = vpack.c.b16 %v3385, %v3384
  %v3533 = vpack.c.b16 %v3387, %v3386
  %v3534 = vpack.c.b16 %v3389, %v3388
  %v3535 = vpack.c.b16 %v3391, %v3390
  %v3536 = vpack.c.b16 %v3393, %v3392
  %v3537 = vpack.c.b16 %v3395, %v3394
  %v3538 = vpack.c.b16 %v3397, %v3396
  %v3539 = vpack.c.b16 %v3399, %v3398
  %v3540 = vpack.c.b16 %v3401, %v3400
  %v3541 = vpack.c.b16 %v3403, %v3402
  %v3542 = vpack.c.b16 %v3405, %v3404
  %v3543 = vpack.c.b16 %v3407, %v3406
  %v3544 = vpack.c.b16 %v3409, %v3408
  %v3545 = vpack.c.b16 %v3411, %v3410
  %v3546 = vpack.c.b16 %v3413, %v3412
  %v3547 = vpack.c.b16 %v3415, %v3414
  %v3548 = vpack.c.b16 %v3417, %v3416
  %v3549 = vpack.c.b16 %v3419, %v3418
  %v3550 = vpack.c.b16 %v3421, %v3420
  %v3551 = vpack.c.b16 %v3423, %v3422
  %3680 = vmatprep.subr.bf16.mxu0 0
  %3681 = vmatpush1.bf16.msra.mxu0 %v3431
  %3682 = vmatprep.subr.bf16.mxu0 0
  %3683 = vmatpush1.bf16.msra.mxu0 %v3430
  %3684 = vmatprep.subr.bf16.mxu0 0
  %3685 = vmatpush1.bf16.msra.mxu0 %v3429
  %3686 = vmatprep.subr.bf16.mxu0 0
  %3687 = vmatpush1.bf16.msra.mxu0 %v3428
  %3688 = vmatprep.subr.bf16.mxu0 0
  %3689 = vmatpush1.bf16.msra.mxu0 %v3427
  %3690 = vmatprep.subr.bf16.mxu0 0
  %3691 = vmatpush1.bf16.msra.mxu0 %v3426
  %3692 = vmatprep.subr.bf16.mxu0 0
  %3693 = vmatpush1.bf16.msra.mxu0 %v3425
  %3694 = vmatprep.subr.bf16.mxu0 0
  %3695 = vmatpush1.bf16.msra.mxu0 %v3424
  %3696 = vmatprep.subr.bf16.mxu0 0
  %3697 = vmatpush2.bf16.msra.mxu0 %v3439
  %3698 = vmatprep.subr.bf16.mxu0 0
  %3699 = vmatpush2.bf16.msra.mxu0 %v3438
  %3700 = vmatprep.subr.bf16.mxu0 0
  %3701 = vmatpush2.bf16.msra.mxu0 %v3437
  %3702 = vmatprep.subr.bf16.mxu0 0
  %3703 = vmatpush2.bf16.msra.mxu0 %v3436
  %3704 = vmatprep.subr.bf16.mxu0 0
  %3705 = vmatpush2.bf16.msra.mxu0 %v3435
  %3706 = vmatprep.subr.bf16.mxu0 0
  %3707 = vmatpush2.bf16.msra.mxu0 %v3434
  %3708 = vmatprep.subr.bf16.mxu0 0
  %3709 = vmatpush2.bf16.msra.mxu0 %v3433
  %3710 = vmatprep.subr.bf16.mxu0 0
  %3711 = vmatpush2.bf16.msra.mxu0 %v3432
  %3712 = vmatprep.mubr.bf16.mxu0 %v2618
  %3713 = vmatmul.mubr.bf16.gmra.mxu0 %v2617
  %v3714 = vpop.f32.mrf.mxu0
  %v3715 = vadd.f32 %v2910, %v3714
  %v3716 = vpop.f32.mrf.mxu0
  %v3717 = vpop.f32.mrf.mxu0
  %v3718 = vadd.f32 %v2910, %v3717
  %v3719 = vpop.f32.mrf.mxu0
  %3720 = vmatprep.mubr.bf16.mxu0 %v2634
  %3721 = vmatmul.mubr.bf16.gmra.mxu0 %v2633
  %v3722 = vpop.f32.mrf.mxu0
  %v3723 = vadd.f32 %v2910, %v3722
  %v3724 = vpop.f32.mrf.mxu0
  %v3725 = vpop.f32.mrf.mxu0
  %v3726 = vpop.f32.mrf.mxu0
  %3727 = vdwg.mxu0
  %3728 = vmatprep.subr.bf16.mxu0 0
  %3729 = vmatpush1.bf16.msra.mxu0 %v3447
  %3730 = vmatprep.subr.bf16.mxu0 0
  %3731 = vmatpush1.bf16.msra.mxu0 %v3446
  %3732 = vmatprep.subr.bf16.mxu0 0
  %3733 = vmatpush1.bf16.msra.mxu0 %v3445
  %3734 = vmatprep.subr.bf16.mxu0 0
  %3735 = vmatpush1.bf16.msra.mxu0 %v3444
  %3736 = vmatprep.subr.bf16.mxu0 0
  %3737 = vmatpush1.bf16.msra.mxu0 %v3443
  %3738 = vmatprep.subr.bf16.mxu0 0
  %3739 = vmatpush1.bf16.msra.mxu0 %v3442
  %3740 = vmatprep.subr.bf16.mxu0 0
  %3741 = vmatpush1.bf16.msra.mxu0 %v3441
  %3742 = vmatprep.subr.bf16.mxu0 0
  %3743 = vmatpush1.bf16.msra.mxu0 %v3440
  %3744 = vmatprep.subr.bf16.mxu0 0
  %3745 = vmatpush2.bf16.msra.mxu0 %v3455
  %3746 = vmatprep.subr.bf16.mxu0 0
  %3747 = vmatpush2.bf16.msra.mxu0 %v3454
  %3748 = vmatprep.subr.bf16.mxu0 0
  %3749 = vmatpush2.bf16.msra.mxu0 %v3453
  %3750 = vmatprep.subr.bf16.mxu0 0
  %3751 = vmatpush2.bf16.msra.mxu0 %v3452
  %3752 = vmatprep.subr.bf16.mxu0 0
  %3753 = vmatpush2.bf16.msra.mxu0 %v3451
  %3754 = vmatprep.subr.bf16.mxu0 0
  %3755 = vmatpush2.bf16.msra.mxu0 %v3450
  %3756 = vmatprep.subr.bf16.mxu0 0
  %3757 = vmatpush2.bf16.msra.mxu0 %v3449
  %3758 = vmatprep.subr.bf16.mxu0 0
  %3759 = vmatpush2.bf16.msra.mxu0 %v3448
  %3760 = vmatprep.mubr.bf16.mxu0 %v2620
  %3761 = vmatmul.mubr.bf16.gmra.mxu0 %v2619
  %v3762 = vpop.f32.mrf.mxu0
  %v3763 = vadd.f32 %v3715, %v3762
  %v3764 = vpop.f32.mrf.mxu0
  %v3765 = vpop.f32.mrf.mxu0
  %v3766 = vadd.f32 %v3718, %v3765
  %v3767 = vpop.f32.mrf.mxu0
  %3768 = vmatprep.mubr.bf16.mxu0 %v2636
  %3769 = vmatmul.mubr.bf16.gmra.mxu0 %v2635
  %v3770 = vpop.f32.mrf.mxu0
  %v3771 = vadd.f32 %v3723, %v3770
  %v3772 = vpop.f32.mrf.mxu0
  %v3773 = vpop.f32.mrf.mxu0
  %v3774 = vpop.f32.mrf.mxu0
  %3775 = vdwg.mxu0
  %3776 = vmatprep.subr.bf16.mxu0 0
  %3777 = vmatpush1.bf16.msra.mxu0 %v3463
  %3778 = vmatprep.subr.bf16.mxu0 0
  %3779 = vmatpush1.bf16.msra.mxu0 %v3462
  %3780 = vmatprep.subr.bf16.mxu0 0
  %3781 = vmatpush1.bf16.msra.mxu0 %v3461
  %3782 = vmatprep.subr.bf16.mxu0 0
  %3783 = vmatpush1.bf16.msra.mxu0 %v3460
  %3784 = vmatprep.subr.bf16.mxu0 0
  %3785 = vmatpush1.bf16.msra.mxu0 %v3459
  %3786 = vmatprep.subr.bf16.mxu0 0
  %3787 = vmatpush1.bf16.msra.mxu0 %v3458
  %3788 = vmatprep.subr.bf16.mxu0 0
  %3789 = vmatpush1.bf16.msra.mxu0 %v3457
  %3790 = vmatprep.subr.bf16.mxu0 0
  %3791 = vmatpush1.bf16.msra.mxu0 %v3456
  %3792 = vmatprep.subr.bf16.mxu0 0
  %3793 = vmatpush2.bf16.msra.mxu0 %v3471
  %3794 = vmatprep.subr.bf16.mxu0 0
  %3795 = vmatpush2.bf16.msra.mxu0 %v3470
  %3796 = vmatprep.subr.bf16.mxu0 0
  %3797 = vmatpush2.bf16.msra.mxu0 %v3469
  %3798 = vmatprep.subr.bf16.mxu0 0
  %3799 = vmatpush2.bf16.msra.mxu0 %v3468
  %3800 = vmatprep.subr.bf16.mxu0 0
  %3801 = vmatpush2.bf16.msra.mxu0 %v3467
  %3802 = vmatprep.subr.bf16.mxu0 0
  %3803 = vmatpush2.bf16.msra.mxu0 %v3466
  %3804 = vmatprep.subr.bf16.mxu0 0
  %3805 = vmatpush2.bf16.msra.mxu0 %v3465
  %3806 = vmatprep.subr.bf16.mxu0 0
  %3807 = vmatpush2.bf16.msra.mxu0 %v3464
  %3808 = vmatprep.mubr.bf16.mxu0 %v2622
  %3809 = vmatmul.mubr.bf16.gmra.mxu0 %v2621
  %v3810 = vpop.f32.mrf.mxu0
  %v3811 = vadd.f32 %v3763, %v3810
  %v3812 = vpop.f32.mrf.mxu0
  %v3813 = vpop.f32.mrf.mxu0
  %v3814 = vadd.f32 %v3766, %v3813
  %v3815 = vpop.f32.mrf.mxu0
  %3816 = vmatprep.mubr.bf16.mxu0 %v2638
  %3817 = vmatmul.mubr.bf16.gmra.mxu0 %v2637
  %v3818 = vpop.f32.mrf.mxu0
  %v3819 = vadd.f32 %v3771, %v3818
  %v3820 = vpop.f32.mrf.mxu0
  %v3821 = vpop.f32.mrf.mxu0
  %v3822 = vpop.f32.mrf.mxu0
  %3823 = vdwg.mxu0
  %3824 = vmatprep.subr.bf16.mxu0 0
  %3825 = vmatpush1.bf16.msra.mxu0 %v3479
  %3826 = vmatprep.subr.bf16.mxu0 0
  %3827 = vmatpush1.bf16.msra.mxu0 %v3478
  %3828 = vmatprep.subr.bf16.mxu0 0
  %3829 = vmatpush1.bf16.msra.mxu0 %v3477
  %3830 = vmatprep.subr.bf16.mxu0 0
  %3831 = vmatpush1.bf16.msra.mxu0 %v3476
  %3832 = vmatprep.subr.bf16.mxu0 0
  %3833 = vmatpush1.bf16.msra.mxu0 %v3475
  %3834 = vmatprep.subr.bf16.mxu0 0
  %3835 = vmatpush1.bf16.msra.mxu0 %v3474
  %3836 = vmatprep.subr.bf16.mxu0 0
  %3837 = vmatpush1.bf16.msra.mxu0 %v3473
  %3838 = vmatprep.subr.bf16.mxu0 0
  %3839 = vmatpush1.bf16.msra.mxu0 %v3472
  %3840 = vmatprep.subr.bf16.mxu0 0
  %3841 = vmatpush2.bf16.msra.mxu0 %v3487
  %3842 = vmatprep.subr.bf16.mxu0 0
  %3843 = vmatpush2.bf16.msra.mxu0 %v3486
  %3844 = vmatprep.subr.bf16.mxu0 0
  %3845 = vmatpush2.bf16.msra.mxu0 %v3485
  %3846 = vmatprep.subr.bf16.mxu0 0
  %3847 = vmatpush2.bf16.msra.mxu0 %v3484
  %3848 = vmatprep.subr.bf16.mxu0 0
  %3849 = vmatpush2.bf16.msra.mxu0 %v3483
  %3850 = vmatprep.subr.bf16.mxu0 0
  %3851 = vmatpush2.bf16.msra.mxu0 %v3482
  %3852 = vmatprep.subr.bf16.mxu0 0
  %3853 = vmatpush2.bf16.msra.mxu0 %v3481
  %3854 = vmatprep.subr.bf16.mxu0 0
  %3855 = vmatpush2.bf16.msra.mxu0 %v3480
  %3856 = vmatprep.mubr.bf16.mxu0 %v2624
  %3857 = vmatmul.mubr.bf16.gmra.mxu0 %v2623
  %v3858 = vpop.f32.mrf.mxu0
  %v3859 = vadd.f32 %v3811, %v3858
  %v3860 = vpop.f32.mrf.mxu0
  %v3861 = vpop.f32.mrf.mxu0
  %v3862 = vadd.f32 %v3814, %v3861
  %v3863 = vpop.f32.mrf.mxu0
  %3864 = vmatprep.mubr.bf16.mxu0 %v2640
  %3865 = vmatmul.mubr.bf16.gmra.mxu0 %v2639
  %v3866 = vpop.f32.mrf.mxu0
  %v3867 = vadd.f32 %v3819, %v3866
  %v3868 = vpop.f32.mrf.mxu0
  %v3869 = vpop.f32.mrf.mxu0
  %v3870 = vpop.f32.mrf.mxu0
  %3871 = vdwg.mxu0
  %3872 = vmatprep.subr.bf16.mxu0 0
  %3873 = vmatpush1.bf16.msra.mxu0 %v3495
  %3874 = vmatprep.subr.bf16.mxu0 0
  %3875 = vmatpush1.bf16.msra.mxu0 %v3494
  %3876 = vmatprep.subr.bf16.mxu0 0
  %3877 = vmatpush1.bf16.msra.mxu0 %v3493
  %3878 = vmatprep.subr.bf16.mxu0 0
  %3879 = vmatpush1.bf16.msra.mxu0 %v3492
  %3880 = vmatprep.subr.bf16.mxu0 0
  %3881 = vmatpush1.bf16.msra.mxu0 %v3491
  %3882 = vmatprep.subr.bf16.mxu0 0
  %3883 = vmatpush1.bf16.msra.mxu0 %v3490
  %3884 = vmatprep.subr.bf16.mxu0 0
  %3885 = vmatpush1.bf16.msra.mxu0 %v3489
  %3886 = vmatprep.subr.bf16.mxu0 0
  %3887 = vmatpush1.bf16.msra.mxu0 %v3488
  %3888 = vmatprep.subr.bf16.mxu0 0
  %3889 = vmatpush2.bf16.msra.mxu0 %v3503
  %3890 = vmatprep.subr.bf16.mxu0 0
  %3891 = vmatpush2.bf16.msra.mxu0 %v3502
  %3892 = vmatprep.subr.bf16.mxu0 0
  %3893 = vmatpush2.bf16.msra.mxu0 %v3501
  %3894 = vmatprep.subr.bf16.mxu0 0
  %3895 = vmatpush2.bf16.msra.mxu0 %v3500
  %3896 = vmatprep.subr.bf16.mxu0 0
  %3897 = vmatpush2.bf16.msra.mxu0 %v3499
  %3898 = vmatprep.subr.bf16.mxu0 0
  %3899 = vmatpush2.bf16.msra.mxu0 %v3498
  %3900 = vmatprep.subr.bf16.mxu0 0
  %3901 = vmatpush2.bf16.msra.mxu0 %v3497
  %3902 = vmatprep.subr.bf16.mxu0 0
  %3903 = vmatpush2.bf16.msra.mxu0 %v3496
  %3904 = vmatprep.mubr.bf16.mxu0 %v2626
  %3905 = vmatmul.mubr.bf16.gmra.mxu0 %v2625
  %v3906 = vpop.f32.mrf.mxu0
  %v3907 = vadd.f32 %v3859, %v3906
  %v3908 = vpop.f32.mrf.mxu0
  %v3909 = vpop.f32.mrf.mxu0
  %v3910 = vadd.f32 %v3862, %v3909
  %v3911 = vpop.f32.mrf.mxu0
  %3912 = vmatprep.mubr.bf16.mxu0 %v2642
  %3913 = vmatmul.mubr.bf16.gmra.mxu0 %v2641
  %v3914 = vpop.f32.mrf.mxu0
  %v3915 = vadd.f32 %v3867, %v3914
  %v3916 = vpop.f32.mrf.mxu0
  %v3917 = vpop.f32.mrf.mxu0
  %v3918 = vpop.f32.mrf.mxu0
  %3919 = vdwg.mxu0
  %3920 = vmatprep.subr.bf16.mxu0 0
  %3921 = vmatpush1.bf16.msra.mxu0 %v3511
  %3922 = vmatprep.subr.bf16.mxu0 0
  %3923 = vmatpush1.bf16.msra.mxu0 %v3510
  %3924 = vmatprep.subr.bf16.mxu0 0
  %3925 = vmatpush1.bf16.msra.mxu0 %v3509
  %3926 = vmatprep.subr.bf16.mxu0 0
  %3927 = vmatpush1.bf16.msra.mxu0 %v3508
  %3928 = vmatprep.subr.bf16.mxu0 0
  %3929 = vmatpush1.bf16.msra.mxu0 %v3507
  %3930 = vmatprep.subr.bf16.mxu0 0
  %3931 = vmatpush1.bf16.msra.mxu0 %v3506
  %3932 = vmatprep.subr.bf16.mxu0 0
  %3933 = vmatpush1.bf16.msra.mxu0 %v3505
  %3934 = vmatprep.subr.bf16.mxu0 0
  %3935 = vmatpush1.bf16.msra.mxu0 %v3504
  %3936 = vmatprep.subr.bf16.mxu0 0
  %3937 = vmatpush2.bf16.msra.mxu0 %v3519
  %3938 = vmatprep.subr.bf16.mxu0 0
  %3939 = vmatpush2.bf16.msra.mxu0 %v3518
  %3940 = vmatprep.subr.bf16.mxu0 0
  %3941 = vmatpush2.bf16.msra.mxu0 %v3517
  %3942 = vmatprep.subr.bf16.mxu0 0
  %3943 = vmatpush2.bf16.msra.mxu0 %v3516
  %3944 = vmatprep.subr.bf16.mxu0 0
  %3945 = vmatpush2.bf16.msra.mxu0 %v3515
  %3946 = vmatprep.subr.bf16.mxu0 0
  %3947 = vmatpush2.bf16.msra.mxu0 %v3514
  %3948 = vmatprep.subr.bf16.mxu0 0
  %3949 = vmatpush2.bf16.msra.mxu0 %v3513
  %3950 = vmatprep.subr.bf16.mxu0 0
  %3951 = vmatpush2.bf16.msra.mxu0 %v3512
  %3952 = vmatprep.mubr.bf16.mxu0 %v2628
  %3953 = vmatmul.mubr.bf16.gmra.mxu0 %v2627
  %v3954 = vpop.f32.mrf.mxu0
  %v3955 = vadd.f32 %v3907, %v3954
  %v3956 = vpop.f32.mrf.mxu0
  %v3957 = vpop.f32.mrf.mxu0
  %v3958 = vadd.f32 %v3910, %v3957
  %v3959 = vpop.f32.mrf.mxu0
  %3960 = vmatprep.mubr.bf16.mxu0 %v2644
  %3961 = vmatmul.mubr.bf16.gmra.mxu0 %v2643
  %v3962 = vpop.f32.mrf.mxu0
  %v3963 = vadd.f32 %v3915, %v3962
  %v3964 = vpop.f32.mrf.mxu0
  %v3965 = vpop.f32.mrf.mxu0
  %v3966 = vpop.f32.mrf.mxu0
  %3967 = vdwg.mxu0
  %3968 = vmatprep.subr.bf16.mxu0 0
  %3969 = vmatpush1.bf16.msra.mxu0 %v3527
  %3970 = vmatprep.subr.bf16.mxu0 0
  %3971 = vmatpush1.bf16.msra.mxu0 %v3526
  %3972 = vmatprep.subr.bf16.mxu0 0
  %3973 = vmatpush1.bf16.msra.mxu0 %v3525
  %3974 = vmatprep.subr.bf16.mxu0 0
  %3975 = vmatpush1.bf16.msra.mxu0 %v3524
  %3976 = vmatprep.subr.bf16.mxu0 0
  %3977 = vmatpush1.bf16.msra.mxu0 %v3523
  %3978 = vmatprep.subr.bf16.mxu0 0
  %3979 = vmatpush1.bf16.msra.mxu0 %v3522
  %3980 = vmatprep.subr.bf16.mxu0 0
  %3981 = vmatpush1.bf16.msra.mxu0 %v3521
  %3982 = vmatprep.subr.bf16.mxu0 0
  %3983 = vmatpush1.bf16.msra.mxu0 %v3520
  %3984 = vmatprep.subr.bf16.mxu0 0
  %3985 = vmatpush2.bf16.msra.mxu0 %v3535
  %3986 = vmatprep.subr.bf16.mxu0 0
  %3987 = vmatpush2.bf16.msra.mxu0 %v3534
  %3988 = vmatprep.subr.bf16.mxu0 0
  %3989 = vmatpush2.bf16.msra.mxu0 %v3533
  %3990 = vmatprep.subr.bf16.mxu0 0
  %3991 = vmatpush2.bf16.msra.mxu0 %v3532
  %3992 = vmatprep.subr.bf16.mxu0 0
  %3993 = vmatpush2.bf16.msra.mxu0 %v3531
  %3994 = vmatprep.subr.bf16.mxu0 0
  %3995 = vmatpush2.bf16.msra.mxu0 %v3530
  %3996 = vmatprep.subr.bf16.mxu0 0
  %3997 = vmatpush2.bf16.msra.mxu0 %v3529
  %3998 = vmatprep.subr.bf16.mxu0 0
  %3999 = vmatpush2.bf16.msra.mxu0 %v3528
  %4000 = vmatprep.mubr.bf16.mxu0 %v2630
  %4001 = vmatmul.mubr.bf16.gmra.mxu0 %v2629
  %v4002 = vpop.f32.mrf.mxu0
  %v4003 = vadd.f32 %v3955, %v4002
  %v4004 = vpop.f32.mrf.mxu0
  %v4005 = vpop.f32.mrf.mxu0
  %v4006 = vadd.f32 %v3958, %v4005
  %v4007 = vpop.f32.mrf.mxu0
  %4008 = vmatprep.mubr.bf16.mxu0 %v2646
  %4009 = vmatmul.mubr.bf16.gmra.mxu0 %v2645
  %v4010 = vpop.f32.mrf.mxu0
  %v4011 = vadd.f32 %v3963, %v4010
  %v4012 = vpop.f32.mrf.mxu0
  %v4013 = vpop.f32.mrf.mxu0
  %v4014 = vpop.f32.mrf.mxu0
  %4015 = vdwg.mxu0
  %4016 = vmatprep.subr.bf16.mxu0 0
  %4017 = vmatpush1.bf16.msra.mxu0 %v3543
  %4018 = vmatprep.subr.bf16.mxu0 0
  %4019 = vmatpush1.bf16.msra.mxu0 %v3542
  %4020 = vmatprep.subr.bf16.mxu0 0
  %4021 = vmatpush1.bf16.msra.mxu0 %v3541
  %4022 = vmatprep.subr.bf16.mxu0 0
  %4023 = vmatpush1.bf16.msra.mxu0 %v3540
  %4024 = vmatprep.subr.bf16.mxu0 0
  %4025 = vmatpush1.bf16.msra.mxu0 %v3539
  %4026 = vmatprep.subr.bf16.mxu0 0
  %4027 = vmatpush1.bf16.msra.mxu0 %v3538
  %4028 = vmatprep.subr.bf16.mxu0 0
  %4029 = vmatpush1.bf16.msra.mxu0 %v3537
  %4030 = vmatprep.subr.bf16.mxu0 0
  %4031 = vmatpush1.bf16.msra.mxu0 %v3536
  %4032 = vmatprep.subr.bf16.mxu0 0
  %4033 = vmatpush2.bf16.msra.mxu0 %v3551
  %4034 = vmatprep.subr.bf16.mxu0 0
  %4035 = vmatpush2.bf16.msra.mxu0 %v3550
  %4036 = vmatprep.subr.bf16.mxu0 0
  %4037 = vmatpush2.bf16.msra.mxu0 %v3549
  %4038 = vmatprep.subr.bf16.mxu0 0
  %4039 = vmatpush2.bf16.msra.mxu0 %v3548
  %4040 = vmatprep.subr.bf16.mxu0 0
  %4041 = vmatpush2.bf16.msra.mxu0 %v3547
  %4042 = vmatprep.subr.bf16.mxu0 0
  %4043 = vmatpush2.bf16.msra.mxu0 %v3546
  %4044 = vmatprep.subr.bf16.mxu0 0
  %4045 = vmatpush2.bf16.msra.mxu0 %v3545
  %4046 = vmatprep.subr.bf16.mxu0 0
  %4047 = vmatpush2.bf16.msra.mxu0 %v3544
  %4048 = vmatprep.mubr.bf16.mxu0 %v2632
  %4049 = vmatmul.mubr.bf16.gmra.mxu0 %v2631
  %v4050 = vpop.f32.mrf.mxu0
  %v4051 = vadd.f32 %v4003, %v4050
  %v4052 = vpop.f32.mrf.mxu0
  %v4053 = vpop.f32.mrf.mxu0
  %v4054 = vadd.f32 %v4006, %v4053
  %v4055 = vpop.f32.mrf.mxu0
  %4056 = vmatprep.mubr.bf16.mxu0 %v2648
  %4057 = vmatmul.mubr.bf16.gmra.mxu0 %v2647
  %v4058 = vpop.f32.mrf.mxu0
  %v4059 = vadd.f32 %v4011, %v4058
  %v4060 = vpop.f32.mrf.mxu0
  %v4061 = vpop.f32.mrf.mxu0
  %v4062 = vpop.f32.mrf.mxu0
  %4063 = vdwg.mxu0
  %v4064 = vadd.f32 %v1874, %v4051
  %v4065 = vadd.f32 %v1875, %v4054
  %v4066 = vadd.f32 %v1876, %v4059
  %v4067 = vsel %vm516, %v4064, 0.0
  %4068 = vadd.xlane.f32.xlu0 %v4067
  %v4069 = vpop.xlane.xlu0 %4068
  %v4070 = vsel %vm516, %v4065, 0.0
  %4071 = vadd.xlane.f32.xlu0 %v4070
  %v4072 = vpop.xlane.xlu0 %4071
  %v4073 = vsel %vm516, %v4066, 0.0
  %4074 = vadd.xlane.f32.xlu0 %v4073
  %v4075 = vpop.xlane.xlu0 %4074
  %v4076 = vmul.f32 %v4069, %v1826
  %v4077 = vmul.f32 %v4072, %v1826
  %v4078 = vmul.f32 %v4075, %v1826
  %v4079 = vsub.f32 %v4064, %v4076
  %v4080 = vsub.f32 %v4065, %v4077
  %v4081 = vsub.f32 %v4066, %v4078
  %v4082 = vld [vmem:[%s47] sm:$0x1]
  %v4084 = vlaneseq
  %v4085 = vshrl.u32 %v4084, 7
  %v4086 = vsub.s32 0, %v4085
  %v4087 = vrot.slane %v4082, %v4086
  %v4089 = vmul.f32 %v4087, %v4079
  %v4090 = vmul.f32 %v4087, %v4080
  %v4091 = vmul.f32 %v4087, %v4081
  %v4092 = vmul.f32 %v4079, %v4079
  %v4093 = vmul.f32 %v4080, %v4080
  %v4094 = vmul.f32 %v4081, %v4081
  %v4095 = vsel %vm516, %v4092, 0.0
  %4096 = vadd.xlane.f32.xlu0 %v4095
  %v4097 = vpop.xlane.xlu0 %4096
  %v4098 = vsel %vm516, %v4093, 0.0
  %4099 = vadd.xlane.f32.xlu0 %v4098
  %v4100 = vpop.xlane.xlu0 %4099
  %v4101 = vsel %vm516, %v4094, 0.0
  %4102 = vadd.xlane.f32.xlu0 %v4101
  %v4103 = vpop.xlane.xlu0 %4102
  %v4104 = vmul.f32 %v4097, %v1826
  %v4105 = vmul.f32 %v4100, %v1826
  %v4106 = vmul.f32 %v4103, %v1826
  %v4107 = vadd.f32 %v4104, 1e-05
  %v4108 = vadd.f32 %v4105, 1e-05
  %v4109 = vadd.f32 %v4106, 1e-05
  %v4110 = vrsqrt.pop %v4107
  %v4111 = vrsqrt.pop %v4108
  %v4112 = vrsqrt.pop %v4109
  %v4113 = vmul.f32 %v4089, %v4110
  %v4114 = vmul.f32 %v4090, %v4111
  %v4115 = vmul.f32 %v4091, %v4112
  %v4116 = vld [vmem:[%s49] sm:$0x1]
  %v4118 = vlaneseq
  %v4119 = vshrl.u32 %v4118, 7
  %v4120 = vsub.s32 0, %v4119
  %v4121 = vrot.slane %v4116, %v4120
  %v4123 = vadd.f32 %v4113, %v4121
  %v4124 = vadd.f32 %v4114, %v4121
  %v4125 = vadd.f32 %v4115, %v4121
  %v4126 = vld [vmem:[%s51] sm:$0xff]
  %v4128 = vsel %vm343, %v4126, 0
  %4130 = vmatprep.subr.mxu0 0.0
  %4131 = vmatpush1.msra.mxu0 0.0
  %4132 = vmatprep.subr.mxu0 0.0
  %4133 = vmatpush1.msra.mxu0 0.0
  %4134 = vmatprep.subr.mxu0 0.0
  %4135 = vmatpush1.msra.mxu0 0.0
  %4136 = vmatprep.subr.mxu0 0.0
  %4137 = vmatpush1.msra.mxu0 0.0
  %4138 = vmatprep.subr.mxu0 0.0
  %4139 = vmatpush1.msra.mxu0 0.0
  %4140 = vmatprep.subr.mxu0 0.0
  %4141 = vmatpush1.msra.mxu0 0.0
  %4142 = vmatprep.subr.mxu0 0.0
  %4143 = vmatpush1.msra.mxu0 0.0
  %4144 = vmatprep.subr.mxu0 0.0
  %4145 = vmatpush1.msra.mxu0 0.0
  %4146 = vmatprep.subr.mxu0 0.0
  %4147 = vmatpush1.msra.mxu0 0.0
  %4148 = vmatprep.subr.mxu0 0.0
  %4149 = vmatpush1.msra.mxu0 0.0
  %4150 = vmatprep.subr.mxu0 0.0
  %4151 = vmatpush1.msra.mxu0 0.0
  %4152 = vmatprep.subr.mxu0 0.0
  %4153 = vmatpush1.msra.mxu0 0.0
  %4154 = vmatprep.subr.mxu0 0.0
  %4155 = vmatpush1.msra.mxu0 0.0
  %4156 = vmatprep.subr.mxu0 0.0
  %4157 = vmatpush1.msra.mxu0 %v4125
  %4158 = vmatprep.subr.mxu0 0.0
  %4159 = vmatpush1.msra.mxu0 %v4124
  %4160 = vmatprep.subr.mxu0 0.0
  %4161 = vmatpush1.msra.mxu0 %v4123
  %4162 = vmatprep.subr.mxu0 0.0
  %4163 = vmatpush2.msra.mxu0 0.0
  %4164 = vmatprep.subr.mxu0 0.0
  %4165 = vmatpush2.msra.mxu0 0.0
  %4166 = vmatprep.subr.mxu0 0.0
  %4167 = vmatpush2.msra.mxu0 0.0
  %4168 = vmatprep.subr.mxu0 0.0
  %4169 = vmatpush2.msra.mxu0 0.0
  %4170 = vmatprep.subr.mxu0 0.0
  %4171 = vmatpush2.msra.mxu0 0.0
  %4172 = vmatprep.subr.mxu0 0.0
  %4173 = vmatpush2.msra.mxu0 0.0
  %4174 = vmatprep.subr.mxu0 0.0
  %4175 = vmatpush2.msra.mxu0 0.0
  %4176 = vmatprep.subr.mxu0 0.0
  %4177 = vmatpush2.msra.mxu0 0.0
  %4178 = vmatprep.subr.mxu0 0.0
  %4179 = vmatpush2.msra.mxu0 0.0
  %4180 = vmatprep.subr.mxu0 0.0
  %4181 = vmatpush2.msra.mxu0 0.0
  %4182 = vmatprep.subr.mxu0 0.0
  %4183 = vmatpush2.msra.mxu0 0.0
  %4184 = vmatprep.subr.mxu0 0.0
  %4185 = vmatpush2.msra.mxu0 0.0
  %4186 = vmatprep.subr.mxu0 0.0
  %4187 = vmatpush2.msra.mxu0 0.0
  %4188 = vmatprep.subr.mxu0 0.0
  %4189 = vmatpush2.msra.mxu0 0.0
  %4190 = vmatprep.subr.mxu0 0.0
  %4191 = vmatpush2.msra.mxu0 0.0
  %4192 = vmatprep.subr.mxu0 0.0
  %4193 = vmatpush2.msra.mxu0 0.0
  %4194 = vmatprep.mubr.f32.mxu0 0.0
  %4195 = vmatmul.mubr.f32.gmra.mxu0 %v4128
  %v4196 = vpop.f32.mrf.mxu0
  %v4197 = vadd.f32 0.0, %v4196
  %v4198 = vpop.f32.mrf.mxu0
  %4199 = vdwg.mxu0
  %v4200 = vld [vmem:[%s53] sm:$0xff]
  %v4201 = vld [vmem:[%s53 + $0x8] sm:$0xff]
  %v4202 = vld [vmem:[%s53 + $0x10] sm:$0xff]
  %v4203 = vld [vmem:[%s53 + $0x18] sm:$0xff]
  %s4204 = scalar_lea.vmem %s51, 8
  %v4205 = vld [vmem:[%s4204] sm:$0xff]
  %v4207 = vsel %vm343, %v4205, 0
  %4209 = vmatprep.subr.mxu0 0.0
  %4210 = vmatpush1.msra.mxu0 0.0
  %4211 = vmatprep.subr.mxu0 0.0
  %4212 = vmatpush1.msra.mxu0 0.0
  %4213 = vmatprep.subr.mxu0 0.0
  %4214 = vmatpush1.msra.mxu0 0.0
  %4215 = vmatprep.subr.mxu0 0.0
  %4216 = vmatpush1.msra.mxu0 0.0
  %4217 = vmatprep.subr.mxu0 0.0
  %4218 = vmatpush1.msra.mxu0 0.0
  %4219 = vmatprep.subr.mxu0 0.0
  %4220 = vmatpush1.msra.mxu0 0.0
  %4221 = vmatprep.subr.mxu0 0.0
  %4222 = vmatpush1.msra.mxu0 0.0
  %4223 = vmatprep.subr.mxu0 0.0
  %4224 = vmatpush1.msra.mxu0 0.0
  %4225 = vmatprep.subr.mxu0 0.0
  %4226 = vmatpush1.msra.mxu0 0.0
  %4227 = vmatprep.subr.mxu0 0.0
  %4228 = vmatpush1.msra.mxu0 0.0
  %4229 = vmatprep.subr.mxu0 0.0
  %4230 = vmatpush1.msra.mxu0 0.0
  %4231 = vmatprep.subr.mxu0 0.0
  %4232 = vmatpush1.msra.mxu0 0.0
  %4233 = vmatprep.subr.mxu0 0.0
  %4234 = vmatpush1.msra.mxu0 0.0
  %4235 = vmatprep.subr.mxu0 0.0
  %4236 = vmatpush1.msra.mxu0 %v4125
  %4237 = vmatprep.subr.mxu0 0.0
  %4238 = vmatpush1.msra.mxu0 %v4124
  %4239 = vmatprep.subr.mxu0 0.0
  %4240 = vmatpush1.msra.mxu0 %v4123
  %4241 = vmatprep.subr.mxu0 0.0
  %4242 = vmatpush2.msra.mxu0 0.0
  %4243 = vmatprep.subr.mxu0 0.0
  %4244 = vmatpush2.msra.mxu0 0.0
  %4245 = vmatprep.subr.mxu0 0.0
  %4246 = vmatpush2.msra.mxu0 0.0
  %4247 = vmatprep.subr.mxu0 0.0
  %4248 = vmatpush2.msra.mxu0 0.0
  %4249 = vmatprep.subr.mxu0 0.0
  %4250 = vmatpush2.msra.mxu0 0.0
  %4251 = vmatprep.subr.mxu0 0.0
  %4252 = vmatpush2.msra.mxu0 0.0
  %4253 = vmatprep.subr.mxu0 0.0
  %4254 = vmatpush2.msra.mxu0 0.0
  %4255 = vmatprep.subr.mxu0 0.0
  %4256 = vmatpush2.msra.mxu0 0.0
  %4257 = vmatprep.subr.mxu0 0.0
  %4258 = vmatpush2.msra.mxu0 0.0
  %4259 = vmatprep.subr.mxu0 0.0
  %4260 = vmatpush2.msra.mxu0 0.0
  %4261 = vmatprep.subr.mxu0 0.0
  %4262 = vmatpush2.msra.mxu0 0.0
  %4263 = vmatprep.subr.mxu0 0.0
  %4264 = vmatpush2.msra.mxu0 0.0
  %4265 = vmatprep.subr.mxu0 0.0
  %4266 = vmatpush2.msra.mxu0 0.0
  %4267 = vmatprep.subr.mxu0 0.0
  %4268 = vmatpush2.msra.mxu0 0.0
  %4269 = vmatprep.subr.mxu0 0.0
  %4270 = vmatpush2.msra.mxu0 0.0
  %4271 = vmatprep.subr.mxu0 0.0
  %4272 = vmatpush2.msra.mxu0 0.0
  %4273 = vmatprep.mubr.f32.mxu0 0.0
  %4274 = vmatmul.mubr.f32.gmra.mxu0 %v4207
  %v4275 = vpop.f32.mrf.mxu0
  %v4276 = vadd.f32 0.0, %v4275
  %v4277 = vpop.f32.mrf.mxu0
  %4278 = vdwg.mxu0
  %s4279 = scalar_lea.vmem %s53, 32
  %v4280 = vld [vmem:[%s4279] sm:$0xff]
  %v4281 = vld [vmem:[%s4279 + $0x8] sm:$0xff]
  %v4282 = vld [vmem:[%s4279 + $0x10] sm:$0xff]
  %v4283 = vld [vmem:[%s4279 + $0x18] sm:$0xff]
  %v4285 = vsel %vm516, %v4276, 0
  %4287 = vmatprep.subr.mxu0 0.0
  %4288 = vmatpush1.msra.mxu0 0.0
  %4289 = vmatprep.subr.mxu0 0.0
  %4290 = vmatpush1.msra.mxu0 0.0
  %4291 = vmatprep.subr.mxu0 0.0
  %4292 = vmatpush1.msra.mxu0 0.0
  %4293 = vmatprep.subr.mxu0 0.0
  %4294 = vmatpush1.msra.mxu0 0.0
  %4295 = vmatprep.subr.mxu0 0.0
  %4296 = vmatpush1.msra.mxu0 0.0
  %4297 = vmatprep.subr.mxu0 0.0
  %4298 = vmatpush1.msra.mxu0 0.0
  %4299 = vmatprep.subr.mxu0 0.0
  %4300 = vmatpush1.msra.mxu0 0.0
  %4301 = vmatprep.subr.mxu0 0.0
  %4302 = vmatpush1.msra.mxu0 0.0
  %4303 = vmatprep.subr.mxu0 0.0
  %4304 = vmatpush1.msra.mxu0 0.0
  %4305 = vmatprep.subr.mxu0 0.0
  %4306 = vmatpush1.msra.mxu0 0.0
  %4307 = vmatprep.subr.mxu0 0.0
  %4308 = vmatpush1.msra.mxu0 0.0
  %4309 = vmatprep.subr.mxu0 0.0
  %4310 = vmatpush1.msra.mxu0 0.0
  %4311 = vmatprep.subr.mxu0 0.0
  %4312 = vmatpush1.msra.mxu0 %v4283
  %4313 = vmatprep.subr.mxu0 0.0
  %4314 = vmatpush1.msra.mxu0 %v4282
  %4315 = vmatprep.subr.mxu0 0.0
  %4316 = vmatpush1.msra.mxu0 %v4281
  %4317 = vmatprep.subr.mxu0 0.0
  %4318 = vmatpush1.msra.mxu0 %v4280
  %4319 = vmatprep.subr.mxu0 0.0
  %4320 = vmatpush2.msra.mxu0 0.0
  %4321 = vmatprep.subr.mxu0 0.0
  %4322 = vmatpush2.msra.mxu0 0.0
  %4323 = vmatprep.subr.mxu0 0.0
  %4324 = vmatpush2.msra.mxu0 0.0
  %4325 = vmatprep.subr.mxu0 0.0
  %4326 = vmatpush2.msra.mxu0 0.0
  %4327 = vmatprep.subr.mxu0 0.0
  %4328 = vmatpush2.msra.mxu0 0.0
  %4329 = vmatprep.subr.mxu0 0.0
  %4330 = vmatpush2.msra.mxu0 0.0
  %4331 = vmatprep.subr.mxu0 0.0
  %4332 = vmatpush2.msra.mxu0 0.0
  %4333 = vmatprep.subr.mxu0 0.0
  %4334 = vmatpush2.msra.mxu0 0.0
  %4335 = vmatprep.subr.mxu0 0.0
  %4336 = vmatpush2.msra.mxu0 0.0
  %4337 = vmatprep.subr.mxu0 0.0
  %4338 = vmatpush2.msra.mxu0 0.0
  %4339 = vmatprep.subr.mxu0 0.0
  %4340 = vmatpush2.msra.mxu0 0.0
  %4341 = vmatprep.subr.mxu0 0.0
  %4342 = vmatpush2.msra.mxu0 0.0
  %4343 = vmatprep.subr.mxu0 0.0
  %4344 = vmatpush2.msra.mxu0 0.0
  %4345 = vmatprep.subr.mxu0 0.0
  %4346 = vmatpush2.msra.mxu0 0.0
  %4347 = vmatprep.subr.mxu0 0.0
  %4348 = vmatpush2.msra.mxu0 0.0
  %4349 = vmatprep.subr.mxu0 0.0
  %4350 = vmatpush2.msra.mxu0 0.0
  %4351 = vmatprep.mubr.f32.mxu0 0.0
  %4352 = vmatmul.mubr.f32.gmra.mxu0 %v4285
  %v4353 = vpop.f32.mrf.mxu0
  %v4354 = vadd.f32 0.0, %v4353
  %v4355 = vpop.f32.mrf.mxu0
  %4356 = vdwg.mxu0
  %v4358 = vsel %vm516, %v4197, 0
  %4360 = vmatprep.subr.mxu0 0.0
  %4361 = vmatpush1.msra.mxu0 0.0
  %4362 = vmatprep.subr.mxu0 0.0
  %4363 = vmatpush1.msra.mxu0 0.0
  %4364 = vmatprep.subr.mxu0 0.0
  %4365 = vmatpush1.msra.mxu0 0.0
  %4366 = vmatprep.subr.mxu0 0.0
  %4367 = vmatpush1.msra.mxu0 0.0
  %4368 = vmatprep.subr.mxu0 0.0
  %4369 = vmatpush1.msra.mxu0 0.0
  %4370 = vmatprep.subr.mxu0 0.0
  %4371 = vmatpush1.msra.mxu0 0.0
  %4372 = vmatprep.subr.mxu0 0.0
  %4373 = vmatpush1.msra.mxu0 0.0
  %4374 = vmatprep.subr.mxu0 0.0
  %4375 = vmatpush1.msra.mxu0 0.0
  %4376 = vmatprep.subr.mxu0 0.0
  %4377 = vmatpush1.msra.mxu0 0.0
  %4378 = vmatprep.subr.mxu0 0.0
  %4379 = vmatpush1.msra.mxu0 0.0
  %4380 = vmatprep.subr.mxu0 0.0
  %4381 = vmatpush1.msra.mxu0 0.0
  %4382 = vmatprep.subr.mxu0 0.0
  %4383 = vmatpush1.msra.mxu0 0.0
  %4384 = vmatprep.subr.mxu0 0.0
  %4385 = vmatpush1.msra.mxu0 %v4203
  %4386 = vmatprep.subr.mxu0 0.0
  %4387 = vmatpush1.msra.mxu0 %v4202
  %4388 = vmatprep.subr.mxu0 0.0
  %4389 = vmatpush1.msra.mxu0 %v4201
  %4390 = vmatprep.subr.mxu0 0.0
  %4391 = vmatpush1.msra.mxu0 %v4200
  %4392 = vmatprep.subr.mxu0 0.0
  %4393 = vmatpush2.msra.mxu0 0.0
  %4394 = vmatprep.subr.mxu0 0.0
  %4395 = vmatpush2.msra.mxu0 0.0
  %4396 = vmatprep.subr.mxu0 0.0
  %4397 = vmatpush2.msra.mxu0 0.0
  %4398 = vmatprep.subr.mxu0 0.0
  %4399 = vmatpush2.msra.mxu0 0.0
  %4400 = vmatprep.subr.mxu0 0.0
  %4401 = vmatpush2.msra.mxu0 0.0
  %4402 = vmatprep.subr.mxu0 0.0
  %4403 = vmatpush2.msra.mxu0 0.0
  %4404 = vmatprep.subr.mxu0 0.0
  %4405 = vmatpush2.msra.mxu0 0.0
  %4406 = vmatprep.subr.mxu0 0.0
  %4407 = vmatpush2.msra.mxu0 0.0
  %4408 = vmatprep.subr.mxu0 0.0
  %4409 = vmatpush2.msra.mxu0 0.0
  %4410 = vmatprep.subr.mxu0 0.0
  %4411 = vmatpush2.msra.mxu0 0.0
  %4412 = vmatprep.subr.mxu0 0.0
  %4413 = vmatpush2.msra.mxu0 0.0
  %4414 = vmatprep.subr.mxu0 0.0
  %4415 = vmatpush2.msra.mxu0 0.0
  %4416 = vmatprep.subr.mxu0 0.0
  %4417 = vmatpush2.msra.mxu0 0.0
  %4418 = vmatprep.subr.mxu0 0.0
  %4419 = vmatpush2.msra.mxu0 0.0
  %4420 = vmatprep.subr.mxu0 0.0
  %4421 = vmatpush2.msra.mxu0 0.0
  %4422 = vmatprep.subr.mxu0 0.0
  %4423 = vmatpush2.msra.mxu0 0.0
  %4424 = vmatprep.mubr.f32.mxu0 0.0
  %4425 = vmatmul.mubr.f32.gmra.mxu0 %v4358
  %v4426 = vpop.f32.mrf.mxu0
  %v4427 = vadd.f32 %v4354, %v4426
  %v4428 = vpop.f32.mrf.mxu0
  %4429 = vdwg.mxu0
  %s4430 = scalar_lea.vmem %s51, 16
  %v4431 = vld [vmem:[%s4430] sm:$0xff]
  %v4433 = vsel %vm343, %v4431, 0
  %4435 = vmatprep.subr.mxu0 0.0
  %4436 = vmatpush1.msra.mxu0 0.0
  %4437 = vmatprep.subr.mxu0 0.0
  %4438 = vmatpush1.msra.mxu0 0.0
  %4439 = vmatprep.subr.mxu0 0.0
  %4440 = vmatpush1.msra.mxu0 0.0
  %4441 = vmatprep.subr.mxu0 0.0
  %4442 = vmatpush1.msra.mxu0 0.0
  %4443 = vmatprep.subr.mxu0 0.0
  %4444 = vmatpush1.msra.mxu0 0.0
  %4445 = vmatprep.subr.mxu0 0.0
  %4446 = vmatpush1.msra.mxu0 0.0
  %4447 = vmatprep.subr.mxu0 0.0
  %4448 = vmatpush1.msra.mxu0 0.0
  %4449 = vmatprep.subr.mxu0 0.0
  %4450 = vmatpush1.msra.mxu0 0.0
  %4451 = vmatprep.subr.mxu0 0.0
  %4452 = vmatpush1.msra.mxu0 0.0
  %4453 = vmatprep.subr.mxu0 0.0
  %4454 = vmatpush1.msra.mxu0 0.0
  %4455 = vmatprep.subr.mxu0 0.0
  %4456 = vmatpush1.msra.mxu0 0.0
  %4457 = vmatprep.subr.mxu0 0.0
  %4458 = vmatpush1.msra.mxu0 0.0
  %4459 = vmatprep.subr.mxu0 0.0
  %4460 = vmatpush1.msra.mxu0 0.0
  %4461 = vmatprep.subr.mxu0 0.0
  %4462 = vmatpush1.msra.mxu0 %v4125
  %4463 = vmatprep.subr.mxu0 0.0
  %4464 = vmatpush1.msra.mxu0 %v4124
  %4465 = vmatprep.subr.mxu0 0.0
  %4466 = vmatpush1.msra.mxu0 %v4123
  %4467 = vmatprep.subr.mxu0 0.0
  %4468 = vmatpush2.msra.mxu0 0.0
  %4469 = vmatprep.subr.mxu0 0.0
  %4470 = vmatpush2.msra.mxu0 0.0
  %4471 = vmatprep.subr.mxu0 0.0
  %4472 = vmatpush2.msra.mxu0 0.0
  %4473 = vmatprep.subr.mxu0 0.0
  %4474 = vmatpush2.msra.mxu0 0.0
  %4475 = vmatprep.subr.mxu0 0.0
  %4476 = vmatpush2.msra.mxu0 0.0
  %4477 = vmatprep.subr.mxu0 0.0
  %4478 = vmatpush2.msra.mxu0 0.0
  %4479 = vmatprep.subr.mxu0 0.0
  %4480 = vmatpush2.msra.mxu0 0.0
  %4481 = vmatprep.subr.mxu0 0.0
  %4482 = vmatpush2.msra.mxu0 0.0
  %4483 = vmatprep.subr.mxu0 0.0
  %4484 = vmatpush2.msra.mxu0 0.0
  %4485 = vmatprep.subr.mxu0 0.0
  %4486 = vmatpush2.msra.mxu0 0.0
  %4487 = vmatprep.subr.mxu0 0.0
  %4488 = vmatpush2.msra.mxu0 0.0
  %4489 = vmatprep.subr.mxu0 0.0
  %4490 = vmatpush2.msra.mxu0 0.0
  %4491 = vmatprep.subr.mxu0 0.0
  %4492 = vmatpush2.msra.mxu0 0.0
  %4493 = vmatprep.subr.mxu0 0.0
  %4494 = vmatpush2.msra.mxu0 0.0
  %4495 = vmatprep.subr.mxu0 0.0
  %4496 = vmatpush2.msra.mxu0 0.0
  %4497 = vmatprep.subr.mxu0 0.0
  %4498 = vmatpush2.msra.mxu0 0.0
  %4499 = vmatprep.mubr.f32.mxu0 0.0
  %4500 = vmatmul.mubr.f32.gmra.mxu0 %v4433
  %v4501 = vpop.f32.mrf.mxu0
  %v4502 = vadd.f32 0.0, %v4501
  %v4503 = vpop.f32.mrf.mxu0
  %4504 = vdwg.mxu0
  %s4505 = scalar_lea.vmem %s53, 64
  %v4506 = vld [vmem:[%s4505] sm:$0xff]
  %v4507 = vld [vmem:[%s4505 + $0x8] sm:$0xff]
  %v4508 = vld [vmem:[%s4505 + $0x10] sm:$0xff]
  %v4509 = vld [vmem:[%s4505 + $0x18] sm:$0xff]
  %v4511 = vsel %vm516, %v4502, 0
  %4513 = vmatprep.subr.mxu0 0.0
  %4514 = vmatpush1.msra.mxu0 0.0
  %4515 = vmatprep.subr.mxu0 0.0
  %4516 = vmatpush1.msra.mxu0 0.0
  %4517 = vmatprep.subr.mxu0 0.0
  %4518 = vmatpush1.msra.mxu0 0.0
  %4519 = vmatprep.subr.mxu0 0.0
  %4520 = vmatpush1.msra.mxu0 0.0
  %4521 = vmatprep.subr.mxu0 0.0
  %4522 = vmatpush1.msra.mxu0 0.0
  %4523 = vmatprep.subr.mxu0 0.0
  %4524 = vmatpush1.msra.mxu0 0.0
  %4525 = vmatprep.subr.mxu0 0.0
  %4526 = vmatpush1.msra.mxu0 0.0
  %4527 = vmatprep.subr.mxu0 0.0
  %4528 = vmatpush1.msra.mxu0 0.0
  %4529 = vmatprep.subr.mxu0 0.0
  %4530 = vmatpush1.msra.mxu0 0.0
  %4531 = vmatprep.subr.mxu0 0.0
  %4532 = vmatpush1.msra.mxu0 0.0
  %4533 = vmatprep.subr.mxu0 0.0
  %4534 = vmatpush1.msra.mxu0 0.0
  %4535 = vmatprep.subr.mxu0 0.0
  %4536 = vmatpush1.msra.mxu0 0.0
  %4537 = vmatprep.subr.mxu0 0.0
  %4538 = vmatpush1.msra.mxu0 %v4509
  %4539 = vmatprep.subr.mxu0 0.0
  %4540 = vmatpush1.msra.mxu0 %v4508
  %4541 = vmatprep.subr.mxu0 0.0
  %4542 = vmatpush1.msra.mxu0 %v4507
  %4543 = vmatprep.subr.mxu0 0.0
  %4544 = vmatpush1.msra.mxu0 %v4506
  %4545 = vmatprep.subr.mxu0 0.0
  %4546 = vmatpush2.msra.mxu0 0.0
  %4547 = vmatprep.subr.mxu0 0.0
  %4548 = vmatpush2.msra.mxu0 0.0
  %4549 = vmatprep.subr.mxu0 0.0
  %4550 = vmatpush2.msra.mxu0 0.0
  %4551 = vmatprep.subr.mxu0 0.0
  %4552 = vmatpush2.msra.mxu0 0.0
  %4553 = vmatprep.subr.mxu0 0.0
  %4554 = vmatpush2.msra.mxu0 0.0
  %4555 = vmatprep.subr.mxu0 0.0
  %4556 = vmatpush2.msra.mxu0 0.0
  %4557 = vmatprep.subr.mxu0 0.0
  %4558 = vmatpush2.msra.mxu0 0.0
  %4559 = vmatprep.subr.mxu0 0.0
  %4560 = vmatpush2.msra.mxu0 0.0
  %4561 = vmatprep.subr.mxu0 0.0
  %4562 = vmatpush2.msra.mxu0 0.0
  %4563 = vmatprep.subr.mxu0 0.0
  %4564 = vmatpush2.msra.mxu0 0.0
  %4565 = vmatprep.subr.mxu0 0.0
  %4566 = vmatpush2.msra.mxu0 0.0
  %4567 = vmatprep.subr.mxu0 0.0
  %4568 = vmatpush2.msra.mxu0 0.0
  %4569 = vmatprep.subr.mxu0 0.0
  %4570 = vmatpush2.msra.mxu0 0.0
  %4571 = vmatprep.subr.mxu0 0.0
  %4572 = vmatpush2.msra.mxu0 0.0
  %4573 = vmatprep.subr.mxu0 0.0
  %4574 = vmatpush2.msra.mxu0 0.0
  %4575 = vmatprep.subr.mxu0 0.0
  %4576 = vmatpush2.msra.mxu0 0.0
  %4577 = vmatprep.mubr.f32.mxu0 0.0
  %4578 = vmatmul.mubr.f32.gmra.mxu0 %v4511
  %v4579 = vpop.f32.mrf.mxu0
  %v4580 = vadd.f32 0.0, %v4579
  %v4581 = vpop.f32.mrf.mxu0
  %4582 = vdwg.mxu0
  %v4583 = vadd.f32 %v4427, %v4580
  %v4584 = vld [vmem:[%s55] sm:$0x1]
  %v4586 = vlaneseq
  %v4587 = vshrl.u32 %v4586, 7
  %v4588 = vsub.s32 0, %v4587
  %v4589 = vrot.slane %v4584, %v4588
  %v4591 = vadd.f32 %v4583, %v4589
  %v4592 = vld [vmem:[%s57] sm:$0xff]
  %v4594 = vsel %vm143, %v4592, 0
  %4596 = vmatprep.subr.mxu0 0.0
  %4597 = vmatpush1.msra.mxu0 0.0
  %4598 = vmatprep.subr.mxu0 0.0
  %4599 = vmatpush1.msra.mxu0 0.0
  %4600 = vmatprep.subr.mxu0 0.0
  %4601 = vmatpush1.msra.mxu0 0.0
  %4602 = vmatprep.subr.mxu0 0.0
  %4603 = vmatpush1.msra.mxu0 0.0
  %4604 = vmatprep.subr.mxu0 0.0
  %4605 = vmatpush1.msra.mxu0 0.0
  %4606 = vmatprep.subr.mxu0 0.0
  %4607 = vmatpush1.msra.mxu0 0.0
  %4608 = vmatprep.subr.mxu0 0.0
  %4609 = vmatpush1.msra.mxu0 0.0
  %4610 = vmatprep.subr.mxu0 0.0
  %4611 = vmatpush1.msra.mxu0 0.0
  %4612 = vmatprep.subr.mxu0 0.0
  %4613 = vmatpush1.msra.mxu0 0.0
  %4614 = vmatprep.subr.mxu0 0.0
  %4615 = vmatpush1.msra.mxu0 0.0
  %4616 = vmatprep.subr.mxu0 0.0
  %4617 = vmatpush1.msra.mxu0 0.0
  %4618 = vmatprep.subr.mxu0 0.0
  %4619 = vmatpush1.msra.mxu0 0.0
  %4620 = vmatprep.subr.mxu0 0.0
  %4621 = vmatpush1.msra.mxu0 0.0
  %4622 = vmatprep.subr.mxu0 0.0
  %4623 = vmatpush1.msra.mxu0 0.0
  %4624 = vmatprep.subr.mxu0 0.0
  %4625 = vmatpush1.msra.mxu0 0.0
  %4626 = vmatprep.subr.mxu0 0.0
  %4627 = vmatpush1.msra.mxu0 %v4591
  %4628 = vmatprep.subr.mxu0 0.0
  %4629 = vmatpush2.msra.mxu0 0.0
  %4630 = vmatprep.subr.mxu0 0.0
  %4631 = vmatpush2.msra.mxu0 0.0
  %4632 = vmatprep.subr.mxu0 0.0
  %4633 = vmatpush2.msra.mxu0 0.0
  %4634 = vmatprep.subr.mxu0 0.0
  %4635 = vmatpush2.msra.mxu0 0.0
  %4636 = vmatprep.subr.mxu0 0.0
  %4637 = vmatpush2.msra.mxu0 0.0
  %4638 = vmatprep.subr.mxu0 0.0
  %4639 = vmatpush2.msra.mxu0 0.0
  %4640 = vmatprep.subr.mxu0 0.0
  %4641 = vmatpush2.msra.mxu0 0.0
  %4642 = vmatprep.subr.mxu0 0.0
  %4643 = vmatpush2.msra.mxu0 0.0
  %4644 = vmatprep.subr.mxu0 0.0
  %4645 = vmatpush2.msra.mxu0 0.0
  %4646 = vmatprep.subr.mxu0 0.0
  %4647 = vmatpush2.msra.mxu0 0.0
  %4648 = vmatprep.subr.mxu0 0.0
  %4649 = vmatpush2.msra.mxu0 0.0
  %4650 = vmatprep.subr.mxu0 0.0
  %4651 = vmatpush2.msra.mxu0 0.0
  %4652 = vmatprep.subr.mxu0 0.0
  %4653 = vmatpush2.msra.mxu0 0.0
  %4654 = vmatprep.subr.mxu0 0.0
  %4655 = vmatpush2.msra.mxu0 0.0
  %4656 = vmatprep.subr.mxu0 0.0
  %4657 = vmatpush2.msra.mxu0 0.0
  %4658 = vmatprep.subr.mxu0 0.0
  %4659 = vmatpush2.msra.mxu0 0.0
  %4660 = vmatprep.mubr.f32.mxu0 0.0
  %4661 = vmatmul.mubr.f32.gmra.mxu0 %v4594
  %v4662 = vpop.f32.mrf.mxu0
  %v4663 = vadd.f32 0.0, %v4662
  %v4664 = vpop.f32.mrf.mxu0
  %4665 = vdwg.mxu0
  %v4666 = vmul.f32 %v4591, %v4591
  %4667 = vmatprep.subr.mxu0 0.0
  %4668 = vmatpush1.msra.mxu0 0.0
  %4669 = vmatprep.subr.mxu0 0.0
  %4670 = vmatpush1.msra.mxu0 0.0
  %4671 = vmatprep.subr.mxu0 0.0
  %4672 = vmatpush1.msra.mxu0 0.0
  %4673 = vmatprep.subr.mxu0 0.0
  %4674 = vmatpush1.msra.mxu0 0.0
  %4675 = vmatprep.subr.mxu0 0.0
  %4676 = vmatpush1.msra.mxu0 0.0
  %4677 = vmatprep.subr.mxu0 0.0
  %4678 = vmatpush1.msra.mxu0 0.0
  %4679 = vmatprep.subr.mxu0 0.0
  %4680 = vmatpush1.msra.mxu0 0.0
  %4681 = vmatprep.subr.mxu0 0.0
  %4682 = vmatpush1.msra.mxu0 0.0
  %4683 = vmatprep.subr.mxu0 0.0
  %4684 = vmatpush1.msra.mxu0 0.0
  %4685 = vmatprep.subr.mxu0 0.0
  %4686 = vmatpush1.msra.mxu0 0.0
  %4687 = vmatprep.subr.mxu0 0.0
  %4688 = vmatpush1.msra.mxu0 0.0
  %4689 = vmatprep.subr.mxu0 0.0
  %4690 = vmatpush1.msra.mxu0 0.0
  %4691 = vmatprep.subr.mxu0 0.0
  %4692 = vmatpush1.msra.mxu0 0.0
  %4693 = vmatprep.subr.mxu0 0.0
  %4694 = vmatpush1.msra.mxu0 0.0
  %4695 = vmatprep.subr.mxu0 0.0
  %4696 = vmatpush1.msra.mxu0 0.0
  %4697 = vmatprep.subr.mxu0 0.0
  %4698 = vmatpush1.msra.mxu0 %v4666
  %4699 = vmatprep.subr.mxu0 0.0
  %4700 = vmatpush2.msra.mxu0 0.0
  %4701 = vmatprep.subr.mxu0 0.0
  %4702 = vmatpush2.msra.mxu0 0.0
  %4703 = vmatprep.subr.mxu0 0.0
  %4704 = vmatpush2.msra.mxu0 0.0
  %4705 = vmatprep.subr.mxu0 0.0
  %4706 = vmatpush2.msra.mxu0 0.0
  %4707 = vmatprep.subr.mxu0 0.0
  %4708 = vmatpush2.msra.mxu0 0.0
  %4709 = vmatprep.subr.mxu0 0.0
  %4710 = vmatpush2.msra.mxu0 0.0
  %4711 = vmatprep.subr.mxu0 0.0
  %4712 = vmatpush2.msra.mxu0 0.0
  %4713 = vmatprep.subr.mxu0 0.0
  %4714 = vmatpush2.msra.mxu0 0.0
  %4715 = vmatprep.subr.mxu0 0.0
  %4716 = vmatpush2.msra.mxu0 0.0
  %4717 = vmatprep.subr.mxu0 0.0
  %4718 = vmatpush2.msra.mxu0 0.0
  %4719 = vmatprep.subr.mxu0 0.0
  %4720 = vmatpush2.msra.mxu0 0.0
  %4721 = vmatprep.subr.mxu0 0.0
  %4722 = vmatpush2.msra.mxu0 0.0
  %4723 = vmatprep.subr.mxu0 0.0
  %4724 = vmatpush2.msra.mxu0 0.0
  %4725 = vmatprep.subr.mxu0 0.0
  %4726 = vmatpush2.msra.mxu0 0.0
  %4727 = vmatprep.subr.mxu0 0.0
  %4728 = vmatpush2.msra.mxu0 0.0
  %4729 = vmatprep.subr.mxu0 0.0
  %4730 = vmatpush2.msra.mxu0 0.0
  %4731 = vmatprep.mubr.f32.mxu0 0.0
  %4732 = vmatmul.mubr.f32.gmra.mxu0 %v4594
  %v4733 = vpop.f32.mrf.mxu0
  %v4734 = vadd.f32 0.0, %v4733
  %v4735 = vpop.f32.mrf.mxu0
  %4736 = vdwg.mxu0
  %v4737 = vsel %vm516, %v4663, 0.0
  %4738 = vadd.xlane.f32.xlu0 %v4737
  %v4739 = vpop.xlane.xlu0 %4738
  %v4740 = vmul.f32 %v4739, 0.015625
  %v4741 = vsel %vm516, %v4734, 0.0
  %4742 = vadd.xlane.f32.xlu0 %v4741
  %v4743 = vpop.xlane.xlu0 %4742
  %v4744 = vmul.f32 %v4743, 0.015625
  %v4745 = vmul.f32 %v4740, %v4740
  %v4746 = vsub.f32 %v4744, %v4745
  %v4747 = vadd.f32 %v4746, 1e-05
  %v4748 = vrsqrt.pop %v4747
  %v4749 = vld [vmem:[%s59] sm:$0xff]
  %v4750 = vsub.f32 %v4591, %v4740
  %4752 = vset.pattern.permute.xlu0 0
  %4753 = vperm.xlu0 %4752, %v4749
  %v4754 = vpop.permute.xlu0 %4753
  %v4756 = vmul.f32 %v4754, %v4750
  %v4757 = vmul.f32 %v4756, %v4748
  %v4758 = vld [vmem:[%s61] sm:$0xff]
  %4760 = vset.pattern.permute.xlu0 0
  %4761 = vperm.xlu0 %4760, %v4758
  %v4762 = vpop.permute.xlu0 %4761
  %v4764 = vadd.f32 %v4757, %v4762
  %v4765 = vmax.f32 %v4764, 0.0
  %v4766 = vld [vmem:[%s63] sm:$0xff]
  %v4767 = vld [vmem:[%s63 + $0x8] sm:$0xff]
  %v4768 = vld [vmem:[%s63 + $0x10] sm:$0xff]
  %v4769 = vld [vmem:[%s63 + $0x18] sm:$0xff]
  %v4770 = vld [vmem:[%s65] sm:$0x1]
  %v4772 = vlaneseq
  %v4773 = vshrl.u32 %v4772, 7
  %v4774 = vsub.s32 0, %v4773
  %v4775 = vrot.slane %v4770, %v4774
  %v4778 = vsel %vm516, %v4765, 0
  %4780 = vmatprep.subr.mxu0 0.0
  %4781 = vmatpush1.msra.mxu0 0.0
  %4782 = vmatprep.subr.mxu0 0.0
  %4783 = vmatpush1.msra.mxu0 0.0
  %4784 = vmatprep.subr.mxu0 0.0
  %4785 = vmatpush1.msra.mxu0 0.0
  %4786 = vmatprep.subr.mxu0 0.0
  %4787 = vmatpush1.msra.mxu0 0.0
  %4788 = vmatprep.subr.mxu0 0.0
  %4789 = vmatpush1.msra.mxu0 0.0
  %4790 = vmatprep.subr.mxu0 0.0
  %4791 = vmatpush1.msra.mxu0 0.0
  %4792 = vmatprep.subr.mxu0 0.0
  %4793 = vmatpush1.msra.mxu0 0.0
  %4794 = vmatprep.subr.mxu0 0.0
  %4795 = vmatpush1.msra.mxu0 0.0
  %4796 = vmatprep.subr.mxu0 0.0
  %4797 = vmatpush1.msra.mxu0 0.0
  %4798 = vmatprep.subr.mxu0 0.0
  %4799 = vmatpush1.msra.mxu0 0.0
  %4800 = vmatprep.subr.mxu0 0.0
  %4801 = vmatpush1.msra.mxu0 0.0
  %4802 = vmatprep.subr.mxu0 0.0
  %4803 = vmatpush1.msra.mxu0 0.0
  %4804 = vmatprep.subr.mxu0 0.0
  %4805 = vmatpush1.msra.mxu0 %v4769
  %4806 = vmatprep.subr.mxu0 0.0
  %4807 = vmatpush1.msra.mxu0 %v4768
  %4808 = vmatprep.subr.mxu0 0.0
  %4809 = vmatpush1.msra.mxu0 %v4767
  %4810 = vmatprep.subr.mxu0 0.0
  %4811 = vmatpush1.msra.mxu0 %v4766
  %4812 = vmatprep.subr.mxu0 0.0
  %4813 = vmatpush2.msra.mxu0 0.0
  %4814 = vmatprep.subr.mxu0 0.0
  %4815 = vmatpush2.msra.mxu0 0.0
  %4816 = vmatprep.subr.mxu0 0.0
  %4817 = vmatpush2.msra.mxu0 0.0
  %4818 = vmatprep.subr.mxu0 0.0
  %4819 = vmatpush2.msra.mxu0 0.0
  %4820 = vmatprep.subr.mxu0 0.0
  %4821 = vmatpush2.msra.mxu0 0.0
  %4822 = vmatprep.subr.mxu0 0.0
  %4823 = vmatpush2.msra.mxu0 0.0
  %4824 = vmatprep.subr.mxu0 0.0
  %4825 = vmatpush2.msra.mxu0 0.0
  %4826 = vmatprep.subr.mxu0 0.0
  %4827 = vmatpush2.msra.mxu0 0.0
  %4828 = vmatprep.subr.mxu0 0.0
  %4829 = vmatpush2.msra.mxu0 0.0
  %4830 = vmatprep.subr.mxu0 0.0
  %4831 = vmatpush2.msra.mxu0 0.0
  %4832 = vmatprep.subr.mxu0 0.0
  %4833 = vmatpush2.msra.mxu0 0.0
  %4834 = vmatprep.subr.mxu0 0.0
  %4835 = vmatpush2.msra.mxu0 0.0
  %4836 = vmatprep.subr.mxu0 0.0
  %4837 = vmatpush2.msra.mxu0 0.0
  %4838 = vmatprep.subr.mxu0 0.0
  %4839 = vmatpush2.msra.mxu0 0.0
  %4840 = vmatprep.subr.mxu0 0.0
  %4841 = vmatpush2.msra.mxu0 0.0
  %4842 = vmatprep.subr.mxu0 0.0
  %4843 = vmatpush2.msra.mxu0 0.0
  %4844 = vmatprep.mubr.f32.mxu0 0.0
  %4845 = vmatmul.mubr.f32.gmra.mxu0 %v4778
  %v4846 = vpop.f32.mrf.mxu0
  %v4847 = vadd.f32 %v4775, %v4846
  %v4848 = vpop.f32.mrf.mxu0
  %4849 = vdwg.mxu0
  %vm4850 = vcmask 15360
  %4851 = vst.msk [vmem:[%s67] sm:$0xff] %vm4850, %v4847
  // Predicated region
  $region134: #{net_forward.1} parent=0 // pred_check
    _
  $region135: #{net_forward.1} parent=0 // pred_check_branch
    %4853 = sbr.rel (0) target = $region137
  $region136: #{net_forward.1} parent=0 // pred_region
    _
  $region137: #{net_forward.1} parent=0 // pred_fallthru
    _
  // Predicated region
  $region138: #{net_forward.1} parent=0 // pred_check
    _
  $region139: #{net_forward.1} parent=0 // pred_check_branch
    %4855 = sbr.rel (0) target = $region141
  $region140: #{net_forward.1} parent=0 // pred_region
    _
  $region141: #{net_forward.1} parent=0 // pred_fallthru
    _

</llo_original>
